<compile_context>
chip_gen: v6e
topology: v6e:2x2x1
jax: 0.10.0
libtpu: 0.0.40
codegen_flags: <defaults>
</compile_context>

<pallas_src>
import jax
import jax.numpy as jnp
from jax.experimental import pallas as pl
from jax.experimental.pallas import tpu as pltpu


# Geometry fixed by the PyTorch module (28x28 input, 1 -> 8 -> 16 channels).
_H = 28     # input height / width
_C1 = 8     # conv1 out channels
_C2 = 16    # conv2 out channels
_H2 = 14    # spatial size after pool1
_H4 = 7     # spatial size after pool2


# ----------------------------------------------------------------------------
# Kernel
# ----------------------------------------------------------------------------
def fused_cnn_kernel(x_ref, w1_ref, b1_ref, w2_ref, b2_ref, wf_ref, bf_ref,
                     o_ref, xs_ref, p1s_ref):
    """Whole CNN forward for one batch tile, fully resident in VMEM.

    Lane-dense layouts:
      conv1 act : rows (b, h)  32/img, lanes (w%2)*128  + c*14  + w//2   (256)
      pooled1   : rows (b, h2) 16/img, lanes  c*14 + w2                  (128)
      conv2 act : rows (b, h2) 16/img, lanes (w2%2)*128 + co*7  + w2//2  (256)
      pooled2   : rows (b, h4)  8/img, lanes  co*7 + w4                  (128)
      fc input  : rows b,             lanes  h4*128 + co*7 + w4          (1024)
    Both 2x2 max-pools are "max of two vreg-aligned halves"; the 3x3 convs are
    banded matmuls along W (one accumulated dot per dy row offset).
    """
    f32 = jnp.float32
    Bt = x_ref.shape[0]

    # ---- H-padded input scratch: row s holds x row s-1; borders stay zero.
    #      Only the (cheap) border rows are zeroed per step.
    xs_ref[:, 0:1, :] = jnp.zeros((Bt, 1, _H), f32)
    xs_ref[:, 29:34, :] = jnp.zeros((Bt, 5, _H), f32)
    xs_ref[:, 1:29, :] = x_ref[...]

    # ---- conv1 + bias + ReLU: 3 accumulated banded matmuls (dy row offsets).
    def lhs1(dy):
        return xs_ref[:, dy:dy + 32, :].reshape(Bt * 32, _H)

    h1 = jnp.dot(lhs1(0), w1_ref[0], preferred_element_type=f32)
    h1 = h1 + jnp.dot(lhs1(1), w1_ref[1], preferred_element_type=f32)
    h1 = h1 + jnp.dot(lhs1(2), w1_ref[2], preferred_element_type=f32)
    h1 = jnp.maximum(h1 + b1_ref[...], 0.0)                # (Bt*32, 256)

    # ---- maxpool 2x2 #1: H via aligned row-pair merge, W via lane halves.
    hh = h1.reshape(Bt * 16, 512)                          # pair of rows -> 1 row
    hmax = jnp.maximum(hh[:, :256], hh[:, 256:])           # (Bt*16, 256)
    p1 = jnp.maximum(hmax[:, :128], hmax[:, 128:])         # (Bt*16, 128)
    p1 = p1.reshape(Bt, 16, 128)                           # rows 0..13 valid/img

    # ---- H-padded pooled-1 scratch for conv2's dy slices.
    p1s_ref[:, 0:1, :] = jnp.zeros((Bt, 1, 128), f32)
    p1s_ref[:, 15:18, :] = jnp.zeros((Bt, 3, 128), f32)
    p1s_ref[:, 1:15, :] = p1[:, 0:14, :]

    # ---- conv2 + bias + ReLU: 3 accumulated banded matmuls (K = 128 dense).
    def lhs2(dy):
        return p1s_ref[:, dy:dy + 16, :].reshape(Bt * 16, 128)

    z = jnp.dot(lhs2(0), w2_ref[0], preferred_element_type=f32)
    z = z + jnp.dot(lhs2(1), w2_ref[1], preferred_element_type=f32)
    z = z + jnp.dot(lhs2(2), w2_ref[2], preferred_element_type=f32)
    z = jnp.maximum(z + b2_ref[...], 0.0)                  # (Bt*16, 256)

    # ---- maxpool 2x2 #2 (same trick), flatten, fc.
    zz = z.reshape(Bt * 8, 512)
    zmax = jnp.maximum(zz[:, :256], zz[:, 256:])           # (Bt*8, 256)
    p2 = jnp.maximum(zmax[:, :128], zmax[:, 128:])         # (Bt*8, 128)
    fc_in = p2.reshape(Bt, 1024)                           # lanes h4*128+co*7+w4
    o_ref[...] = (jnp.dot(fc_in, wf_ref[...], preferred_element_type=f32)
                  + bf_ref[...])


# ----------------------------------------------------------------------------
# Trace-time weight repacking (tiny; removes all runtime relayout of weights)
# ----------------------------------------------------------------------------
def _conv1_band(w):
    """(8, 1, 3, 3) -> (3, 28, 256) banded weight.

    band[i, wp, (w%2)*128 + c*14 + w//2] = w[c, 0, i, wp - w + 1] (0 elsewhere).
    """
    wp = jnp.arange(_H)[:, None]
    wo = jnp.arange(_H)[None, :]
    j = wp - wo + 1
    valid = (j >= 0) & (j < 3)
    jc = jnp.clip(j, 0, 2)
    tap = w[:, 0, :, :]                                # (C1, 3, 3)   [c, i, j]
    g = tap[:, :, jc]                                  # (C1, 3, 28, 28) [c,i,wp,wo]
    g = jnp.where(valid[None, None], g, 0.0)
    g = jnp.transpose(g, (1, 2, 0, 3))                 # (i, wp, c, wo)
    g = g.reshape(3, _H, _C1, _H2, 2)                  # wo -> (w2, parity)
    g = jnp.transpose(g, (0, 1, 4, 2, 3))              # (i, wp, par, c, w2)
    g = g.reshape(3, _H, 2, _C1 * _H2)                 # (3, 28, 2, 112)
    g = jnp.pad(g, ((0, 0), (0, 0), (0, 0), (0, 128 - _C1 * _H2)))
    return g.reshape(3, _H, 256)


def _conv2_band(w):
    """(16, 8, 3, 3) -> (3, 128, 256) banded weight.

    rows = ci*14 + wp (pad 112->128), cols = (w2%2)*128 + co*7 + w2//2.
    """
    wp = jnp.arange(_H2)[:, None]
    wo = jnp.arange(_H2)[None, :]
    j = wp - wo + 1
    valid = (j >= 0) & (j < 3)
    jc = jnp.clip(j, 0, 2)
    g = w[:, :, :, jc]                                 # (C2, C1, 3, 14, 14)
    g = jnp.where(valid[None, None, None], g, 0.0)     # [co, ci, i, wp, wo]
    g = jnp.transpose(g, (2, 1, 3, 0, 4))              # (i, ci, wp, co, wo)
    g = g.reshape(3, _C1 * _H2, _C2, _H2)              # rows ci*14 + wp
    g = jnp.pad(g, ((0, 0), (0, 128 - _C1 * _H2), (0, 0), (0, 0)))
    g = g.reshape(3, 128, _C2, _H4, 2)                 # wo -> (w4, parity)
    g = jnp.transpose(g, (0, 1, 4, 2, 3))              # (i, row, par, co, w4)
    g = g.reshape(3, 128, 2, _C2 * _H4)                # (3, 128, 2, 112)
    g = jnp.pad(g, ((0, 0), (0, 0), (0, 0), (0, 128 - _C2 * _H4)))
    return g.reshape(3, 128, 256)


def _fc_weight(wf):
    """(O, 784) torch-flatten order (co, h4, w4) -> (1024, O) for the kernel's
    fc-input lanes h4*128 + co*7 + w4 (zero rows at all padding lanes)."""
    out = wf.shape[0]
    g = wf.reshape(out, _C2, _H4, _H4)                 # (o, co, h4, w4)
    g = jnp.transpose(g, (2, 1, 3, 0))                 # (h4, co, w4, o)
    g = g.reshape(_H4, _C2 * _H4, out)                 # (7, 112, O)
    g = jnp.pad(g, ((0, 1), (0, 128 - _C2 * _H4), (0, 0)))   # (8, 128, O)
    return g.reshape(8 * 128, out)


def _lane_bias(b, reps):
    """Per-channel bias -> (1, 256) vector matching lane layout c*reps + w."""
    v = jnp.repeat(b, reps)                            # (C*reps,) = (112,)
    v = jnp.pad(v, (0, 128 - v.shape[0]))
    return jnp.concatenate([v, v]).reshape(1, 256)


# ----------------------------------------------------------------------------
# pallas_call wrapper
# ----------------------------------------------------------------------------
def _full_spec(a):
    """Whole-array block, resident across the batch grid (no re-fetch)."""
    n = a.ndim
    return pl.BlockSpec(a.shape, lambda i, _n=n: (0,) * _n)


def _fused_cnn(x, w1b, b1v, w2b, b2v, wfc, bfc, *, block_b):
    B = x.shape[0]
    out_dim = wfc.shape[1]
    nb = B // block_b
    return pl.pallas_call(
        fused_cnn_kernel,
        grid=(nb,),
        in_specs=[
            pl.BlockSpec((block_b, _H, _H), lambda i: (i, 0, 0)),
            _full_spec(w1b), _full_spec(b1v),
            _full_spec(w2b), _full_spec(b2v),
            _full_spec(wfc), _full_spec(bfc),
        ],
        out_specs=pl.BlockSpec((block_b, out_dim), lambda i: (i, 0)),
        out_shape=jax.ShapeDtypeStruct((B, out_dim), jnp.float32),
        scratch_shapes=[
            pltpu.VMEM((block_b, 40, _H), jnp.float32),    # H-padded input
            pltpu.VMEM((block_b, 24, 128), jnp.float32),   # H-padded pooled1
        ],
        compiler_params=pltpu.CompilerParams(
            dimension_semantics=("parallel",),     # batch tiles are independent
            vmem_limit_bytes=40 * 1024 * 1024,     # headroom on v7x (64 MiB)
        ),
    )(x, w1b, b1v, w2b, b2v, wfc, bfc)


def init_params(key, in_channels=1, num_classes=10):
    k1, k2, k3, k4, k5, k6 = jax.random.split(key, 6)
    return {
        "conv1_w": 0.10 * jax.random.normal(k1, (8, in_channels, 3, 3), jnp.float32),
        "conv1_b": 0.10 * jax.random.normal(k2, (8,), jnp.float32),
        "conv2_w": 0.10 * jax.random.normal(k3, (16, 8, 3, 3), jnp.float32),
        "conv2_b": 0.10 * jax.random.normal(k4, (16,), jnp.float32),
        "fc1_w": 0.05 * jax.random.normal(k5, (num_classes, 16 * 7 * 7), jnp.float32),
        "fc1_b": 0.05 * jax.random.normal(k6, (num_classes,), jnp.float32),
    }


@jax.jit
def cnn_forward(params, x_nchw):
    B, cin, H, W = x_nchw.shape
    if cin != 1 or H != _H or W != _H:
        # TODO(synk): general in_channels / spatial sizes would need re-derived
        # band layouts; the spec module fixes in_channels=1 and 28x28 inputs.
        raise NotImplementedError("fused kernel assumes 1x28x28 inputs")
    out_dim = params["fc1_b"].shape[0]

    # Trace-time repacks of the (tiny, VMEM-resident) weights.
    w1b = _conv1_band(params["conv1_w"])
    b1v = _lane_bias(params["conv1_b"], _H2)
    w2b = _conv2_band(params["conv2_w"])
    b2v = _lane_bias(params["conv2_b"], _H4)
    wfc = _fc_weight(params["fc1_w"])
    bfc = params["fc1_b"].reshape(1, out_dim)

    x = x_nchw.reshape(B, _H, _H)                # Cin == 1: free reshape

    # Batch tiling: 64-image tiles for large batches (8-row aligned otherwise).
    block_b = 64 if B >= 64 else max(8, ((B + 7) // 8) * 8)
    bp = ((B + block_b - 1) // block_b) * block_b
    if bp != B:
        x = jnp.pad(x, ((0, bp - B), (0, 0), (0, 0)))

    out = _fused_cnn(x, w1b, b1v, w2b, b2v, wfc, bfc, block_b=block_b)
    return out[:B]


# ----------------------------------------------------------------------------
# Pure-JAX reference (mirrors the PyTorch forward) for correctness checks
# ----------------------------------------------------------------------------
def _reference_forward(params, x):
    def conv(x, w, b):
        y = jax.lax.conv_general_dilated(
            x, w, window_strides=(1, 1), padding=((1, 1), (1, 1)),
            dimension_numbers=("NCHW", "OIHW", "NCHW"))
        return jax.nn.relu(y + b[None, :, None, None])

    def pool(x):
        return jax.lax.reduce_window(x, -jnp.inf, jax.lax.max,
                                     (1, 1, 2, 2), (1, 1, 2, 2), "VALID")

    x = pool(conv(x, params["conv1_w"], params["conv1_b"]))
    x = pool(conv(x, params["conv2_w"], params["conv2_b"]))
    x = x.reshape(x.shape[0], -1)
    return x @ params["fc1_w"].T + params["fc1_b"]


if __name__ == "__main__":
    key = jax.random.PRNGKey(0)
    k_param, k_x1, k_x2, k_x3 = jax.random.split(key, 4)
    params = init_params(k_param, in_channels=1, num_classes=10)

    # Small batch (single-tile grid).
    x = jax.random.normal(k_x1, (2, 1, 28, 28), jnp.float32)
    out = jax.block_until_ready(cnn_forward(params, x))
    ref = jax.block_until_ready(_reference_forward(params, x))
    assert out.shape == (2, 10), out.shape
    err = float(jnp.max(jnp.abs(out - ref)))
    assert jnp.allclose(out, ref, atol=1e-3, rtol=1e-3), f"max abs err {err}"

    # Ragged batch (padded to an 8-aligned single tile).
    xb = jax.random.normal(k_x2, (19, 1, 28, 28), jnp.float32)
    outb = jax.block_until_ready(cnn_forward(params, xb))
    refb = jax.block_until_ready(_reference_forward(params, xb))
    errb = float(jnp.max(jnp.abs(outb - refb)))
    assert outb.shape == (19, 10), outb.shape
    assert jnp.allclose(outb, refb, atol=1e-3, rtol=1e-3), f"max abs err {errb}"

    # Multi-tile grid (2 x 64-image tiles; even tile count for v7x megacore).
    xc = jax.random.normal(k_x3, (128, 1, 28, 28), jnp.float32)
    outc = jax.block_until_ready(cnn_forward(params, xc))
    refc = jax.block_until_ready(_reference_forward(params, xc))
    errc = float(jnp.max(jnp.abs(outc - refc)))
    assert outc.shape == (128, 10), outc.shape
    assert jnp.allclose(outc, refc, atol=1e-3, rtol=1e-3), f"max abs err {errc}"

    print("KERNEL_OK")
</pallas_src>

<mosaic_0001>
module attributes {stable_mosaic.version = 11 : i64} {
  func.func @fused_cnn_kernel(%arg0: i32, %arg1: memref<8x28x28xf32, #tpu.memory_space<vmem>>, %arg2: memref<3x28x256xf32, #tpu.memory_space<vmem>>, %arg3: memref<1x256xf32, #tpu.memory_space<vmem>>, %arg4: memref<3x128x256xf32, #tpu.memory_space<vmem>>, %arg5: memref<1x256xf32, #tpu.memory_space<vmem>>, %arg6: memref<1024x10xf32, #tpu.memory_space<vmem>>, %arg7: memref<1x10xf32, #tpu.memory_space<vmem>>, %arg8: memref<8x10xf32, #tpu.memory_space<vmem>>, %arg9: memref<8x40x28xf32, #tpu.memory_space<vmem>>, %arg10: memref<8x24x128xf32, #tpu.memory_space<vmem>>) attributes {dimension_semantics = [#tpu.dimension_semantics<parallel>], iteration_bounds = array<i64: 1>, scalar_prefetch = 0 : i64, scratch_operands = 2 : i64, tpu.core_type = #tpu.core_type<tc>, window_params = [{transform_indices = @transform_0, window_bounds = array<i64: 8, 28, 28>}, {pipeline_mode = #tpu.pipeline_mode<synchronous>, transform_indices = @transform_1, window_bounds = array<i64: 3, 28, 256>}, {pipeline_mode = #tpu.pipeline_mode<synchronous>, transform_indices = @transform_2, window_bounds = array<i64: 1, 256>}, {pipeline_mode = #tpu.pipeline_mode<synchronous>, transform_indices = @transform_3, window_bounds = array<i64: 3, 128, 256>}, {pipeline_mode = #tpu.pipeline_mode<synchronous>, transform_indices = @transform_4, window_bounds = array<i64: 1, 256>}, {pipeline_mode = #tpu.pipeline_mode<synchronous>, transform_indices = @transform_5, window_bounds = array<i64: 1024, 10>}, {pipeline_mode = #tpu.pipeline_mode<synchronous>, transform_indices = @transform_6, window_bounds = array<i64: 1, 10>}, {transform_indices = @transform_7, window_bounds = array<i64: 8, 10>}]} {
    %cst = arith.constant 0.000000e+00 : f32
    %0 = vector.broadcast %cst : f32 to vector<8x1x28xf32>
    %c0 = arith.constant 0 : index
    %c0_0 = arith.constant 0 : index
    %c0_1 = arith.constant 0 : index
    %1 = vector.load %arg9[%c0, %c0_0, %c0_1] : memref<8x40x28xf32, #tpu.memory_space<vmem>>, vector<8x1x28xf32>
    tpu.vector_store %arg9[%c0, %c0_0, %c0_1], %0 {strides = array<i32>} : memref<8x40x28xf32, #tpu.memory_space<vmem>>, vector<8x1x28xf32>,
    %cst_2 = arith.constant 0.000000e+00 : f32
    %2 = vector.broadcast %cst_2 : f32 to vector<8x5x28xf32>
    %c0_3 = arith.constant 0 : index
    %c29 = arith.constant 29 : index
    %c0_4 = arith.constant 0 : index
    %3 = vector.load %arg9[%c0_3, %c29, %c0_4] : memref<8x40x28xf32, #tpu.memory_space<vmem>>, vector<8x5x28xf32>
    tpu.vector_store %arg9[%c0_3, %c29, %c0_4], %2 {strides = array<i32>} : memref<8x40x28xf32, #tpu.memory_space<vmem>>, vector<8x5x28xf32>,
    %c0_5 = arith.constant 0 : index
    %c0_6 = arith.constant 0 : index
    %c0_7 = arith.constant 0 : index
    %4 = vector.load %arg1[%c0_5, %c0_6, %c0_7] : memref<8x28x28xf32, #tpu.memory_space<vmem>>, vector<8x28x28xf32>
    %c0_8 = arith.constant 0 : index
    %c1 = arith.constant 1 : index
    %c0_9 = arith.constant 0 : index
    %5 = vector.load %arg9[%c0_8, %c1, %c0_9] : memref<8x40x28xf32, #tpu.memory_space<vmem>>, vector<8x28x28xf32>
    tpu.vector_store %arg9[%c0_8, %c1, %c0_9], %4 {strides = array<i32>} : memref<8x40x28xf32, #tpu.memory_space<vmem>>, vector<8x28x28xf32>,
    %c0_10 = arith.constant 0 : index
    %c0_11 = arith.constant 0 : index
    %c0_12 = arith.constant 0 : index
    %6 = vector.load %arg9[%c0_10, %c0_11, %c0_12] : memref<8x40x28xf32, #tpu.memory_space<vmem>>, vector<8x32x28xf32>
    %7 = vector.shape_cast %6 : vector<8x32x28xf32> to vector<256x28xf32>
    %c0_13 = arith.constant 0 : index
    %c0_14 = arith.constant 0 : index
    %c0_15 = arith.constant 0 : index
    %8 = vector.load %arg2[%c0_13, %c0_14, %c0_15] : memref<3x28x256xf32, #tpu.memory_space<vmem>>, vector<1x28x256xf32>
    %9 = vector.shape_cast %8 : vector<1x28x256xf32> to vector<28x256xf32>
    %cst_16 = arith.constant dense<0.000000e+00> : vector<256x256xf32>
    %10 = tpu.matmul %7, %9, %cst_16 {dimension_numbers = #tpu.dot_dimension_numbers<[1], [0], [0], [1], [0, 0, 1, 1], [], []>} : vector<256x28xf32>, vector<28x256xf32>, vector<256x256xf32> -> vector<256x256xf32>
    %c0_17 = arith.constant 0 : index
    %c1_18 = arith.constant 1 : index
    %c0_19 = arith.constant 0 : index
    %11 = vector.load %arg9[%c0_17, %c1_18, %c0_19] : memref<8x40x28xf32, #tpu.memory_space<vmem>>, vector<8x32x28xf32>
    %12 = vector.shape_cast %11 : vector<8x32x28xf32> to vector<256x28xf32>
    %c1_20 = arith.constant 1 : index
    %c0_21 = arith.constant 0 : index
    %c0_22 = arith.constant 0 : index
    %13 = vector.load %arg2[%c1_20, %c0_21, %c0_22] : memref<3x28x256xf32, #tpu.memory_space<vmem>>, vector<1x28x256xf32>
    %14 = vector.shape_cast %13 : vector<1x28x256xf32> to vector<28x256xf32>
    %cst_23 = arith.constant dense<0.000000e+00> : vector<256x256xf32>
    %15 = tpu.matmul %12, %14, %cst_23 {dimension_numbers = #tpu.dot_dimension_numbers<[1], [0], [0], [1], [0, 0, 1, 1], [], []>} : vector<256x28xf32>, vector<28x256xf32>, vector<256x256xf32> -> vector<256x256xf32>
    %16 = arith.addf %10, %15 : vector<256x256xf32>
    %c0_24 = arith.constant 0 : index
    %c2 = arith.constant 2 : index
    %c0_25 = arith.constant 0 : index
    %17 = vector.load %arg9[%c0_24, %c2, %c0_25] : memref<8x40x28xf32, #tpu.memory_space<vmem>>, vector<8x32x28xf32>
    %18 = vector.shape_cast %17 : vector<8x32x28xf32> to vector<256x28xf32>
    %c2_26 = arith.constant 2 : index
    %c0_27 = arith.constant 0 : index
    %c0_28 = arith.constant 0 : index
    %19 = vector.load %arg2[%c2_26, %c0_27, %c0_28] : memref<3x28x256xf32, #tpu.memory_space<vmem>>, vector<1x28x256xf32>
    %20 = vector.shape_cast %19 : vector<1x28x256xf32> to vector<28x256xf32>
    %cst_29 = arith.constant dense<0.000000e+00> : vector<256x256xf32>
    %21 = tpu.matmul %18, %20, %cst_29 {dimension_numbers = #tpu.dot_dimension_numbers<[1], [0], [0], [1], [0, 0, 1, 1], [], []>} : vector<256x28xf32>, vector<28x256xf32>, vector<256x256xf32> -> vector<256x256xf32>
    %22 = arith.addf %16, %21 : vector<256x256xf32>
    %c0_30 = arith.constant 0 : index
    %c0_31 = arith.constant 0 : index
    %23 = vector.load %arg3[%c0_30, %c0_31] : memref<1x256xf32, #tpu.memory_space<vmem>>, vector<1x256xf32>
    %24 = vector.broadcast %23 : vector<1x256xf32> to vector<256x256xf32>
    %25 = arith.addf %22, %24 : vector<256x256xf32>
    %cst_32 = arith.constant 0.000000e+00 : f32
    %26 = vector.broadcast %cst_32 : f32 to vector<256x256xf32>
    %27 = arith.maximumf %25, %26 : vector<256x256xf32>
    %28 = vector.shape_cast %27 : vector<256x256xf32> to vector<128x512xf32>
    %29 = vector.extract_strided_slice %28 {offsets = [0, 0], sizes = [128, 256], strides = [1, 1]} : vector<128x512xf32> to vector<128x256xf32>
    %30 = vector.extract_strided_slice %28 {offsets = [0, 256], sizes = [128, 256], strides = [1, 1]} : vector<128x512xf32> to vector<128x256xf32>
    %31 = arith.maximumf %29, %30 : vector<128x256xf32>
    %32 = vector.extract_strided_slice %31 {offsets = [0, 0], sizes = [128, 128], strides = [1, 1]} : vector<128x256xf32> to vector<128x128xf32>
    %33 = vector.extract_strided_slice %31 {offsets = [0, 128], sizes = [128, 128], strides = [1, 1]} : vector<128x256xf32> to vector<128x128xf32>
    %34 = arith.maximumf %32, %33 : vector<128x128xf32>
    %35 = vector.shape_cast %34 : vector<128x128xf32> to vector<8x16x128xf32>
    %cst_33 = arith.constant 0.000000e+00 : f32
    %36 = vector.broadcast %cst_33 : f32 to vector<8x1x128xf32>
    %c0_34 = arith.constant 0 : index
    %c0_35 = arith.constant 0 : index
    %c0_36 = arith.constant 0 : index
    %37 = vector.load %arg10[%c0_34, %c0_35, %c0_36] : memref<8x24x128xf32, #tpu.memory_space<vmem>>, vector<8x1x128xf32>
    tpu.vector_store %arg10[%c0_34, %c0_35, %c0_36], %36 {strides = array<i32>} : memref<8x24x128xf32, #tpu.memory_space<vmem>>, vector<8x1x128xf32>,
    %cst_37 = arith.constant 0.000000e+00 : f32
    %38 = vector.broadcast %cst_37 : f32 to vector<8x3x128xf32>
    %c0_38 = arith.constant 0 : index
    %c15 = arith.constant 15 : index
    %c0_39 = arith.constant 0 : index
    %39 = vector.load %arg10[%c0_38, %c15, %c0_39] : memref<8x24x128xf32, #tpu.memory_space<vmem>>, vector<8x3x128xf32>
    tpu.vector_store %arg10[%c0_38, %c15, %c0_39], %38 {strides = array<i32>} : memref<8x24x128xf32, #tpu.memory_space<vmem>>, vector<8x3x128xf32>,
    %40 = vector.extract_strided_slice %35 {offsets = [0, 0, 0], sizes = [8, 14, 128], strides = [1, 1, 1]} : vector<8x16x128xf32> to vector<8x14x128xf32>
    %c0_40 = arith.constant 0 : index
    %c1_41 = arith.constant 1 : index
    %c0_42 = arith.constant 0 : index
    %41 = vector.load %arg10[%c0_40, %c1_41, %c0_42] : memref<8x24x128xf32, #tpu.memory_space<vmem>>, vector<8x14x128xf32>
    tpu.vector_store %arg10[%c0_40, %c1_41, %c0_42], %40 {strides = array<i32>} : memref<8x24x128xf32, #tpu.memory_space<vmem>>, vector<8x14x128xf32>,
    %c0_43 = arith.constant 0 : index
    %c0_44 = arith.constant 0 : index
    %c0_45 = arith.constant 0 : index
    %42 = vector.load %arg10[%c0_43, %c0_44, %c0_45] : memref<8x24x128xf32, #tpu.memory_space<vmem>>, vector<8x16x128xf32>
    %43 = vector.shape_cast %42 : vector<8x16x128xf32> to vector<128x128xf32>
    %c0_46 = arith.constant 0 : index
    %c0_47 = arith.constant 0 : index
    %c0_48 = arith.constant 0 : index
    %44 = vector.load %arg4[%c0_46, %c0_47, %c0_48] : memref<3x128x256xf32, #tpu.memory_space<vmem>>, vector<1x128x256xf32>
    %45 = vector.shape_cast %44 : vector<1x128x256xf32> to vector<128x256xf32>
    %cst_49 = arith.constant dense<0.000000e+00> : vector<128x256xf32>
    %46 = tpu.matmul %43, %45, %cst_49 {dimension_numbers = #tpu.dot_dimension_numbers<[1], [0], [0], [1], [0, 0, 1, 1], [], []>} : vector<128x128xf32>, vector<128x256xf32>, vector<128x256xf32> -> vector<128x256xf32>
    %c0_50 = arith.constant 0 : index
    %c1_51 = arith.constant 1 : index
    %c0_52 = arith.constant 0 : index
    %47 = vector.load %arg10[%c0_50, %c1_51, %c0_52] : memref<8x24x128xf32, #tpu.memory_space<vmem>>, vector<8x16x128xf32>
    %48 = vector.shape_cast %47 : vector<8x16x128xf32> to vector<128x128xf32>
    %c1_53 = arith.constant 1 : index
    %c0_54 = arith.constant 0 : index
    %c0_55 = arith.constant 0 : index
    %49 = vector.load %arg4[%c1_53, %c0_54, %c0_55] : memref<3x128x256xf32, #tpu.memory_space<vmem>>, vector<1x128x256xf32>
    %50 = vector.shape_cast %49 : vector<1x128x256xf32> to vector<128x256xf32>
    %cst_56 = arith.constant dense<0.000000e+00> : vector<128x256xf32>
    %51 = tpu.matmul %48, %50, %cst_56 {dimension_numbers = #tpu.dot_dimension_numbers<[1], [0], [0], [1], [0, 0, 1, 1], [], []>} : vector<128x128xf32>, vector<128x256xf32>, vector<128x256xf32> -> vector<128x256xf32>
    %52 = arith.addf %46, %51 : vector<128x256xf32>
    %c0_57 = arith.constant 0 : index
    %c2_58 = arith.constant 2 : index
    %c0_59 = arith.constant 0 : index
    %53 = vector.load %arg10[%c0_57, %c2_58, %c0_59] : memref<8x24x128xf32, #tpu.memory_space<vmem>>, vector<8x16x128xf32>
    %54 = vector.shape_cast %53 : vector<8x16x128xf32> to vector<128x128xf32>
    %c2_60 = arith.constant 2 : index
    %c0_61 = arith.constant 0 : index
    %c0_62 = arith.constant 0 : index
    %55 = vector.load %arg4[%c2_60, %c0_61, %c0_62] : memref<3x128x256xf32, #tpu.memory_space<vmem>>, vector<1x128x256xf32>
    %56 = vector.shape_cast %55 : vector<1x128x256xf32> to vector<128x256xf32>
    %cst_63 = arith.constant dense<0.000000e+00> : vector<128x256xf32>
    %57 = tpu.matmul %54, %56, %cst_63 {dimension_numbers = #tpu.dot_dimension_numbers<[1], [0], [0], [1], [0, 0, 1, 1], [], []>} : vector<128x128xf32>, vector<128x256xf32>, vector<128x256xf32> -> vector<128x256xf32>
    %58 = arith.addf %52, %57 : vector<128x256xf32>
    %c0_64 = arith.constant 0 : index
    %c0_65 = arith.constant 0 : index
    %59 = vector.load %arg5[%c0_64, %c0_65] : memref<1x256xf32, #tpu.memory_space<vmem>>, vector<1x256xf32>
    %60 = vector.broadcast %59 : vector<1x256xf32> to vector<128x256xf32>
    %61 = arith.addf %58, %60 : vector<128x256xf32>
    %cst_66 = arith.constant 0.000000e+00 : f32
    %62 = vector.broadcast %cst_66 : f32 to vector<128x256xf32>
    %63 = arith.maximumf %61, %62 : vector<128x256xf32>
    %64 = vector.shape_cast %63 : vector<128x256xf32> to vector<64x512xf32>
    %65 = vector.extract_strided_slice %64 {offsets = [0, 0], sizes = [64, 256], strides = [1, 1]} : vector<64x512xf32> to vector<64x256xf32>
    %66 = vector.extract_strided_slice %64 {offsets = [0, 256], sizes = [64, 256], strides = [1, 1]} : vector<64x512xf32> to vector<64x256xf32>
    %67 = arith.maximumf %65, %66 : vector<64x256xf32>
    %68 = vector.extract_strided_slice %67 {offsets = [0, 0], sizes = [64, 128], strides = [1, 1]} : vector<64x256xf32> to vector<64x128xf32>
    %69 = vector.extract_strided_slice %67 {offsets = [0, 128], sizes = [64, 128], strides = [1, 1]} : vector<64x256xf32> to vector<64x128xf32>
    %70 = arith.maximumf %68, %69 : vector<64x128xf32>
    %71 = vector.shape_cast %70 : vector<64x128xf32> to vector<8x1024xf32>
    %c0_67 = arith.constant 0 : index
    %c0_68 = arith.constant 0 : index
    %72 = vector.load %arg6[%c0_67, %c0_68] : memref<1024x10xf32, #tpu.memory_space<vmem>>, vector<1024x10xf32>
    %cst_69 = arith.constant dense<0.000000e+00> : vector<8x10xf32>
    %73 = tpu.matmul %71, %72, %cst_69 {dimension_numbers = #tpu.dot_dimension_numbers<[1], [0], [0], [1], [0, 0, 1, 1], [], []>} : vector<8x1024xf32>, vector<1024x10xf32>, vector<8x10xf32> -> vector<8x10xf32>
    %c0_70 = arith.constant 0 : index
    %c0_71 = arith.constant 0 : index
    %74 = vector.load %arg7[%c0_70, %c0_71] : memref<1x10xf32, #tpu.memory_space<vmem>>, vector<1x10xf32>
    %75 = vector.broadcast %74 : vector<1x10xf32> to vector<8x10xf32>
    %76 = arith.addf %73, %75 : vector<8x10xf32>
    %c0_72 = arith.constant 0 : index
    %c0_73 = arith.constant 0 : index
    %77 = vector.load %arg8[%c0_72, %c0_73] : memref<8x10xf32, #tpu.memory_space<vmem>>, vector<8x10xf32>
    tpu.vector_store %arg8[%c0_72, %c0_73], %76 {strides = array<i32>} : memref<8x10xf32, #tpu.memory_space<vmem>>, vector<8x10xf32>,
    return
  }
  func.func @transform_0(%arg0: i32) -> (i32, i32, i32) {
    %c0_i32 = arith.constant 0 : i32
    %c0_i32_0 = arith.constant 0 : i32
    %c0_i32_1 = arith.constant 0 : i32
    return %arg0, %c0_i32, %c0_i32_0 : i32, i32, i32
  }
  func.func @transform_1(%arg0: i32) -> (i32, i32, i32) {
    %c0_i32 = arith.constant 0 : i32
    %c0_i32_0 = arith.constant 0 : i32
    %c0_i32_1 = arith.constant 0 : i32
    %c0_i32_2 = arith.constant 0 : i32
    return %c0_i32, %c0_i32_0, %c0_i32_1 : i32, i32, i32
  }
  func.func @transform_2(%arg0: i32) -> (i32, i32) {
    %c0_i32 = arith.constant 0 : i32
    %c0_i32_0 = arith.constant 0 : i32
    %c0_i32_1 = arith.constant 0 : i32
    return %c0_i32, %c0_i32_0 : i32, i32
  }
  func.func @transform_3(%arg0: i32) -> (i32, i32, i32) {
    %c0_i32 = arith.constant 0 : i32
    %c0_i32_0 = arith.constant 0 : i32
    %c0_i32_1 = arith.constant 0 : i32
    %c0_i32_2 = arith.constant 0 : i32
    return %c0_i32, %c0_i32_0, %c0_i32_1 : i32, i32, i32
  }
  func.func @transform_4(%arg0: i32) -> (i32, i32) {
    %c0_i32 = arith.constant 0 : i32
    %c0_i32_0 = arith.constant 0 : i32
    %c0_i32_1 = arith.constant 0 : i32
    return %c0_i32, %c0_i32_0 : i32, i32
  }
  func.func @transform_5(%arg0: i32) -> (i32, i32) {
    %c0_i32 = arith.constant 0 : i32
    %c0_i32_0 = arith.constant 0 : i32
    %c0_i32_1 = arith.constant 0 : i32
    return %c0_i32, %c0_i32_0 : i32, i32
  }
  func.func @transform_6(%arg0: i32) -> (i32, i32) {
    %c0_i32 = arith.constant 0 : i32
    %c0_i32_0 = arith.constant 0 : i32
    %c0_i32_1 = arith.constant 0 : i32
    return %c0_i32, %c0_i32_0 : i32, i32
  }
  func.func @transform_7(%arg0: i32) -> (i32, i32) {
    %c0_i32 = arith.constant 0 : i32
    %c0_i32_0 = arith.constant 0 : i32
    return %arg0, %c0_i32 : i32, i32
  }
}

</mosaic_0001>

<llo_original>
// kernel: cnn_forward.1
$region0: #{cnn_forward.1}
  #allocation0 [shape = 'u32[]', space=smem, size = 0x4, offset = 0x4, fixed_abs, tag = 'smem constant byte address 0x4 - core index']
  #allocation1 [shape = 'u32[144,128]{1,0:T(1,128)}', space=vmem, size = 0x12000, scoped, tag = 'internal scratch']
  #allocation2 [shape = 'f32[8,40,28]{2,1,0:T(8,128)}', space=vmem, size = 0x28000, scoped, tag = 'scratch operand']
  #allocation3 [shape = 'f32[8,24,128]{2,1,0:T(8,128)}', space=vmem, size = 0x18000, scoped, tag = 'scratch operand']
  %s0 = inlined_call_operand.vmem [shape: f32[8,28,28], index: 0, kind: input, shape index: {}]
  %s1 = inlined_call_operand.vmem [shape: f32[3,28,256], index: 1, kind: input, shape index: {}]
  %s2 = inlined_call_operand.vmem [shape: f32[1,256], index: 2, kind: input, shape index: {}]
  %s3 = inlined_call_operand.vmem [shape: f32[3,128,256], index: 3, kind: input, shape index: {}]
  %s4 = inlined_call_operand.vmem [shape: f32[1,256], index: 4, kind: input, shape index: {}]
  %s5 = inlined_call_operand.vmem [shape: f32[1024,10], index: 5, kind: input, shape index: {}]
  %s6 = inlined_call_operand.vmem [shape: f32[1,10], index: 6, kind: input, shape index: {}]
  %s7 = inlined_call_operand.vmem [shape: f32[8,10], index: 7, kind: output, shape index: {}]
  %s8 = sld [smem:[#allocation0]]
  $region38: #{cnn_forward.1} parent=0
    _
  %s10 = ssub.s32 1, %s8
  %s11 = scalar_select 0, %s10, %s8
  // Predicated region
  $region2: #{cnn_forward.1} parent=0 // pred_check
    _
  $region3: #{cnn_forward.1} parent=0 // pred_check_branch
    %13 = sbr.rel (0) target = $region5
  $region4: #{cnn_forward.1} parent=0 // pred_region
    _
  $region5: #{cnn_forward.1} parent=0 // pred_fallthru
    _
  // Predicated region
  $region6: #{cnn_forward.1} parent=0 // pred_check
    _
  $region7: #{cnn_forward.1} parent=0 // pred_check_branch
    %15 = sbr.rel (0) target = $region9
  $region8: #{cnn_forward.1} parent=0 // pred_region
    _
  $region9: #{cnn_forward.1} parent=0 // pred_fallthru
    _
  // Predicated region
  $region10: #{cnn_forward.1} parent=0 // pred_check
    _
  $region11: #{cnn_forward.1} parent=0 // pred_check_branch
    %17 = sbr.rel (0) target = $region13
  $region12: #{cnn_forward.1} parent=0 // pred_region
    _
  $region13: #{cnn_forward.1} parent=0 // pred_fallthru
    _
  // Predicated region
  $region14: #{cnn_forward.1} parent=0 // pred_check
    _
  $region15: #{cnn_forward.1} parent=0 // pred_check_branch
    %19 = sbr.rel (0) target = $region17
  $region16: #{cnn_forward.1} parent=0 // pred_region
    _
  $region17: #{cnn_forward.1} parent=0 // pred_fallthru
    _
  // Predicated region
  $region18: #{cnn_forward.1} parent=0 // pred_check
    _
  $region19: #{cnn_forward.1} parent=0 // pred_check_branch
    %21 = sbr.rel (0) target = $region21
  $region20: #{cnn_forward.1} parent=0 // pred_region
    _
  $region21: #{cnn_forward.1} parent=0 // pred_fallthru
    _
  // Predicated region
  $region22: #{cnn_forward.1} parent=0 // pred_check
    _
  $region23: #{cnn_forward.1} parent=0 // pred_check_branch
    %23 = sbr.rel (0) target = $region25
  $region24: #{cnn_forward.1} parent=0 // pred_region
    _
  $region25: #{cnn_forward.1} parent=0 // pred_fallthru
    _
  // Predicated region
  $region26: #{cnn_forward.1} parent=0 // pred_check
    _
  $region27: #{cnn_forward.1} parent=0 // pred_check_branch
    %25 = sbr.rel (0) target = $region29
  $region28: #{cnn_forward.1} parent=0 // pred_region
    _
  $region29: #{cnn_forward.1} parent=0 // pred_fallthru
    _
  %vm26 = vcmask 221184
  %27 = vst.msk [vmem:[#allocation2] sm:$0x1] %vm26, 0.0
  %28 = vst.msk [vmem:[#allocation2 + $0x28] sm:$0x1] %vm26, 0.0
  %29 = vst.msk [vmem:[#allocation2 + $0x50] sm:$0x1] %vm26, 0.0
  %30 = vst.msk [vmem:[#allocation2 + $0x78] sm:$0x1] %vm26, 0.0
  %31 = vst.msk [vmem:[#allocation2 + $0xa0] sm:$0x1] %vm26, 0.0
  %32 = vst.msk [vmem:[#allocation2 + $0xc8] sm:$0x1] %vm26, 0.0
  %33 = vst.msk [vmem:[#allocation2 + $0xf0] sm:$0x1] %vm26, 0.0
  %34 = vst.msk [vmem:[#allocation2 + $0x118] sm:$0x1] %vm26, 0.0
  %vm35 = vcmask 225280
  %36 = vst.msk [vmem:[#allocation2 + $0x1d] sm:$0x1f] %vm35, 0.0
  %37 = vst.msk [vmem:[#allocation2 + $0x45] sm:$0x1f] %vm35, 0.0
  %38 = vst.msk [vmem:[#allocation2 + $0x6d] sm:$0x1f] %vm35, 0.0
  %39 = vst.msk [vmem:[#allocation2 + $0x95] sm:$0x1f] %vm35, 0.0
  %40 = vst.msk [vmem:[#allocation2 + $0xbd] sm:$0x1f] %vm35, 0.0
  %41 = vst.msk [vmem:[#allocation2 + $0xe5] sm:$0x1f] %vm35, 0.0
  %42 = vst.msk [vmem:[#allocation2 + $0x10d] sm:$0x1f] %vm35, 0.0
  %43 = vst.msk [vmem:[#allocation2 + $0x135] sm:$0x1f] %vm35, 0.0
  %v44 = vld [vmem:[%s0] sm:$0xff]
  %v45 = vld [vmem:[%s0 + $0x8] sm:$0xff]
  %v46 = vld [vmem:[%s0 + $0x10] sm:$0xff]
  %v47 = vld [vmem:[%s0 + $0x18] sm:$0xf]
  %v48 = vld [vmem:[%s0 + $0x20] sm:$0xff]
  %v49 = vld [vmem:[%s0 + $0x28] sm:$0xff]
  %v50 = vld [vmem:[%s0 + $0x30] sm:$0xff]
  %v51 = vld [vmem:[%s0 + $0x38] sm:$0xf]
  %v52 = vld [vmem:[%s0 + $0x40] sm:$0xff]
  %v53 = vld [vmem:[%s0 + $0x48] sm:$0xff]
  %v54 = vld [vmem:[%s0 + $0x50] sm:$0xff]
  %v55 = vld [vmem:[%s0 + $0x58] sm:$0xf]
  %v56 = vld [vmem:[%s0 + $0x60] sm:$0xff]
  %v57 = vld [vmem:[%s0 + $0x68] sm:$0xff]
  %v58 = vld [vmem:[%s0 + $0x70] sm:$0xff]
  %v59 = vld [vmem:[%s0 + $0x78] sm:$0xf]
  %v60 = vld [vmem:[%s0 + $0x80] sm:$0xff]
  %v61 = vld [vmem:[%s0 + $0x88] sm:$0xff]
  %v62 = vld [vmem:[%s0 + $0x90] sm:$0xff]
  %v63 = vld [vmem:[%s0 + $0x98] sm:$0xf]
  %v64 = vld [vmem:[%s0 + $0xa0] sm:$0xff]
  %v65 = vld [vmem:[%s0 + $0xa8] sm:$0xff]
  %v66 = vld [vmem:[%s0 + $0xb0] sm:$0xff]
  %v67 = vld [vmem:[%s0 + $0xb8] sm:$0xf]
  %v68 = vld [vmem:[%s0 + $0xc0] sm:$0xff]
  %v69 = vld [vmem:[%s0 + $0xc8] sm:$0xff]
  %v70 = vld [vmem:[%s0 + $0xd0] sm:$0xff]
  %v71 = vld [vmem:[%s0 + $0xd8] sm:$0xf]
  %v72 = vld [vmem:[%s0 + $0xe0] sm:$0xff]
  %v73 = vld [vmem:[%s0 + $0xe8] sm:$0xff]
  %v74 = vld [vmem:[%s0 + $0xf0] sm:$0xff]
  %v75 = vld [vmem:[%s0 + $0xf8] sm:$0xf]
  %vm76 = vcmask 228352
  %77 = vst.msk [vmem:[#allocation2 + $0x1] sm:$0xff] %vm76, %v44
  %78 = vst.msk [vmem:[#allocation2 + $0x9] sm:$0xff] %vm76, %v45
  %79 = vst.msk [vmem:[#allocation2 + $0x11] sm:$0xff] %vm76, %v46
  %vm80 = vcmask 224256
  %81 = vst.msk [vmem:[#allocation2 + $0x19] sm:$0xf] %vm80, %v47
  %82 = vst.msk [vmem:[#allocation2 + $0x29] sm:$0xff] %vm76, %v48
  %83 = vst.msk [vmem:[#allocation2 + $0x31] sm:$0xff] %vm76, %v49
  %84 = vst.msk [vmem:[#allocation2 + $0x39] sm:$0xff] %vm76, %v50
  %85 = vst.msk [vmem:[#allocation2 + $0x41] sm:$0xf] %vm80, %v51
  %86 = vst.msk [vmem:[#allocation2 + $0x51] sm:$0xff] %vm76, %v52
  %87 = vst.msk [vmem:[#allocation2 + $0x59] sm:$0xff] %vm76, %v53
  %88 = vst.msk [vmem:[#allocation2 + $0x61] sm:$0xff] %vm76, %v54
  %89 = vst.msk [vmem:[#allocation2 + $0x69] sm:$0xf] %vm80, %v55
  %90 = vst.msk [vmem:[#allocation2 + $0x79] sm:$0xff] %vm76, %v56
  %91 = vst.msk [vmem:[#allocation2 + $0x81] sm:$0xff] %vm76, %v57
  %92 = vst.msk [vmem:[#allocation2 + $0x89] sm:$0xff] %vm76, %v58
  %93 = vst.msk [vmem:[#allocation2 + $0x91] sm:$0xf] %vm80, %v59
  %94 = vst.msk [vmem:[#allocation2 + $0xa1] sm:$0xff] %vm76, %v60
  %95 = vst.msk [vmem:[#allocation2 + $0xa9] sm:$0xff] %vm76, %v61
  %96 = vst.msk [vmem:[#allocation2 + $0xb1] sm:$0xff] %vm76, %v62
  %97 = vst.msk [vmem:[#allocation2 + $0xb9] sm:$0xf] %vm80, %v63
  %98 = vst.msk [vmem:[#allocation2 + $0xc9] sm:$0xff] %vm76, %v64
  %99 = vst.msk [vmem:[#allocation2 + $0xd1] sm:$0xff] %vm76, %v65
  %100 = vst.msk [vmem:[#allocation2 + $0xd9] sm:$0xff] %vm76, %v66
  %101 = vst.msk [vmem:[#allocation2 + $0xe1] sm:$0xf] %vm80, %v67
  %102 = vst.msk [vmem:[#allocation2 + $0xf1] sm:$0xff] %vm76, %v68
  %103 = vst.msk [vmem:[#allocation2 + $0xf9] sm:$0xff] %vm76, %v69
  %104 = vst.msk [vmem:[#allocation2 + $0x101] sm:$0xff] %vm76, %v70
  %105 = vst.msk [vmem:[#allocation2 + $0x109] sm:$0xf] %vm80, %v71
  %106 = vst.msk [vmem:[#allocation2 + $0x119] sm:$0xff] %vm76, %v72
  %107 = vst.msk [vmem:[#allocation2 + $0x121] sm:$0xff] %vm76, %v73
  %108 = vst.msk [vmem:[#allocation2 + $0x129] sm:$0xff] %vm76, %v74
  %109 = vst.msk [vmem:[#allocation2 + $0x131] sm:$0xf] %vm80, %v75
  %v110 = vld [vmem:[#allocation2] sm:$0xff]
  %v111 = vld [vmem:[#allocation2 + $0x8] sm:$0xff]
  %v112 = vld [vmem:[#allocation2 + $0x10] sm:$0xff]
  %v113 = vld [vmem:[#allocation2 + $0x18] sm:$0xff]
  %v114 = vld [vmem:[#allocation2 + $0x28] sm:$0xff]
  %v115 = vld [vmem:[#allocation2 + $0x30] sm:$0xff]
  %v116 = vld [vmem:[#allocation2 + $0x38] sm:$0xff]
  %v117 = vld [vmem:[#allocation2 + $0x40] sm:$0xff]
  %v118 = vld [vmem:[#allocation2 + $0x50] sm:$0xff]
  %v119 = vld [vmem:[#allocation2 + $0x58] sm:$0xff]
  %v120 = vld [vmem:[#allocation2 + $0x60] sm:$0xff]
  %v121 = vld [vmem:[#allocation2 + $0x68] sm:$0xff]
  %v122 = vld [vmem:[#allocation2 + $0x78] sm:$0xff]
  %v123 = vld [vmem:[#allocation2 + $0x80] sm:$0xff]
  %v124 = vld [vmem:[#allocation2 + $0x88] sm:$0xff]
  %v125 = vld [vmem:[#allocation2 + $0x90] sm:$0xff]
  %v126 = vld [vmem:[#allocation2 + $0xa0] sm:$0xff]
  %v127 = vld [vmem:[#allocation2 + $0xa8] sm:$0xff]
  %v128 = vld [vmem:[#allocation2 + $0xb0] sm:$0xff]
  %v129 = vld [vmem:[#allocation2 + $0xb8] sm:$0xff]
  %v130 = vld [vmem:[#allocation2 + $0xc8] sm:$0xff]
  %v131 = vld [vmem:[#allocation2 + $0xd0] sm:$0xff]
  %v132 = vld [vmem:[#allocation2 + $0xd8] sm:$0xff]
  %v133 = vld [vmem:[#allocation2 + $0xe0] sm:$0xff]
  %v134 = vld [vmem:[#allocation2 + $0xf0] sm:$0xff]
  %v135 = vld [vmem:[#allocation2 + $0xf8] sm:$0xff]
  %v136 = vld [vmem:[#allocation2 + $0x100] sm:$0xff]
  %v137 = vld [vmem:[#allocation2 + $0x108] sm:$0xff]
  %v138 = vld [vmem:[#allocation2 + $0x118] sm:$0xff]
  %v139 = vld [vmem:[#allocation2 + $0x120] sm:$0xff]
  %v140 = vld [vmem:[#allocation2 + $0x128] sm:$0xff]
  %v141 = vld [vmem:[#allocation2 + $0x130] sm:$0xff]
  %v142 = vld [vmem:[%s1] sm:$0xff]
  %v143 = vld [vmem:[%s1 + $0x8] sm:$0xff]
  %v144 = vld [vmem:[%s1 + $0x10] sm:$0xff]
  %v145 = vld [vmem:[%s1 + $0x18] sm:$0xff]
  %v146 = vld [vmem:[%s1 + $0x20] sm:$0xff]
  %v147 = vld [vmem:[%s1 + $0x28] sm:$0xff]
  %v148 = vld [vmem:[%s1 + $0x30] sm:$0xf]
  %v149 = vld [vmem:[%s1 + $0x38] sm:$0xf]
  %v150 = vld [vmem:[#allocation2 + $0x1] sm:$0xff]
  %v151 = vld [vmem:[#allocation2 + $0x9] sm:$0xff]
  %v152 = vld [vmem:[#allocation2 + $0x11] sm:$0xff]
  %v153 = vld [vmem:[#allocation2 + $0x19] sm:$0xff]
  %v154 = vld [vmem:[#allocation2 + $0x29] sm:$0xff]
  %v155 = vld [vmem:[#allocation2 + $0x31] sm:$0xff]
  %v156 = vld [vmem:[#allocation2 + $0x39] sm:$0xff]
  %v157 = vld [vmem:[#allocation2 + $0x41] sm:$0xff]
  %v158 = vld [vmem:[#allocation2 + $0x51] sm:$0xff]
  %v159 = vld [vmem:[#allocation2 + $0x59] sm:$0xff]
  %v160 = vld [vmem:[#allocation2 + $0x61] sm:$0xff]
  %v161 = vld [vmem:[#allocation2 + $0x69] sm:$0xff]
  %v162 = vld [vmem:[#allocation2 + $0x79] sm:$0xff]
  %v163 = vld [vmem:[#allocation2 + $0x81] sm:$0xff]
  %v164 = vld [vmem:[#allocation2 + $0x89] sm:$0xff]
  %v165 = vld [vmem:[#allocation2 + $0x91] sm:$0xff]
  %v166 = vld [vmem:[#allocation2 + $0xa1] sm:$0xff]
  %v167 = vld [vmem:[#allocation2 + $0xa9] sm:$0xff]
  %v168 = vld [vmem:[#allocation2 + $0xb1] sm:$0xff]
  %v169 = vld [vmem:[#allocation2 + $0xb9] sm:$0xff]
  %v170 = vld [vmem:[#allocation2 + $0xc9] sm:$0xff]
  %v171 = vld [vmem:[#allocation2 + $0xd1] sm:$0xff]
  %v172 = vld [vmem:[#allocation2 + $0xd9] sm:$0xff]
  %v173 = vld [vmem:[#allocation2 + $0xe1] sm:$0xff]
  %v174 = vld [vmem:[#allocation2 + $0xf1] sm:$0xff]
  %v175 = vld [vmem:[#allocation2 + $0xf9] sm:$0xff]
  %v176 = vld [vmem:[#allocation2 + $0x101] sm:$0xff]
  %v177 = vld [vmem:[#allocation2 + $0x109] sm:$0xff]
  %v178 = vld [vmem:[#allocation2 + $0x119] sm:$0xff]
  %v179 = vld [vmem:[#allocation2 + $0x121] sm:$0xff]
  %v180 = vld [vmem:[#allocation2 + $0x129] sm:$0xff]
  %v181 = vld [vmem:[#allocation2 + $0x131] sm:$0xff]
  %s182 = scalar_lea.vmem %s1, 64
  %v183 = vld [vmem:[%s182] sm:$0xff]
  %v184 = vld [vmem:[%s182 + $0x8] sm:$0xff]
  %v185 = vld [vmem:[%s182 + $0x10] sm:$0xff]
  %v186 = vld [vmem:[%s182 + $0x18] sm:$0xff]
  %v187 = vld [vmem:[%s182 + $0x20] sm:$0xff]
  %v188 = vld [vmem:[%s182 + $0x28] sm:$0xff]
  %v189 = vld [vmem:[%s182 + $0x30] sm:$0xf]
  %v190 = vld [vmem:[%s182 + $0x38] sm:$0xf]
  %v192 = vsel %vm76, %v150, 0
  %v195 = vsel %vm76, %v151, 0
  %v198 = vsel %vm76, %v152, 0
  %v201 = vsel %vm76, %v153, 0
  %v204 = vsel %vm76, %v154, 0
  %v207 = vsel %vm76, %v155, 0
  %v210 = vsel %vm76, %v156, 0
  %v213 = vsel %vm76, %v157, 0
  %v216 = vsel %vm76, %v158, 0
  %v219 = vsel %vm76, %v159, 0
  %v222 = vsel %vm76, %v160, 0
  %v225 = vsel %vm76, %v161, 0
  %v228 = vsel %vm76, %v162, 0
  %v231 = vsel %vm76, %v163, 0
  %v234 = vsel %vm76, %v164, 0
  %v237 = vsel %vm76, %v165, 0
  %v240 = vsel %vm76, %v166, 0
  %v243 = vsel %vm76, %v167, 0
  %v246 = vsel %vm76, %v168, 0
  %v249 = vsel %vm76, %v169, 0
  %v252 = vsel %vm76, %v170, 0
  %v255 = vsel %vm76, %v171, 0
  %v258 = vsel %vm76, %v172, 0
  %v261 = vsel %vm76, %v173, 0
  %v264 = vsel %vm76, %v174, 0
  %v267 = vsel %vm76, %v175, 0
  %v270 = vsel %vm76, %v176, 0
  %v273 = vsel %vm76, %v177, 0
  %v276 = vsel %vm76, %v178, 0
  %v279 = vsel %vm76, %v179, 0
  %v282 = vsel %vm76, %v180, 0
  %v285 = vsel %vm76, %v181, 0
  %vm287 = vcmask 1043456
  %v289 = vsel %vm287, %v189, 0
  %v292 = vsel %vm287, %v190, 0
  %294 = vmatprep.subr.mxu0 0.0
  %295 = vmatpush1.msra.mxu0 0.0
  %296 = vmatprep.subr.mxu0 0.0
  %297 = vmatpush1.msra.mxu0 0.0
  %298 = vmatprep.subr.mxu0 0.0
  %299 = vmatpush1.msra.mxu0 0.0
  %300 = vmatprep.subr.mxu0 0.0
  %301 = vmatpush1.msra.mxu0 0.0
  %302 = vmatprep.subr.mxu0 0.0
  %303 = vmatpush1.msra.mxu0 0.0
  %304 = vmatprep.subr.mxu0 0.0
  %305 = vmatpush1.msra.mxu0 0.0
  %306 = vmatprep.subr.mxu0 0.0
  %307 = vmatpush1.msra.mxu0 0.0
  %308 = vmatprep.subr.mxu0 0.0
  %309 = vmatpush1.msra.mxu0 0.0
  %310 = vmatprep.subr.mxu0 0.0
  %311 = vmatpush1.msra.mxu0 0.0
  %312 = vmatprep.subr.mxu0 0.0
  %313 = vmatpush1.msra.mxu0 0.0
  %314 = vmatprep.subr.mxu0 0.0
  %315 = vmatpush1.msra.mxu0 0.0
  %316 = vmatprep.subr.mxu0 0.0
  %317 = vmatpush1.msra.mxu0 0.0
  %318 = vmatprep.subr.mxu0 %v292
  %319 = vmatpush1.msra.mxu0 %v289
  %320 = vmatprep.subr.mxu0 %v188
  %321 = vmatpush1.msra.mxu0 %v187
  %322 = vmatprep.subr.mxu0 %v186
  %323 = vmatpush1.msra.mxu0 %v185
  %324 = vmatprep.subr.mxu0 %v184
  %325 = vmatpush1.msra.mxu0 %v183
  %326 = vmatprep.subr.mxu0 0.0
  %327 = vmatpush2.msra.mxu0 0.0
  %328 = vmatprep.subr.mxu0 0.0
  %329 = vmatpush2.msra.mxu0 0.0
  %330 = vmatprep.subr.mxu0 0.0
  %331 = vmatpush2.msra.mxu0 0.0
  %332 = vmatprep.subr.mxu0 0.0
  %333 = vmatpush2.msra.mxu0 0.0
  %334 = vmatprep.subr.mxu0 0.0
  %335 = vmatpush2.msra.mxu0 0.0
  %336 = vmatprep.subr.mxu0 0.0
  %337 = vmatpush2.msra.mxu0 0.0
  %338 = vmatprep.subr.mxu0 0.0
  %339 = vmatpush2.msra.mxu0 0.0
  %340 = vmatprep.subr.mxu0 0.0
  %341 = vmatpush2.msra.mxu0 0.0
  %342 = vmatprep.subr.mxu0 0.0
  %343 = vmatpush2.msra.mxu0 0.0
  %344 = vmatprep.subr.mxu0 0.0
  %345 = vmatpush2.msra.mxu0 0.0
  %346 = vmatprep.subr.mxu0 0.0
  %347 = vmatpush2.msra.mxu0 0.0
  %348 = vmatprep.subr.mxu0 0.0
  %349 = vmatpush2.msra.mxu0 0.0
  %350 = vmatprep.subr.mxu0 0.0
  %351 = vmatpush2.msra.mxu0 0.0
  %352 = vmatprep.subr.mxu0 0.0
  %353 = vmatpush2.msra.mxu0 0.0
  %354 = vmatprep.subr.mxu0 0.0
  %355 = vmatpush2.msra.mxu0 0.0
  %356 = vmatprep.subr.mxu0 0.0
  %357 = vmatpush2.msra.mxu0 0.0
  %358 = vmatprep.mubr.f32.mxu0 0.0
  %359 = vmatmul.mubr.f32.gmra.mxu0 %v192
  %v360 = vpop.f32.mrf.mxu0
  %v361 = vadd.f32 0.0, %v360
  %v362 = vpop.f32.mrf.mxu0
  %v363 = vadd.f32 0.0, %v362
  %364 = vmatprep.mubr.f32.mxu0 0.0
  %365 = vmatmul.mubr.f32.gmra.mxu0 %v195
  %v366 = vpop.f32.mrf.mxu0
  %v367 = vadd.f32 0.0, %v366
  %v368 = vpop.f32.mrf.mxu0
  %v369 = vadd.f32 0.0, %v368
  %370 = vmatprep.mubr.f32.mxu0 0.0
  %371 = vmatmul.mubr.f32.gmra.mxu0 %v198
  %v372 = vpop.f32.mrf.mxu0
  %v373 = vadd.f32 0.0, %v372
  %v374 = vpop.f32.mrf.mxu0
  %v375 = vadd.f32 0.0, %v374
  %376 = vmatprep.mubr.f32.mxu0 0.0
  %377 = vmatmul.mubr.f32.gmra.mxu0 %v201
  %v378 = vpop.f32.mrf.mxu0
  %v379 = vadd.f32 0.0, %v378
  %v380 = vpop.f32.mrf.mxu0
  %v381 = vadd.f32 0.0, %v380
  %382 = vmatprep.mubr.f32.mxu0 0.0
  %383 = vmatmul.mubr.f32.gmra.mxu0 %v204
  %v384 = vpop.f32.mrf.mxu0
  %v385 = vadd.f32 0.0, %v384
  %v386 = vpop.f32.mrf.mxu0
  %v387 = vadd.f32 0.0, %v386
  %388 = vmatprep.mubr.f32.mxu0 0.0
  %389 = vmatmul.mubr.f32.gmra.mxu0 %v207
  %v390 = vpop.f32.mrf.mxu0
  %v391 = vadd.f32 0.0, %v390
  %v392 = vpop.f32.mrf.mxu0
  %v393 = vadd.f32 0.0, %v392
  %394 = vmatprep.mubr.f32.mxu0 0.0
  %395 = vmatmul.mubr.f32.gmra.mxu0 %v210
  %v396 = vpop.f32.mrf.mxu0
  %v397 = vadd.f32 0.0, %v396
  %v398 = vpop.f32.mrf.mxu0
  %v399 = vadd.f32 0.0, %v398
  %400 = vmatprep.mubr.f32.mxu0 0.0
  %401 = vmatmul.mubr.f32.gmra.mxu0 %v213
  %v402 = vpop.f32.mrf.mxu0
  %v403 = vadd.f32 0.0, %v402
  %v404 = vpop.f32.mrf.mxu0
  %v405 = vadd.f32 0.0, %v404
  %406 = vmatprep.mubr.f32.mxu0 0.0
  %407 = vmatmul.mubr.f32.gmra.mxu0 %v216
  %v408 = vpop.f32.mrf.mxu0
  %v409 = vadd.f32 0.0, %v408
  %v410 = vpop.f32.mrf.mxu0
  %v411 = vadd.f32 0.0, %v410
  %412 = vmatprep.mubr.f32.mxu0 0.0
  %413 = vmatmul.mubr.f32.gmra.mxu0 %v219
  %v414 = vpop.f32.mrf.mxu0
  %v415 = vadd.f32 0.0, %v414
  %v416 = vpop.f32.mrf.mxu0
  %v417 = vadd.f32 0.0, %v416
  %418 = vmatprep.mubr.f32.mxu0 0.0
  %419 = vmatmul.mubr.f32.gmra.mxu0 %v222
  %v420 = vpop.f32.mrf.mxu0
  %v421 = vadd.f32 0.0, %v420
  %v422 = vpop.f32.mrf.mxu0
  %v423 = vadd.f32 0.0, %v422
  %424 = vmatprep.mubr.f32.mxu0 0.0
  %425 = vmatmul.mubr.f32.gmra.mxu0 %v225
  %v426 = vpop.f32.mrf.mxu0
  %v427 = vadd.f32 0.0, %v426
  %v428 = vpop.f32.mrf.mxu0
  %v429 = vadd.f32 0.0, %v428
  %430 = vmatprep.mubr.f32.mxu0 0.0
  %431 = vmatmul.mubr.f32.gmra.mxu0 %v228
  %v432 = vpop.f32.mrf.mxu0
  %v433 = vadd.f32 0.0, %v432
  %v434 = vpop.f32.mrf.mxu0
  %v435 = vadd.f32 0.0, %v434
  %436 = vmatprep.mubr.f32.mxu0 0.0
  %437 = vmatmul.mubr.f32.gmra.mxu0 %v231
  %v438 = vpop.f32.mrf.mxu0
  %v439 = vadd.f32 0.0, %v438
  %v440 = vpop.f32.mrf.mxu0
  %v441 = vadd.f32 0.0, %v440
  %442 = vmatprep.mubr.f32.mxu0 0.0
  %443 = vmatmul.mubr.f32.gmra.mxu0 %v234
  %v444 = vpop.f32.mrf.mxu0
  %v445 = vadd.f32 0.0, %v444
  %v446 = vpop.f32.mrf.mxu0
  %v447 = vadd.f32 0.0, %v446
  %448 = vmatprep.mubr.f32.mxu0 0.0
  %449 = vmatmul.mubr.f32.gmra.mxu0 %v237
  %v450 = vpop.f32.mrf.mxu0
  %v451 = vadd.f32 0.0, %v450
  %v452 = vpop.f32.mrf.mxu0
  %v453 = vadd.f32 0.0, %v452
  %454 = vmatprep.mubr.f32.mxu0 0.0
  %455 = vmatmul.mubr.f32.gmra.mxu0 %v240
  %v456 = vpop.f32.mrf.mxu0
  %v457 = vadd.f32 0.0, %v456
  %v458 = vpop.f32.mrf.mxu0
  %v459 = vadd.f32 0.0, %v458
  %460 = vmatprep.mubr.f32.mxu0 0.0
  %461 = vmatmul.mubr.f32.gmra.mxu0 %v243
  %v462 = vpop.f32.mrf.mxu0
  %v463 = vadd.f32 0.0, %v462
  %v464 = vpop.f32.mrf.mxu0
  %v465 = vadd.f32 0.0, %v464
  %466 = vmatprep.mubr.f32.mxu0 0.0
  %467 = vmatmul.mubr.f32.gmra.mxu0 %v246
  %v468 = vpop.f32.mrf.mxu0
  %v469 = vadd.f32 0.0, %v468
  %v470 = vpop.f32.mrf.mxu0
  %v471 = vadd.f32 0.0, %v470
  %472 = vmatprep.mubr.f32.mxu0 0.0
  %473 = vmatmul.mubr.f32.gmra.mxu0 %v249
  %v474 = vpop.f32.mrf.mxu0
  %v475 = vadd.f32 0.0, %v474
  %v476 = vpop.f32.mrf.mxu0
  %v477 = vadd.f32 0.0, %v476
  %478 = vmatprep.mubr.f32.mxu0 0.0
  %479 = vmatmul.mubr.f32.gmra.mxu0 %v252
  %v480 = vpop.f32.mrf.mxu0
  %v481 = vadd.f32 0.0, %v480
  %v482 = vpop.f32.mrf.mxu0
  %v483 = vadd.f32 0.0, %v482
  %484 = vmatprep.mubr.f32.mxu0 0.0
  %485 = vmatmul.mubr.f32.gmra.mxu0 %v255
  %v486 = vpop.f32.mrf.mxu0
  %v487 = vadd.f32 0.0, %v486
  %v488 = vpop.f32.mrf.mxu0
  %v489 = vadd.f32 0.0, %v488
  %490 = vmatprep.mubr.f32.mxu0 0.0
  %491 = vmatmul.mubr.f32.gmra.mxu0 %v258
  %v492 = vpop.f32.mrf.mxu0
  %v493 = vadd.f32 0.0, %v492
  %v494 = vpop.f32.mrf.mxu0
  %v495 = vadd.f32 0.0, %v494
  %496 = vmatprep.mubr.f32.mxu0 0.0
  %497 = vmatmul.mubr.f32.gmra.mxu0 %v261
  %v498 = vpop.f32.mrf.mxu0
  %v499 = vadd.f32 0.0, %v498
  %v500 = vpop.f32.mrf.mxu0
  %v501 = vadd.f32 0.0, %v500
  %502 = vmatprep.mubr.f32.mxu0 0.0
  %503 = vmatmul.mubr.f32.gmra.mxu0 %v264
  %v504 = vpop.f32.mrf.mxu0
  %v505 = vadd.f32 0.0, %v504
  %v506 = vpop.f32.mrf.mxu0
  %v507 = vadd.f32 0.0, %v506
  %508 = vmatprep.mubr.f32.mxu0 0.0
  %509 = vmatmul.mubr.f32.gmra.mxu0 %v267
  %v510 = vpop.f32.mrf.mxu0
  %v511 = vadd.f32 0.0, %v510
  %v512 = vpop.f32.mrf.mxu0
  %v513 = vadd.f32 0.0, %v512
  %514 = vmatprep.mubr.f32.mxu0 0.0
  %515 = vmatmul.mubr.f32.gmra.mxu0 %v270
  %v516 = vpop.f32.mrf.mxu0
  %v517 = vadd.f32 0.0, %v516
  %v518 = vpop.f32.mrf.mxu0
  %v519 = vadd.f32 0.0, %v518
  %520 = vmatprep.mubr.f32.mxu0 0.0
  %521 = vmatmul.mubr.f32.gmra.mxu0 %v273
  %v522 = vpop.f32.mrf.mxu0
  %v523 = vadd.f32 0.0, %v522
  %v524 = vpop.f32.mrf.mxu0
  %v525 = vadd.f32 0.0, %v524
  %526 = vmatprep.mubr.f32.mxu0 0.0
  %527 = vmatmul.mubr.f32.gmra.mxu0 %v276
  %v528 = vpop.f32.mrf.mxu0
  %v529 = vadd.f32 0.0, %v528
  %v530 = vpop.f32.mrf.mxu0
  %v531 = vadd.f32 0.0, %v530
  %532 = vmatprep.mubr.f32.mxu0 0.0
  %533 = vmatmul.mubr.f32.gmra.mxu0 %v279
  %v534 = vpop.f32.mrf.mxu0
  %v535 = vadd.f32 0.0, %v534
  %v536 = vpop.f32.mrf.mxu0
  %v537 = vadd.f32 0.0, %v536
  %538 = vmatprep.mubr.f32.mxu0 0.0
  %539 = vmatmul.mubr.f32.gmra.mxu0 %v282
  %v540 = vpop.f32.mrf.mxu0
  %v541 = vadd.f32 0.0, %v540
  %v542 = vpop.f32.mrf.mxu0
  %v543 = vadd.f32 0.0, %v542
  %544 = vmatprep.mubr.f32.mxu0 0.0
  %545 = vmatmul.mubr.f32.gmra.mxu0 %v285
  %v546 = vpop.f32.mrf.mxu0
  %v547 = vadd.f32 0.0, %v546
  %v548 = vpop.f32.mrf.mxu0
  %v549 = vadd.f32 0.0, %v548
  %550 = vdwg.mxu0
  %v552 = vsel %vm76, %v110, 0
  %v555 = vsel %vm76, %v111, 0
  %v558 = vsel %vm76, %v112, 0
  %v561 = vsel %vm76, %v113, 0
  %v564 = vsel %vm76, %v114, 0
  %v567 = vsel %vm76, %v115, 0
  %v570 = vsel %vm76, %v116, 0
  %v573 = vsel %vm76, %v117, 0
  %v576 = vsel %vm76, %v118, 0
  %v579 = vsel %vm76, %v119, 0
  %v582 = vsel %vm76, %v120, 0
  %v585 = vsel %vm76, %v121, 0
  %v588 = vsel %vm76, %v122, 0
  %v591 = vsel %vm76, %v123, 0
  %v594 = vsel %vm76, %v124, 0
  %v597 = vsel %vm76, %v125, 0
  %v600 = vsel %vm76, %v126, 0
  %v603 = vsel %vm76, %v127, 0
  %v606 = vsel %vm76, %v128, 0
  %v609 = vsel %vm76, %v129, 0
  %v612 = vsel %vm76, %v130, 0
  %v615 = vsel %vm76, %v131, 0
  %v618 = vsel %vm76, %v132, 0
  %v621 = vsel %vm76, %v133, 0
  %v624 = vsel %vm76, %v134, 0
  %v627 = vsel %vm76, %v135, 0
  %v630 = vsel %vm76, %v136, 0
  %v633 = vsel %vm76, %v137, 0
  %v636 = vsel %vm76, %v138, 0
  %v639 = vsel %vm76, %v139, 0
  %v642 = vsel %vm76, %v140, 0
  %v645 = vsel %vm76, %v141, 0
  %v648 = vsel %vm287, %v148, 0
  %v651 = vsel %vm287, %v149, 0
  %653 = vmatprep.subr.mxu0 0.0
  %654 = vmatpush1.msra.mxu0 0.0
  %655 = vmatprep.subr.mxu0 0.0
  %656 = vmatpush1.msra.mxu0 0.0
  %657 = vmatprep.subr.mxu0 0.0
  %658 = vmatpush1.msra.mxu0 0.0
  %659 = vmatprep.subr.mxu0 0.0
  %660 = vmatpush1.msra.mxu0 0.0
  %661 = vmatprep.subr.mxu0 0.0
  %662 = vmatpush1.msra.mxu0 0.0
  %663 = vmatprep.subr.mxu0 0.0
  %664 = vmatpush1.msra.mxu0 0.0
  %665 = vmatprep.subr.mxu0 0.0
  %666 = vmatpush1.msra.mxu0 0.0
  %667 = vmatprep.subr.mxu0 0.0
  %668 = vmatpush1.msra.mxu0 0.0
  %669 = vmatprep.subr.mxu0 0.0
  %670 = vmatpush1.msra.mxu0 0.0
  %671 = vmatprep.subr.mxu0 0.0
  %672 = vmatpush1.msra.mxu0 0.0
  %673 = vmatprep.subr.mxu0 0.0
  %674 = vmatpush1.msra.mxu0 0.0
  %675 = vmatprep.subr.mxu0 0.0
  %676 = vmatpush1.msra.mxu0 0.0
  %677 = vmatprep.subr.mxu0 %v651
  %678 = vmatpush1.msra.mxu0 %v648
  %679 = vmatprep.subr.mxu0 %v147
  %680 = vmatpush1.msra.mxu0 %v146
  %681 = vmatprep.subr.mxu0 %v145
  %682 = vmatpush1.msra.mxu0 %v144
  %683 = vmatprep.subr.mxu0 %v143
  %684 = vmatpush1.msra.mxu0 %v142
  %685 = vmatprep.subr.mxu0 0.0
  %686 = vmatpush2.msra.mxu0 0.0
  %687 = vmatprep.subr.mxu0 0.0
  %688 = vmatpush2.msra.mxu0 0.0
  %689 = vmatprep.subr.mxu0 0.0
  %690 = vmatpush2.msra.mxu0 0.0
  %691 = vmatprep.subr.mxu0 0.0
  %692 = vmatpush2.msra.mxu0 0.0
  %693 = vmatprep.subr.mxu0 0.0
  %694 = vmatpush2.msra.mxu0 0.0
  %695 = vmatprep.subr.mxu0 0.0
  %696 = vmatpush2.msra.mxu0 0.0
  %697 = vmatprep.subr.mxu0 0.0
  %698 = vmatpush2.msra.mxu0 0.0
  %699 = vmatprep.subr.mxu0 0.0
  %700 = vmatpush2.msra.mxu0 0.0
  %701 = vmatprep.subr.mxu0 0.0
  %702 = vmatpush2.msra.mxu0 0.0
  %703 = vmatprep.subr.mxu0 0.0
  %704 = vmatpush2.msra.mxu0 0.0
  %705 = vmatprep.subr.mxu0 0.0
  %706 = vmatpush2.msra.mxu0 0.0
  %707 = vmatprep.subr.mxu0 0.0
  %708 = vmatpush2.msra.mxu0 0.0
  %709 = vmatprep.subr.mxu0 0.0
  %710 = vmatpush2.msra.mxu0 0.0
  %711 = vmatprep.subr.mxu0 0.0
  %712 = vmatpush2.msra.mxu0 0.0
  %713 = vmatprep.subr.mxu0 0.0
  %714 = vmatpush2.msra.mxu0 0.0
  %715 = vmatprep.subr.mxu0 0.0
  %716 = vmatpush2.msra.mxu0 0.0
  %717 = vmatprep.mubr.f32.mxu0 0.0
  %718 = vmatmul.mubr.f32.gmra.mxu0 %v552
  %v719 = vpop.f32.mrf.mxu0
  %v720 = vadd.f32 %v361, %v719
  %v721 = vpop.f32.mrf.mxu0
  %v722 = vadd.f32 %v363, %v721
  %723 = vmatprep.mubr.f32.mxu0 0.0
  %724 = vmatmul.mubr.f32.gmra.mxu0 %v555
  %v725 = vpop.f32.mrf.mxu0
  %v726 = vadd.f32 %v367, %v725
  %v727 = vpop.f32.mrf.mxu0
  %v728 = vadd.f32 %v369, %v727
  %729 = vmatprep.mubr.f32.mxu0 0.0
  %730 = vmatmul.mubr.f32.gmra.mxu0 %v558
  %v731 = vpop.f32.mrf.mxu0
  %v732 = vadd.f32 %v373, %v731
  %v733 = vpop.f32.mrf.mxu0
  %v734 = vadd.f32 %v375, %v733
  %735 = vmatprep.mubr.f32.mxu0 0.0
  %736 = vmatmul.mubr.f32.gmra.mxu0 %v561
  %v737 = vpop.f32.mrf.mxu0
  %v738 = vadd.f32 %v379, %v737
  %v739 = vpop.f32.mrf.mxu0
  %v740 = vadd.f32 %v381, %v739
  %741 = vmatprep.mubr.f32.mxu0 0.0
  %742 = vmatmul.mubr.f32.gmra.mxu0 %v564
  %v743 = vpop.f32.mrf.mxu0
  %v744 = vadd.f32 %v385, %v743
  %v745 = vpop.f32.mrf.mxu0
  %v746 = vadd.f32 %v387, %v745
  %747 = vmatprep.mubr.f32.mxu0 0.0
  %748 = vmatmul.mubr.f32.gmra.mxu0 %v567
  %v749 = vpop.f32.mrf.mxu0
  %v750 = vadd.f32 %v391, %v749
  %v751 = vpop.f32.mrf.mxu0
  %v752 = vadd.f32 %v393, %v751
  %753 = vmatprep.mubr.f32.mxu0 0.0
  %754 = vmatmul.mubr.f32.gmra.mxu0 %v570
  %v755 = vpop.f32.mrf.mxu0
  %v756 = vadd.f32 %v397, %v755
  %v757 = vpop.f32.mrf.mxu0
  %v758 = vadd.f32 %v399, %v757
  %759 = vmatprep.mubr.f32.mxu0 0.0
  %760 = vmatmul.mubr.f32.gmra.mxu0 %v573
  %v761 = vpop.f32.mrf.mxu0
  %v762 = vadd.f32 %v403, %v761
  %v763 = vpop.f32.mrf.mxu0
  %v764 = vadd.f32 %v405, %v763
  %765 = vmatprep.mubr.f32.mxu0 0.0
  %766 = vmatmul.mubr.f32.gmra.mxu0 %v576
  %v767 = vpop.f32.mrf.mxu0
  %v768 = vadd.f32 %v409, %v767
  %v769 = vpop.f32.mrf.mxu0
  %v770 = vadd.f32 %v411, %v769
  %771 = vmatprep.mubr.f32.mxu0 0.0
  %772 = vmatmul.mubr.f32.gmra.mxu0 %v579
  %v773 = vpop.f32.mrf.mxu0
  %v774 = vadd.f32 %v415, %v773
  %v775 = vpop.f32.mrf.mxu0
  %v776 = vadd.f32 %v417, %v775
  %777 = vmatprep.mubr.f32.mxu0 0.0
  %778 = vmatmul.mubr.f32.gmra.mxu0 %v582
  %v779 = vpop.f32.mrf.mxu0
  %v780 = vadd.f32 %v421, %v779
  %v781 = vpop.f32.mrf.mxu0
  %v782 = vadd.f32 %v423, %v781
  %783 = vmatprep.mubr.f32.mxu0 0.0
  %784 = vmatmul.mubr.f32.gmra.mxu0 %v585
  %v785 = vpop.f32.mrf.mxu0
  %v786 = vadd.f32 %v427, %v785
  %v787 = vpop.f32.mrf.mxu0
  %v788 = vadd.f32 %v429, %v787
  %789 = vmatprep.mubr.f32.mxu0 0.0
  %790 = vmatmul.mubr.f32.gmra.mxu0 %v588
  %v791 = vpop.f32.mrf.mxu0
  %v792 = vadd.f32 %v433, %v791
  %v793 = vpop.f32.mrf.mxu0
  %v794 = vadd.f32 %v435, %v793
  %795 = vmatprep.mubr.f32.mxu0 0.0
  %796 = vmatmul.mubr.f32.gmra.mxu0 %v591
  %v797 = vpop.f32.mrf.mxu0
  %v798 = vadd.f32 %v439, %v797
  %v799 = vpop.f32.mrf.mxu0
  %v800 = vadd.f32 %v441, %v799
  %801 = vmatprep.mubr.f32.mxu0 0.0
  %802 = vmatmul.mubr.f32.gmra.mxu0 %v594
  %v803 = vpop.f32.mrf.mxu0
  %v804 = vadd.f32 %v445, %v803
  %v805 = vpop.f32.mrf.mxu0
  %v806 = vadd.f32 %v447, %v805
  %807 = vmatprep.mubr.f32.mxu0 0.0
  %808 = vmatmul.mubr.f32.gmra.mxu0 %v597
  %v809 = vpop.f32.mrf.mxu0
  %v810 = vadd.f32 %v451, %v809
  %v811 = vpop.f32.mrf.mxu0
  %v812 = vadd.f32 %v453, %v811
  %813 = vmatprep.mubr.f32.mxu0 0.0
  %814 = vmatmul.mubr.f32.gmra.mxu0 %v600
  %v815 = vpop.f32.mrf.mxu0
  %v816 = vadd.f32 %v457, %v815
  %v817 = vpop.f32.mrf.mxu0
  %v818 = vadd.f32 %v459, %v817
  %819 = vmatprep.mubr.f32.mxu0 0.0
  %820 = vmatmul.mubr.f32.gmra.mxu0 %v603
  %v821 = vpop.f32.mrf.mxu0
  %v822 = vadd.f32 %v463, %v821
  %v823 = vpop.f32.mrf.mxu0
  %v824 = vadd.f32 %v465, %v823
  %825 = vmatprep.mubr.f32.mxu0 0.0
  %826 = vmatmul.mubr.f32.gmra.mxu0 %v606
  %v827 = vpop.f32.mrf.mxu0
  %v828 = vadd.f32 %v469, %v827
  %v829 = vpop.f32.mrf.mxu0
  %v830 = vadd.f32 %v471, %v829
  %831 = vmatprep.mubr.f32.mxu0 0.0
  %832 = vmatmul.mubr.f32.gmra.mxu0 %v609
  %v833 = vpop.f32.mrf.mxu0
  %v834 = vadd.f32 %v475, %v833
  %v835 = vpop.f32.mrf.mxu0
  %v836 = vadd.f32 %v477, %v835
  %837 = vmatprep.mubr.f32.mxu0 0.0
  %838 = vmatmul.mubr.f32.gmra.mxu0 %v612
  %v839 = vpop.f32.mrf.mxu0
  %v840 = vadd.f32 %v481, %v839
  %v841 = vpop.f32.mrf.mxu0
  %v842 = vadd.f32 %v483, %v841
  %843 = vmatprep.mubr.f32.mxu0 0.0
  %844 = vmatmul.mubr.f32.gmra.mxu0 %v615
  %v845 = vpop.f32.mrf.mxu0
  %v846 = vadd.f32 %v487, %v845
  %v847 = vpop.f32.mrf.mxu0
  %v848 = vadd.f32 %v489, %v847
  %849 = vmatprep.mubr.f32.mxu0 0.0
  %850 = vmatmul.mubr.f32.gmra.mxu0 %v618
  %v851 = vpop.f32.mrf.mxu0
  %v852 = vadd.f32 %v493, %v851
  %v853 = vpop.f32.mrf.mxu0
  %v854 = vadd.f32 %v495, %v853
  %855 = vmatprep.mubr.f32.mxu0 0.0
  %856 = vmatmul.mubr.f32.gmra.mxu0 %v621
  %v857 = vpop.f32.mrf.mxu0
  %v858 = vadd.f32 %v499, %v857
  %v859 = vpop.f32.mrf.mxu0
  %v860 = vadd.f32 %v501, %v859
  %861 = vmatprep.mubr.f32.mxu0 0.0
  %862 = vmatmul.mubr.f32.gmra.mxu0 %v624
  %v863 = vpop.f32.mrf.mxu0
  %v864 = vadd.f32 %v505, %v863
  %v865 = vpop.f32.mrf.mxu0
  %v866 = vadd.f32 %v507, %v865
  %867 = vmatprep.mubr.f32.mxu0 0.0
  %868 = vmatmul.mubr.f32.gmra.mxu0 %v627
  %v869 = vpop.f32.mrf.mxu0
  %v870 = vadd.f32 %v511, %v869
  %v871 = vpop.f32.mrf.mxu0
  %v872 = vadd.f32 %v513, %v871
  %873 = vmatprep.mubr.f32.mxu0 0.0
  %874 = vmatmul.mubr.f32.gmra.mxu0 %v630
  %v875 = vpop.f32.mrf.mxu0
  %v876 = vadd.f32 %v517, %v875
  %v877 = vpop.f32.mrf.mxu0
  %v878 = vadd.f32 %v519, %v877
  %879 = vmatprep.mubr.f32.mxu0 0.0
  %880 = vmatmul.mubr.f32.gmra.mxu0 %v633
  %v881 = vpop.f32.mrf.mxu0
  %v882 = vadd.f32 %v523, %v881
  %v883 = vpop.f32.mrf.mxu0
  %v884 = vadd.f32 %v525, %v883
  %885 = vmatprep.mubr.f32.mxu0 0.0
  %886 = vmatmul.mubr.f32.gmra.mxu0 %v636
  %v887 = vpop.f32.mrf.mxu0
  %v888 = vadd.f32 %v529, %v887
  %v889 = vpop.f32.mrf.mxu0
  %v890 = vadd.f32 %v531, %v889
  %891 = vmatprep.mubr.f32.mxu0 0.0
  %892 = vmatmul.mubr.f32.gmra.mxu0 %v639
  %v893 = vpop.f32.mrf.mxu0
  %v894 = vadd.f32 %v535, %v893
  %v895 = vpop.f32.mrf.mxu0
  %v896 = vadd.f32 %v537, %v895
  %897 = vmatprep.mubr.f32.mxu0 0.0
  %898 = vmatmul.mubr.f32.gmra.mxu0 %v642
  %v899 = vpop.f32.mrf.mxu0
  %v900 = vadd.f32 %v541, %v899
  %v901 = vpop.f32.mrf.mxu0
  %v902 = vadd.f32 %v543, %v901
  %903 = vmatprep.mubr.f32.mxu0 0.0
  %904 = vmatmul.mubr.f32.gmra.mxu0 %v645
  %v905 = vpop.f32.mrf.mxu0
  %v906 = vadd.f32 %v547, %v905
  %v907 = vpop.f32.mrf.mxu0
  %v908 = vadd.f32 %v549, %v907
  %909 = vdwg.mxu0
  %v910 = vld [vmem:[#allocation2 + $0x2] sm:$0xff]
  %v911 = vld [vmem:[#allocation2 + $0xa] sm:$0xff]
  %v912 = vld [vmem:[#allocation2 + $0x12] sm:$0xff]
  %v913 = vld [vmem:[#allocation2 + $0x1a] sm:$0xff]
  %v914 = vld [vmem:[#allocation2 + $0x2a] sm:$0xff]
  %v915 = vld [vmem:[#allocation2 + $0x32] sm:$0xff]
  %v916 = vld [vmem:[#allocation2 + $0x3a] sm:$0xff]
  %v917 = vld [vmem:[#allocation2 + $0x42] sm:$0xff]
  %v918 = vld [vmem:[#allocation2 + $0x52] sm:$0xff]
  %v919 = vld [vmem:[#allocation2 + $0x5a] sm:$0xff]
  %v920 = vld [vmem:[#allocation2 + $0x62] sm:$0xff]
  %v921 = vld [vmem:[#allocation2 + $0x6a] sm:$0xff]
  %v922 = vld [vmem:[#allocation2 + $0x7a] sm:$0xff]
  %v923 = vld [vmem:[#allocation2 + $0x82] sm:$0xff]
  %v924 = vld [vmem:[#allocation2 + $0x8a] sm:$0xff]
  %v925 = vld [vmem:[#allocation2 + $0x92] sm:$0xff]
  %v926 = vld [vmem:[#allocation2 + $0xa2] sm:$0xff]
  %v927 = vld [vmem:[#allocation2 + $0xaa] sm:$0xff]
  %v928 = vld [vmem:[#allocation2 + $0xb2] sm:$0xff]
  %v929 = vld [vmem:[#allocation2 + $0xba] sm:$0xff]
  %v930 = vld [vmem:[#allocation2 + $0xca] sm:$0xff]
  %v931 = vld [vmem:[#allocation2 + $0xd2] sm:$0xff]
  %v932 = vld [vmem:[#allocation2 + $0xda] sm:$0xff]
  %v933 = vld [vmem:[#allocation2 + $0xe2] sm:$0xff]
  %v934 = vld [vmem:[#allocation2 + $0xf2] sm:$0xff]
  %v935 = vld [vmem:[#allocation2 + $0xfa] sm:$0xff]
  %v936 = vld [vmem:[#allocation2 + $0x102] sm:$0xff]
  %v937 = vld [vmem:[#allocation2 + $0x10a] sm:$0xff]
  %v938 = vld [vmem:[#allocation2 + $0x11a] sm:$0xff]
  %v939 = vld [vmem:[#allocation2 + $0x122] sm:$0xff]
  %v940 = vld [vmem:[#allocation2 + $0x12a] sm:$0xff]
  %v941 = vld [vmem:[#allocation2 + $0x132] sm:$0xff]
  %s942 = scalar_lea.vmem %s1, 128
  %v943 = vld [vmem:[%s942] sm:$0xff]
  %v944 = vld [vmem:[%s942 + $0x8] sm:$0xff]
  %v945 = vld [vmem:[%s942 + $0x10] sm:$0xff]
  %v946 = vld [vmem:[%s942 + $0x18] sm:$0xff]
  %v947 = vld [vmem:[%s942 + $0x20] sm:$0xff]
  %v948 = vld [vmem:[%s942 + $0x28] sm:$0xff]
  %v949 = vld [vmem:[%s942 + $0x30] sm:$0xf]
  %v950 = vld [vmem:[%s942 + $0x38] sm:$0xf]
  %v952 = vsel %vm76, %v910, 0
  %v955 = vsel %vm76, %v911, 0
  %v958 = vsel %vm76, %v912, 0
  %v961 = vsel %vm76, %v913, 0
  %v964 = vsel %vm76, %v914, 0
  %v967 = vsel %vm76, %v915, 0
  %v970 = vsel %vm76, %v916, 0
  %v973 = vsel %vm76, %v917, 0
  %v976 = vsel %vm76, %v918, 0
  %v979 = vsel %vm76, %v919, 0
  %v982 = vsel %vm76, %v920, 0
  %v985 = vsel %vm76, %v921, 0
  %v988 = vsel %vm76, %v922, 0
  %v991 = vsel %vm76, %v923, 0
  %v994 = vsel %vm76, %v924, 0
  %v997 = vsel %vm76, %v925, 0
  %v1000 = vsel %vm76, %v926, 0
  %v1003 = vsel %vm76, %v927, 0
  %v1006 = vsel %vm76, %v928, 0
  %v1009 = vsel %vm76, %v929, 0
  %v1012 = vsel %vm76, %v930, 0
  %v1015 = vsel %vm76, %v931, 0
  %v1018 = vsel %vm76, %v932, 0
  %v1021 = vsel %vm76, %v933, 0
  %v1024 = vsel %vm76, %v934, 0
  %v1027 = vsel %vm76, %v935, 0
  %v1030 = vsel %vm76, %v936, 0
  %v1033 = vsel %vm76, %v937, 0
  %v1036 = vsel %vm76, %v938, 0
  %v1039 = vsel %vm76, %v939, 0
  %v1042 = vsel %vm76, %v940, 0
  %v1045 = vsel %vm76, %v941, 0
  %v1048 = vsel %vm287, %v949, 0
  %v1051 = vsel %vm287, %v950, 0
  %1053 = vmatprep.subr.mxu0 0.0
  %1054 = vmatpush1.msra.mxu0 0.0
  %1055 = vmatprep.subr.mxu0 0.0
  %1056 = vmatpush1.msra.mxu0 0.0
  %1057 = vmatprep.subr.mxu0 0.0
  %1058 = vmatpush1.msra.mxu0 0.0
  %1059 = vmatprep.subr.mxu0 0.0
  %1060 = vmatpush1.msra.mxu0 0.0
  %1061 = vmatprep.subr.mxu0 0.0
  %1062 = vmatpush1.msra.mxu0 0.0
  %1063 = vmatprep.subr.mxu0 0.0
  %1064 = vmatpush1.msra.mxu0 0.0
  %1065 = vmatprep.subr.mxu0 0.0
  %1066 = vmatpush1.msra.mxu0 0.0
  %1067 = vmatprep.subr.mxu0 0.0
  %1068 = vmatpush1.msra.mxu0 0.0
  %1069 = vmatprep.subr.mxu0 0.0
  %1070 = vmatpush1.msra.mxu0 0.0
  %1071 = vmatprep.subr.mxu0 0.0
  %1072 = vmatpush1.msra.mxu0 0.0
  %1073 = vmatprep.subr.mxu0 0.0
  %1074 = vmatpush1.msra.mxu0 0.0
  %1075 = vmatprep.subr.mxu0 0.0
  %1076 = vmatpush1.msra.mxu0 0.0
  %1077 = vmatprep.subr.mxu0 %v1051
  %1078 = vmatpush1.msra.mxu0 %v1048
  %1079 = vmatprep.subr.mxu0 %v948
  %1080 = vmatpush1.msra.mxu0 %v947
  %1081 = vmatprep.subr.mxu0 %v946
  %1082 = vmatpush1.msra.mxu0 %v945
  %1083 = vmatprep.subr.mxu0 %v944
  %1084 = vmatpush1.msra.mxu0 %v943
  %1085 = vmatprep.subr.mxu0 0.0
  %1086 = vmatpush2.msra.mxu0 0.0
  %1087 = vmatprep.subr.mxu0 0.0
  %1088 = vmatpush2.msra.mxu0 0.0
  %1089 = vmatprep.subr.mxu0 0.0
  %1090 = vmatpush2.msra.mxu0 0.0
  %1091 = vmatprep.subr.mxu0 0.0
  %1092 = vmatpush2.msra.mxu0 0.0
  %1093 = vmatprep.subr.mxu0 0.0
  %1094 = vmatpush2.msra.mxu0 0.0
  %1095 = vmatprep.subr.mxu0 0.0
  %1096 = vmatpush2.msra.mxu0 0.0
  %1097 = vmatprep.subr.mxu0 0.0
  %1098 = vmatpush2.msra.mxu0 0.0
  %1099 = vmatprep.subr.mxu0 0.0
  %1100 = vmatpush2.msra.mxu0 0.0
  %1101 = vmatprep.subr.mxu0 0.0
  %1102 = vmatpush2.msra.mxu0 0.0
  %1103 = vmatprep.subr.mxu0 0.0
  %1104 = vmatpush2.msra.mxu0 0.0
  %1105 = vmatprep.subr.mxu0 0.0
  %1106 = vmatpush2.msra.mxu0 0.0
  %1107 = vmatprep.subr.mxu0 0.0
  %1108 = vmatpush2.msra.mxu0 0.0
  %1109 = vmatprep.subr.mxu0 0.0
  %1110 = vmatpush2.msra.mxu0 0.0
  %1111 = vmatprep.subr.mxu0 0.0
  %1112 = vmatpush2.msra.mxu0 0.0
  %1113 = vmatprep.subr.mxu0 0.0
  %1114 = vmatpush2.msra.mxu0 0.0
  %1115 = vmatprep.subr.mxu0 0.0
  %1116 = vmatpush2.msra.mxu0 0.0
  %1117 = vmatprep.mubr.f32.mxu0 0.0
  %1118 = vmatmul.mubr.f32.gmra.mxu0 %v952
  %v1119 = vpop.f32.mrf.mxu0
  %v1120 = vadd.f32 0.0, %v1119
  %v1121 = vpop.f32.mrf.mxu0
  %v1122 = vadd.f32 0.0, %v1121
  %1123 = vmatprep.mubr.f32.mxu0 0.0
  %1124 = vmatmul.mubr.f32.gmra.mxu0 %v955
  %v1125 = vpop.f32.mrf.mxu0
  %v1126 = vadd.f32 0.0, %v1125
  %v1127 = vpop.f32.mrf.mxu0
  %v1128 = vadd.f32 0.0, %v1127
  %1129 = vmatprep.mubr.f32.mxu0 0.0
  %1130 = vmatmul.mubr.f32.gmra.mxu0 %v958
  %v1131 = vpop.f32.mrf.mxu0
  %v1132 = vadd.f32 0.0, %v1131
  %v1133 = vpop.f32.mrf.mxu0
  %v1134 = vadd.f32 0.0, %v1133
  %1135 = vmatprep.mubr.f32.mxu0 0.0
  %1136 = vmatmul.mubr.f32.gmra.mxu0 %v961
  %v1137 = vpop.f32.mrf.mxu0
  %v1138 = vadd.f32 0.0, %v1137
  %v1139 = vpop.f32.mrf.mxu0
  %v1140 = vadd.f32 0.0, %v1139
  %1141 = vmatprep.mubr.f32.mxu0 0.0
  %1142 = vmatmul.mubr.f32.gmra.mxu0 %v964
  %v1143 = vpop.f32.mrf.mxu0
  %v1144 = vadd.f32 0.0, %v1143
  %v1145 = vpop.f32.mrf.mxu0
  %v1146 = vadd.f32 0.0, %v1145
  %1147 = vmatprep.mubr.f32.mxu0 0.0
  %1148 = vmatmul.mubr.f32.gmra.mxu0 %v967
  %v1149 = vpop.f32.mrf.mxu0
  %v1150 = vadd.f32 0.0, %v1149
  %v1151 = vpop.f32.mrf.mxu0
  %v1152 = vadd.f32 0.0, %v1151
  %1153 = vmatprep.mubr.f32.mxu0 0.0
  %1154 = vmatmul.mubr.f32.gmra.mxu0 %v970
  %v1155 = vpop.f32.mrf.mxu0
  %v1156 = vadd.f32 0.0, %v1155
  %v1157 = vpop.f32.mrf.mxu0
  %v1158 = vadd.f32 0.0, %v1157
  %1159 = vmatprep.mubr.f32.mxu0 0.0
  %1160 = vmatmul.mubr.f32.gmra.mxu0 %v973
  %v1161 = vpop.f32.mrf.mxu0
  %v1162 = vadd.f32 0.0, %v1161
  %v1163 = vpop.f32.mrf.mxu0
  %v1164 = vadd.f32 0.0, %v1163
  %1165 = vmatprep.mubr.f32.mxu0 0.0
  %1166 = vmatmul.mubr.f32.gmra.mxu0 %v976
  %v1167 = vpop.f32.mrf.mxu0
  %v1168 = vadd.f32 0.0, %v1167
  %v1169 = vpop.f32.mrf.mxu0
  %v1170 = vadd.f32 0.0, %v1169
  %1171 = vmatprep.mubr.f32.mxu0 0.0
  %1172 = vmatmul.mubr.f32.gmra.mxu0 %v979
  %v1173 = vpop.f32.mrf.mxu0
  %v1174 = vadd.f32 0.0, %v1173
  %v1175 = vpop.f32.mrf.mxu0
  %v1176 = vadd.f32 0.0, %v1175
  %1177 = vmatprep.mubr.f32.mxu0 0.0
  %1178 = vmatmul.mubr.f32.gmra.mxu0 %v982
  %v1179 = vpop.f32.mrf.mxu0
  %v1180 = vadd.f32 0.0, %v1179
  %v1181 = vpop.f32.mrf.mxu0
  %v1182 = vadd.f32 0.0, %v1181
  %1183 = vmatprep.mubr.f32.mxu0 0.0
  %1184 = vmatmul.mubr.f32.gmra.mxu0 %v985
  %v1185 = vpop.f32.mrf.mxu0
  %v1186 = vadd.f32 0.0, %v1185
  %v1187 = vpop.f32.mrf.mxu0
  %v1188 = vadd.f32 0.0, %v1187
  %1189 = vmatprep.mubr.f32.mxu0 0.0
  %1190 = vmatmul.mubr.f32.gmra.mxu0 %v988
  %v1191 = vpop.f32.mrf.mxu0
  %v1192 = vadd.f32 0.0, %v1191
  %v1193 = vpop.f32.mrf.mxu0
  %v1194 = vadd.f32 0.0, %v1193
  %1195 = vmatprep.mubr.f32.mxu0 0.0
  %1196 = vmatmul.mubr.f32.gmra.mxu0 %v991
  %v1197 = vpop.f32.mrf.mxu0
  %v1198 = vadd.f32 0.0, %v1197
  %v1199 = vpop.f32.mrf.mxu0
  %v1200 = vadd.f32 0.0, %v1199
  %1201 = vmatprep.mubr.f32.mxu0 0.0
  %1202 = vmatmul.mubr.f32.gmra.mxu0 %v994
  %v1203 = vpop.f32.mrf.mxu0
  %v1204 = vadd.f32 0.0, %v1203
  %v1205 = vpop.f32.mrf.mxu0
  %v1206 = vadd.f32 0.0, %v1205
  %1207 = vmatprep.mubr.f32.mxu0 0.0
  %1208 = vmatmul.mubr.f32.gmra.mxu0 %v997
  %v1209 = vpop.f32.mrf.mxu0
  %v1210 = vadd.f32 0.0, %v1209
  %v1211 = vpop.f32.mrf.mxu0
  %v1212 = vadd.f32 0.0, %v1211
  %1213 = vmatprep.mubr.f32.mxu0 0.0
  %1214 = vmatmul.mubr.f32.gmra.mxu0 %v1000
  %v1215 = vpop.f32.mrf.mxu0
  %v1216 = vadd.f32 0.0, %v1215
  %v1217 = vpop.f32.mrf.mxu0
  %v1218 = vadd.f32 0.0, %v1217
  %1219 = vmatprep.mubr.f32.mxu0 0.0
  %1220 = vmatmul.mubr.f32.gmra.mxu0 %v1003
  %v1221 = vpop.f32.mrf.mxu0
  %v1222 = vadd.f32 0.0, %v1221
  %v1223 = vpop.f32.mrf.mxu0
  %v1224 = vadd.f32 0.0, %v1223
  %1225 = vmatprep.mubr.f32.mxu0 0.0
  %1226 = vmatmul.mubr.f32.gmra.mxu0 %v1006
  %v1227 = vpop.f32.mrf.mxu0
  %v1228 = vadd.f32 0.0, %v1227
  %v1229 = vpop.f32.mrf.mxu0
  %v1230 = vadd.f32 0.0, %v1229
  %1231 = vmatprep.mubr.f32.mxu0 0.0
  %1232 = vmatmul.mubr.f32.gmra.mxu0 %v1009
  %v1233 = vpop.f32.mrf.mxu0
  %v1234 = vadd.f32 0.0, %v1233
  %v1235 = vpop.f32.mrf.mxu0
  %v1236 = vadd.f32 0.0, %v1235
  %1237 = vmatprep.mubr.f32.mxu0 0.0
  %1238 = vmatmul.mubr.f32.gmra.mxu0 %v1012
  %v1239 = vpop.f32.mrf.mxu0
  %v1240 = vadd.f32 0.0, %v1239
  %v1241 = vpop.f32.mrf.mxu0
  %v1242 = vadd.f32 0.0, %v1241
  %1243 = vmatprep.mubr.f32.mxu0 0.0
  %1244 = vmatmul.mubr.f32.gmra.mxu0 %v1015
  %v1245 = vpop.f32.mrf.mxu0
  %v1246 = vadd.f32 0.0, %v1245
  %v1247 = vpop.f32.mrf.mxu0
  %v1248 = vadd.f32 0.0, %v1247
  %1249 = vmatprep.mubr.f32.mxu0 0.0
  %1250 = vmatmul.mubr.f32.gmra.mxu0 %v1018
  %v1251 = vpop.f32.mrf.mxu0
  %v1252 = vadd.f32 0.0, %v1251
  %v1253 = vpop.f32.mrf.mxu0
  %v1254 = vadd.f32 0.0, %v1253
  %1255 = vmatprep.mubr.f32.mxu0 0.0
  %1256 = vmatmul.mubr.f32.gmra.mxu0 %v1021
  %v1257 = vpop.f32.mrf.mxu0
  %v1258 = vadd.f32 0.0, %v1257
  %v1259 = vpop.f32.mrf.mxu0
  %v1260 = vadd.f32 0.0, %v1259
  %1261 = vmatprep.mubr.f32.mxu0 0.0
  %1262 = vmatmul.mubr.f32.gmra.mxu0 %v1024
  %v1263 = vpop.f32.mrf.mxu0
  %v1264 = vadd.f32 0.0, %v1263
  %v1265 = vpop.f32.mrf.mxu0
  %v1266 = vadd.f32 0.0, %v1265
  %1267 = vmatprep.mubr.f32.mxu0 0.0
  %1268 = vmatmul.mubr.f32.gmra.mxu0 %v1027
  %v1269 = vpop.f32.mrf.mxu0
  %v1270 = vadd.f32 0.0, %v1269
  %v1271 = vpop.f32.mrf.mxu0
  %v1272 = vadd.f32 0.0, %v1271
  %1273 = vmatprep.mubr.f32.mxu0 0.0
  %1274 = vmatmul.mubr.f32.gmra.mxu0 %v1030
  %v1275 = vpop.f32.mrf.mxu0
  %v1276 = vadd.f32 0.0, %v1275
  %v1277 = vpop.f32.mrf.mxu0
  %v1278 = vadd.f32 0.0, %v1277
  %1279 = vmatprep.mubr.f32.mxu0 0.0
  %1280 = vmatmul.mubr.f32.gmra.mxu0 %v1033
  %v1281 = vpop.f32.mrf.mxu0
  %v1282 = vadd.f32 0.0, %v1281
  %v1283 = vpop.f32.mrf.mxu0
  %v1284 = vadd.f32 0.0, %v1283
  %1285 = vmatprep.mubr.f32.mxu0 0.0
  %1286 = vmatmul.mubr.f32.gmra.mxu0 %v1036
  %v1287 = vpop.f32.mrf.mxu0
  %v1288 = vadd.f32 0.0, %v1287
  %v1289 = vpop.f32.mrf.mxu0
  %v1290 = vadd.f32 0.0, %v1289
  %1291 = vmatprep.mubr.f32.mxu0 0.0
  %1292 = vmatmul.mubr.f32.gmra.mxu0 %v1039
  %v1293 = vpop.f32.mrf.mxu0
  %v1294 = vadd.f32 0.0, %v1293
  %v1295 = vpop.f32.mrf.mxu0
  %v1296 = vadd.f32 0.0, %v1295
  %1297 = vmatprep.mubr.f32.mxu0 0.0
  %1298 = vmatmul.mubr.f32.gmra.mxu0 %v1042
  %v1299 = vpop.f32.mrf.mxu0
  %v1300 = vadd.f32 0.0, %v1299
  %v1301 = vpop.f32.mrf.mxu0
  %v1302 = vadd.f32 0.0, %v1301
  %1303 = vmatprep.mubr.f32.mxu0 0.0
  %1304 = vmatmul.mubr.f32.gmra.mxu0 %v1045
  %v1305 = vpop.f32.mrf.mxu0
  %v1306 = vadd.f32 0.0, %v1305
  %v1307 = vpop.f32.mrf.mxu0
  %v1308 = vadd.f32 0.0, %v1307
  %1309 = vdwg.mxu0
  %v1310 = vadd.f32 %v720, %v1120
  %v1311 = vadd.f32 %v722, %v1122
  %v1312 = vadd.f32 %v726, %v1126
  %v1313 = vadd.f32 %v728, %v1128
  %v1314 = vadd.f32 %v732, %v1132
  %v1315 = vadd.f32 %v734, %v1134
  %v1316 = vadd.f32 %v738, %v1138
  %v1317 = vadd.f32 %v740, %v1140
  %v1318 = vadd.f32 %v744, %v1144
  %v1319 = vadd.f32 %v746, %v1146
  %v1320 = vadd.f32 %v750, %v1150
  %v1321 = vadd.f32 %v752, %v1152
  %v1322 = vadd.f32 %v756, %v1156
  %v1323 = vadd.f32 %v758, %v1158
  %v1324 = vadd.f32 %v762, %v1162
  %v1325 = vadd.f32 %v764, %v1164
  %v1326 = vadd.f32 %v768, %v1168
  %v1327 = vadd.f32 %v770, %v1170
  %v1328 = vadd.f32 %v774, %v1174
  %v1329 = vadd.f32 %v776, %v1176
  %v1330 = vadd.f32 %v780, %v1180
  %v1331 = vadd.f32 %v782, %v1182
  %v1332 = vadd.f32 %v786, %v1186
  %v1333 = vadd.f32 %v788, %v1188
  %v1334 = vadd.f32 %v792, %v1192
  %v1335 = vadd.f32 %v794, %v1194
  %v1336 = vadd.f32 %v798, %v1198
  %v1337 = vadd.f32 %v800, %v1200
  %v1338 = vadd.f32 %v804, %v1204
  %v1339 = vadd.f32 %v806, %v1206
  %v1340 = vadd.f32 %v810, %v1210
  %v1341 = vadd.f32 %v812, %v1212
  %v1342 = vadd.f32 %v816, %v1216
  %v1343 = vadd.f32 %v818, %v1218
  %v1344 = vadd.f32 %v822, %v1222
  %v1345 = vadd.f32 %v824, %v1224
  %v1346 = vadd.f32 %v828, %v1228
  %v1347 = vadd.f32 %v830, %v1230
  %v1348 = vadd.f32 %v834, %v1234
  %v1349 = vadd.f32 %v836, %v1236
  %v1350 = vadd.f32 %v840, %v1240
  %v1351 = vadd.f32 %v842, %v1242
  %v1352 = vadd.f32 %v846, %v1246
  %v1353 = vadd.f32 %v848, %v1248
  %v1354 = vadd.f32 %v852, %v1252
  %v1355 = vadd.f32 %v854, %v1254
  %v1356 = vadd.f32 %v858, %v1258
  %v1357 = vadd.f32 %v860, %v1260
  %v1358 = vadd.f32 %v864, %v1264
  %v1359 = vadd.f32 %v866, %v1266
  %v1360 = vadd.f32 %v870, %v1270
  %v1361 = vadd.f32 %v872, %v1272
  %v1362 = vadd.f32 %v876, %v1276
  %v1363 = vadd.f32 %v878, %v1278
  %v1364 = vadd.f32 %v882, %v1282
  %v1365 = vadd.f32 %v884, %v1284
  %v1366 = vadd.f32 %v888, %v1288
  %v1367 = vadd.f32 %v890, %v1290
  %v1368 = vadd.f32 %v894, %v1294
  %v1369 = vadd.f32 %v896, %v1296
  %v1370 = vadd.f32 %v900, %v1300
  %v1371 = vadd.f32 %v902, %v1302
  %v1372 = vadd.f32 %v906, %v1306
  %v1373 = vadd.f32 %v908, %v1308
  %v1374 = vld [vmem:[%s2] sm:$0x3]
  %v1376 = vlaneseq
  %v1377 = vshrl.u32 %v1376, 7
  %v1378 = vsub.s32 0, %v1377
  %v1379 = vrot.slane %v1374, %v1378
  %v1380 = vlaneseq
  %v1381 = vshrl.u32 %v1380, 7
  %v1382 = vsub.s32 1, %v1381
  %v1383 = vrot.slane %v1374, %v1382
  %v1386 = vadd.f32 %v1310, %v1379
  %v1387 = vadd.f32 %v1311, %v1383
  %v1388 = vadd.f32 %v1312, %v1379
  %v1389 = vadd.f32 %v1313, %v1383
  %v1390 = vadd.f32 %v1314, %v1379
  %v1391 = vadd.f32 %v1315, %v1383
  %v1392 = vadd.f32 %v1316, %v1379
  %v1393 = vadd.f32 %v1317, %v1383
  %v1394 = vadd.f32 %v1318, %v1379
  %v1395 = vadd.f32 %v1319, %v1383
  %v1396 = vadd.f32 %v1320, %v1379
  %v1397 = vadd.f32 %v1321, %v1383
  %v1398 = vadd.f32 %v1322, %v1379
  %v1399 = vadd.f32 %v1323, %v1383
  %v1400 = vadd.f32 %v1324, %v1379
  %v1401 = vadd.f32 %v1325, %v1383
  %v1402 = vadd.f32 %v1326, %v1379
  %v1403 = vadd.f32 %v1327, %v1383
  %v1404 = vadd.f32 %v1328, %v1379
  %v1405 = vadd.f32 %v1329, %v1383
  %v1406 = vadd.f32 %v1330, %v1379
  %v1407 = vadd.f32 %v1331, %v1383
  %v1408 = vadd.f32 %v1332, %v1379
  %v1409 = vadd.f32 %v1333, %v1383
  %v1410 = vadd.f32 %v1334, %v1379
  %v1411 = vadd.f32 %v1335, %v1383
  %v1412 = vadd.f32 %v1336, %v1379
  %v1413 = vadd.f32 %v1337, %v1383
  %v1414 = vadd.f32 %v1338, %v1379
  %v1415 = vadd.f32 %v1339, %v1383
  %v1416 = vadd.f32 %v1340, %v1379
  %v1417 = vadd.f32 %v1341, %v1383
  %v1418 = vadd.f32 %v1342, %v1379
  %v1419 = vadd.f32 %v1343, %v1383
  %v1420 = vadd.f32 %v1344, %v1379
  %v1421 = vadd.f32 %v1345, %v1383
  %v1422 = vadd.f32 %v1346, %v1379
  %v1423 = vadd.f32 %v1347, %v1383
  %v1424 = vadd.f32 %v1348, %v1379
  %v1425 = vadd.f32 %v1349, %v1383
  %v1426 = vadd.f32 %v1350, %v1379
  %v1427 = vadd.f32 %v1351, %v1383
  %v1428 = vadd.f32 %v1352, %v1379
  %v1429 = vadd.f32 %v1353, %v1383
  %v1430 = vadd.f32 %v1354, %v1379
  %v1431 = vadd.f32 %v1355, %v1383
  %v1432 = vadd.f32 %v1356, %v1379
  %v1433 = vadd.f32 %v1357, %v1383
  %v1434 = vadd.f32 %v1358, %v1379
  %v1435 = vadd.f32 %v1359, %v1383
  %v1436 = vadd.f32 %v1360, %v1379
  %v1437 = vadd.f32 %v1361, %v1383
  %v1438 = vadd.f32 %v1362, %v1379
  %v1439 = vadd.f32 %v1363, %v1383
  %v1440 = vadd.f32 %v1364, %v1379
  %v1441 = vadd.f32 %v1365, %v1383
  %v1442 = vadd.f32 %v1366, %v1379
  %v1443 = vadd.f32 %v1367, %v1383
  %v1444 = vadd.f32 %v1368, %v1379
  %v1445 = vadd.f32 %v1369, %v1383
  %v1446 = vadd.f32 %v1370, %v1379
  %v1447 = vadd.f32 %v1371, %v1383
  %v1448 = vadd.f32 %v1372, %v1379
  %v1449 = vadd.f32 %v1373, %v1383
  %v1450 = vmax.f32 %v1386, 0.0
  %v1451 = vmax.f32 %v1387, 0.0
  %v1452 = vmax.f32 %v1388, 0.0
  %v1453 = vmax.f32 %v1389, 0.0
  %v1454 = vmax.f32 %v1390, 0.0
  %v1455 = vmax.f32 %v1391, 0.0
  %v1456 = vmax.f32 %v1392, 0.0
  %v1457 = vmax.f32 %v1393, 0.0
  %v1458 = vmax.f32 %v1394, 0.0
  %v1459 = vmax.f32 %v1395, 0.0
  %v1460 = vmax.f32 %v1396, 0.0
  %v1461 = vmax.f32 %v1397, 0.0
  %v1462 = vmax.f32 %v1398, 0.0
  %v1463 = vmax.f32 %v1399, 0.0
  %v1464 = vmax.f32 %v1400, 0.0
  %v1465 = vmax.f32 %v1401, 0.0
  %v1466 = vmax.f32 %v1402, 0.0
  %v1467 = vmax.f32 %v1403, 0.0
  %v1468 = vmax.f32 %v1404, 0.0
  %v1469 = vmax.f32 %v1405, 0.0
  %v1470 = vmax.f32 %v1406, 0.0
  %v1471 = vmax.f32 %v1407, 0.0
  %v1472 = vmax.f32 %v1408, 0.0
  %v1473 = vmax.f32 %v1409, 0.0
  %v1474 = vmax.f32 %v1410, 0.0
  %v1475 = vmax.f32 %v1411, 0.0
  %v1476 = vmax.f32 %v1412, 0.0
  %v1477 = vmax.f32 %v1413, 0.0
  %v1478 = vmax.f32 %v1414, 0.0
  %v1479 = vmax.f32 %v1415, 0.0
  %v1480 = vmax.f32 %v1416, 0.0
  %v1481 = vmax.f32 %v1417, 0.0
  %v1482 = vmax.f32 %v1418, 0.0
  %v1483 = vmax.f32 %v1419, 0.0
  %v1484 = vmax.f32 %v1420, 0.0
  %v1485 = vmax.f32 %v1421, 0.0
  %v1486 = vmax.f32 %v1422, 0.0
  %v1487 = vmax.f32 %v1423, 0.0
  %v1488 = vmax.f32 %v1424, 0.0
  %v1489 = vmax.f32 %v1425, 0.0
  %v1490 = vmax.f32 %v1426, 0.0
  %v1491 = vmax.f32 %v1427, 0.0
  %v1492 = vmax.f32 %v1428, 0.0
  %v1493 = vmax.f32 %v1429, 0.0
  %v1494 = vmax.f32 %v1430, 0.0
  %v1495 = vmax.f32 %v1431, 0.0
  %v1496 = vmax.f32 %v1432, 0.0
  %v1497 = vmax.f32 %v1433, 0.0
  %v1498 = vmax.f32 %v1434, 0.0
  %v1499 = vmax.f32 %v1435, 0.0
  %v1500 = vmax.f32 %v1436, 0.0
  %v1501 = vmax.f32 %v1437, 0.0
  %v1502 = vmax.f32 %v1438, 0.0
  %v1503 = vmax.f32 %v1439, 0.0
  %v1504 = vmax.f32 %v1440, 0.0
  %v1505 = vmax.f32 %v1441, 0.0
  %v1506 = vmax.f32 %v1442, 0.0
  %v1507 = vmax.f32 %v1443, 0.0
  %v1508 = vmax.f32 %v1444, 0.0
  %v1509 = vmax.f32 %v1445, 0.0
  %v1510 = vmax.f32 %v1446, 0.0
  %v1511 = vmax.f32 %v1447, 0.0
  %v1512 = vmax.f32 %v1448, 0.0
  %v1513 = vmax.f32 %v1449, 0.0
  %v1578 = vcombine.low %v1450, %v1451
  %v1579 = vcombine.high %v1450, %v1451
  %v1580 = vcombine.low %v1452, %v1453
  %v1581 = vcombine.high %v1452, %v1453
  %v1582 = vcombine.low %v1454, %v1455
  %v1583 = vcombine.high %v1454, %v1455
  %v1584 = vcombine.low %v1456, %v1457
  %v1585 = vcombine.low %v1458, %v1459
  %v1586 = vcombine.high %v1458, %v1459
  %v1587 = vcombine.low %v1460, %v1461
  %v1588 = vcombine.high %v1460, %v1461
  %v1589 = vcombine.low %v1462, %v1463
  %v1590 = vcombine.high %v1462, %v1463
  %v1591 = vcombine.low %v1464, %v1465
  %v1592 = vcombine.low %v1466, %v1467
  %v1593 = vcombine.high %v1466, %v1467
  %v1594 = vcombine.low %v1468, %v1469
  %v1595 = vcombine.high %v1468, %v1469
  %v1596 = vcombine.low %v1470, %v1471
  %v1597 = vcombine.high %v1470, %v1471
  %v1598 = vcombine.low %v1472, %v1473
  %v1599 = vcombine.low %v1474, %v1475
  %v1600 = vcombine.high %v1474, %v1475
  %v1601 = vcombine.low %v1476, %v1477
  %v1602 = vcombine.high %v1476, %v1477
  %v1603 = vcombine.low %v1478, %v1479
  %v1604 = vcombine.high %v1478, %v1479
  %v1605 = vcombine.low %v1480, %v1481
  %v1606 = vcombine.low %v1482, %v1483
  %v1607 = vcombine.high %v1482, %v1483
  %v1608 = vcombine.low %v1484, %v1485
  %v1609 = vcombine.high %v1484, %v1485
  %v1610 = vcombine.low %v1486, %v1487
  %v1611 = vcombine.high %v1486, %v1487
  %v1612 = vcombine.low %v1488, %v1489
  %v1613 = vcombine.low %v1490, %v1491
  %v1614 = vcombine.high %v1490, %v1491
  %v1615 = vcombine.low %v1492, %v1493
  %v1616 = vcombine.high %v1492, %v1493
  %v1617 = vcombine.low %v1494, %v1495
  %v1618 = vcombine.high %v1494, %v1495
  %v1619 = vcombine.low %v1496, %v1497
  %v1620 = vcombine.low %v1498, %v1499
  %v1621 = vcombine.high %v1498, %v1499
  %v1622 = vcombine.low %v1500, %v1501
  %v1623 = vcombine.high %v1500, %v1501
  %v1624 = vcombine.low %v1502, %v1503
  %v1625 = vcombine.high %v1502, %v1503
  %v1626 = vcombine.low %v1504, %v1505
  %v1627 = vcombine.low %v1506, %v1507
  %v1628 = vcombine.high %v1506, %v1507
  %v1629 = vcombine.low %v1508, %v1509
  %v1630 = vcombine.high %v1508, %v1509
  %v1631 = vcombine.low %v1510, %v1511
  %v1632 = vcombine.high %v1510, %v1511
  %v1633 = vcombine.low %v1512, %v1513
  %v1691 = vunpack.c.l.s4 1966171168
  %v1692 = vunpack.c.0.s8 %v1691
  %v1693 = vlaneseq
  %v1694 = vshrl.u32 %v1693, 7
  %v1695 = vsub.s32 %v1692, %v1694
  %v1696 = vrot.slane %v1578, %v1695
  %v1698 = vunpack.c.l.s4 1966171168
  %v1699 = vunpack.c.0.s8 %v1698
  %v1700 = vlaneseq
  %v1701 = vshrl.u32 %v1700, 7
  %v1702 = vsub.s32 %v1699, %v1701
  %v1703 = vrot.slane %v1579, %v1702
  %v1705 = vunpack.c.l.s4 1966171168
  %v1706 = vunpack.c.0.s8 %v1705
  %v1707 = vlaneseq
  %v1708 = vshrl.u32 %v1707, 7
  %v1709 = vsub.s32 %v1706, %v1708
  %v1710 = vrot.slane %v1580, %v1709
  %v1712 = vunpack.c.l.s4 1966171168
  %v1713 = vunpack.c.0.s8 %v1712
  %v1714 = vlaneseq
  %v1715 = vshrl.u32 %v1714, 7
  %v1716 = vsub.s32 %v1713, %v1715
  %v1717 = vrot.slane %v1581, %v1716
  %v1719 = vunpack.c.l.s4 1966171168
  %v1720 = vunpack.c.0.s8 %v1719
  %v1721 = vlaneseq
  %v1722 = vshrl.u32 %v1721, 7
  %v1723 = vsub.s32 %v1720, %v1722
  %v1724 = vrot.slane %v1582, %v1723
  %v1726 = vunpack.c.l.s4 1966171168
  %v1727 = vunpack.c.0.s8 %v1726
  %v1728 = vlaneseq
  %v1729 = vshrl.u32 %v1728, 7
  %v1730 = vsub.s32 %v1727, %v1729
  %v1731 = vrot.slane %v1583, %v1730
  %v1733 = vunpack.c.l.s4 1966171168
  %v1734 = vunpack.c.0.s8 %v1733
  %v1735 = vlaneseq
  %v1736 = vshrl.u32 %v1735, 7
  %v1737 = vsub.s32 %v1734, %v1736
  %v1738 = vrot.slane %v1584, %v1737
  %v1740 = vunpack.c.l.s4 1966171168
  %v1741 = vunpack.c.0.s8 %v1740
  %v1742 = vlaneseq
  %v1743 = vshrl.u32 %v1742, 7
  %v1744 = vsub.s32 %v1741, %v1743
  %v1745 = vrot.slane %v1585, %v1744
  %v1747 = vunpack.c.l.s4 1966171168
  %v1748 = vunpack.c.0.s8 %v1747
  %v1749 = vlaneseq
  %v1750 = vshrl.u32 %v1749, 7
  %v1751 = vsub.s32 %v1748, %v1750
  %v1752 = vrot.slane %v1586, %v1751
  %v1754 = vunpack.c.l.s4 1966171168
  %v1755 = vunpack.c.0.s8 %v1754
  %v1756 = vlaneseq
  %v1757 = vshrl.u32 %v1756, 7
  %v1758 = vsub.s32 %v1755, %v1757
  %v1759 = vrot.slane %v1587, %v1758
  %v1761 = vunpack.c.l.s4 1966171168
  %v1762 = vunpack.c.0.s8 %v1761
  %v1763 = vlaneseq
  %v1764 = vshrl.u32 %v1763, 7
  %v1765 = vsub.s32 %v1762, %v1764
  %v1766 = vrot.slane %v1588, %v1765
  %v1768 = vunpack.c.l.s4 1966171168
  %v1769 = vunpack.c.0.s8 %v1768
  %v1770 = vlaneseq
  %v1771 = vshrl.u32 %v1770, 7
  %v1772 = vsub.s32 %v1769, %v1771
  %v1773 = vrot.slane %v1589, %v1772
  %v1775 = vunpack.c.l.s4 1966171168
  %v1776 = vunpack.c.0.s8 %v1775
  %v1777 = vlaneseq
  %v1778 = vshrl.u32 %v1777, 7
  %v1779 = vsub.s32 %v1776, %v1778
  %v1780 = vrot.slane %v1590, %v1779
  %v1782 = vunpack.c.l.s4 1966171168
  %v1783 = vunpack.c.0.s8 %v1782
  %v1784 = vlaneseq
  %v1785 = vshrl.u32 %v1784, 7
  %v1786 = vsub.s32 %v1783, %v1785
  %v1787 = vrot.slane %v1591, %v1786
  %v1789 = vunpack.c.l.s4 1966171168
  %v1790 = vunpack.c.0.s8 %v1789
  %v1791 = vlaneseq
  %v1792 = vshrl.u32 %v1791, 7
  %v1793 = vsub.s32 %v1790, %v1792
  %v1794 = vrot.slane %v1592, %v1793
  %v1796 = vunpack.c.l.s4 1966171168
  %v1797 = vunpack.c.0.s8 %v1796
  %v1798 = vlaneseq
  %v1799 = vshrl.u32 %v1798, 7
  %v1800 = vsub.s32 %v1797, %v1799
  %v1801 = vrot.slane %v1593, %v1800
  %v1803 = vunpack.c.l.s4 1966171168
  %v1804 = vunpack.c.0.s8 %v1803
  %v1805 = vlaneseq
  %v1806 = vshrl.u32 %v1805, 7
  %v1807 = vsub.s32 %v1804, %v1806
  %v1808 = vrot.slane %v1594, %v1807
  %v1810 = vunpack.c.l.s4 1966171168
  %v1811 = vunpack.c.0.s8 %v1810
  %v1812 = vlaneseq
  %v1813 = vshrl.u32 %v1812, 7
  %v1814 = vsub.s32 %v1811, %v1813
  %v1815 = vrot.slane %v1595, %v1814
  %v1817 = vunpack.c.l.s4 1966171168
  %v1818 = vunpack.c.0.s8 %v1817
  %v1819 = vlaneseq
  %v1820 = vshrl.u32 %v1819, 7
  %v1821 = vsub.s32 %v1818, %v1820
  %v1822 = vrot.slane %v1596, %v1821
  %v1824 = vunpack.c.l.s4 1966171168
  %v1825 = vunpack.c.0.s8 %v1824
  %v1826 = vlaneseq
  %v1827 = vshrl.u32 %v1826, 7
  %v1828 = vsub.s32 %v1825, %v1827
  %v1829 = vrot.slane %v1597, %v1828
  %v1831 = vunpack.c.l.s4 1966171168
  %v1832 = vunpack.c.0.s8 %v1831
  %v1833 = vlaneseq
  %v1834 = vshrl.u32 %v1833, 7
  %v1835 = vsub.s32 %v1832, %v1834
  %v1836 = vrot.slane %v1598, %v1835
  %v1838 = vunpack.c.l.s4 1966171168
  %v1839 = vunpack.c.0.s8 %v1838
  %v1840 = vlaneseq
  %v1841 = vshrl.u32 %v1840, 7
  %v1842 = vsub.s32 %v1839, %v1841
  %v1843 = vrot.slane %v1599, %v1842
  %v1845 = vunpack.c.l.s4 1966171168
  %v1846 = vunpack.c.0.s8 %v1845
  %v1847 = vlaneseq
  %v1848 = vshrl.u32 %v1847, 7
  %v1849 = vsub.s32 %v1846, %v1848
  %v1850 = vrot.slane %v1600, %v1849
  %v1852 = vunpack.c.l.s4 1966171168
  %v1853 = vunpack.c.0.s8 %v1852
  %v1854 = vlaneseq
  %v1855 = vshrl.u32 %v1854, 7
  %v1856 = vsub.s32 %v1853, %v1855
  %v1857 = vrot.slane %v1601, %v1856
  %v1859 = vunpack.c.l.s4 1966171168
  %v1860 = vunpack.c.0.s8 %v1859
  %v1861 = vlaneseq
  %v1862 = vshrl.u32 %v1861, 7
  %v1863 = vsub.s32 %v1860, %v1862
  %v1864 = vrot.slane %v1602, %v1863
  %v1866 = vunpack.c.l.s4 1966171168
  %v1867 = vunpack.c.0.s8 %v1866
  %v1868 = vlaneseq
  %v1869 = vshrl.u32 %v1868, 7
  %v1870 = vsub.s32 %v1867, %v1869
  %v1871 = vrot.slane %v1603, %v1870
  %v1873 = vunpack.c.l.s4 1966171168
  %v1874 = vunpack.c.0.s8 %v1873
  %v1875 = vlaneseq
  %v1876 = vshrl.u32 %v1875, 7
  %v1877 = vsub.s32 %v1874, %v1876
  %v1878 = vrot.slane %v1604, %v1877
  %v1880 = vunpack.c.l.s4 1966171168
  %v1881 = vunpack.c.0.s8 %v1880
  %v1882 = vlaneseq
  %v1883 = vshrl.u32 %v1882, 7
  %v1884 = vsub.s32 %v1881, %v1883
  %v1885 = vrot.slane %v1605, %v1884
  %v1887 = vunpack.c.l.s4 1966171168
  %v1888 = vunpack.c.0.s8 %v1887
  %v1889 = vlaneseq
  %v1890 = vshrl.u32 %v1889, 7
  %v1891 = vsub.s32 %v1888, %v1890
  %v1892 = vrot.slane %v1606, %v1891
  %v1894 = vunpack.c.l.s4 1966171168
  %v1895 = vunpack.c.0.s8 %v1894
  %v1896 = vlaneseq
  %v1897 = vshrl.u32 %v1896, 7
  %v1898 = vsub.s32 %v1895, %v1897
  %v1899 = vrot.slane %v1607, %v1898
  %v1901 = vunpack.c.l.s4 1966171168
  %v1902 = vunpack.c.0.s8 %v1901
  %v1903 = vlaneseq
  %v1904 = vshrl.u32 %v1903, 7
  %v1905 = vsub.s32 %v1902, %v1904
  %v1906 = vrot.slane %v1608, %v1905
  %v1908 = vunpack.c.l.s4 1966171168
  %v1909 = vunpack.c.0.s8 %v1908
  %v1910 = vlaneseq
  %v1911 = vshrl.u32 %v1910, 7
  %v1912 = vsub.s32 %v1909, %v1911
  %v1913 = vrot.slane %v1609, %v1912
  %v1915 = vunpack.c.l.s4 1966171168
  %v1916 = vunpack.c.0.s8 %v1915
  %v1917 = vlaneseq
  %v1918 = vshrl.u32 %v1917, 7
  %v1919 = vsub.s32 %v1916, %v1918
  %v1920 = vrot.slane %v1610, %v1919
  %v1922 = vunpack.c.l.s4 1966171168
  %v1923 = vunpack.c.0.s8 %v1922
  %v1924 = vlaneseq
  %v1925 = vshrl.u32 %v1924, 7
  %v1926 = vsub.s32 %v1923, %v1925
  %v1927 = vrot.slane %v1611, %v1926
  %v1929 = vunpack.c.l.s4 1966171168
  %v1930 = vunpack.c.0.s8 %v1929
  %v1931 = vlaneseq
  %v1932 = vshrl.u32 %v1931, 7
  %v1933 = vsub.s32 %v1930, %v1932
  %v1934 = vrot.slane %v1612, %v1933
  %v1936 = vunpack.c.l.s4 1966171168
  %v1937 = vunpack.c.0.s8 %v1936
  %v1938 = vlaneseq
  %v1939 = vshrl.u32 %v1938, 7
  %v1940 = vsub.s32 %v1937, %v1939
  %v1941 = vrot.slane %v1613, %v1940
  %v1943 = vunpack.c.l.s4 1966171168
  %v1944 = vunpack.c.0.s8 %v1943
  %v1945 = vlaneseq
  %v1946 = vshrl.u32 %v1945, 7
  %v1947 = vsub.s32 %v1944, %v1946
  %v1948 = vrot.slane %v1614, %v1947
  %v1950 = vunpack.c.l.s4 1966171168
  %v1951 = vunpack.c.0.s8 %v1950
  %v1952 = vlaneseq
  %v1953 = vshrl.u32 %v1952, 7
  %v1954 = vsub.s32 %v1951, %v1953
  %v1955 = vrot.slane %v1615, %v1954
  %v1957 = vunpack.c.l.s4 1966171168
  %v1958 = vunpack.c.0.s8 %v1957
  %v1959 = vlaneseq
  %v1960 = vshrl.u32 %v1959, 7
  %v1961 = vsub.s32 %v1958, %v1960
  %v1962 = vrot.slane %v1616, %v1961
  %v1964 = vunpack.c.l.s4 1966171168
  %v1965 = vunpack.c.0.s8 %v1964
  %v1966 = vlaneseq
  %v1967 = vshrl.u32 %v1966, 7
  %v1968 = vsub.s32 %v1965, %v1967
  %v1969 = vrot.slane %v1617, %v1968
  %v1971 = vunpack.c.l.s4 1966171168
  %v1972 = vunpack.c.0.s8 %v1971
  %v1973 = vlaneseq
  %v1974 = vshrl.u32 %v1973, 7
  %v1975 = vsub.s32 %v1972, %v1974
  %v1976 = vrot.slane %v1618, %v1975
  %v1978 = vunpack.c.l.s4 1966171168
  %v1979 = vunpack.c.0.s8 %v1978
  %v1980 = vlaneseq
  %v1981 = vshrl.u32 %v1980, 7
  %v1982 = vsub.s32 %v1979, %v1981
  %v1983 = vrot.slane %v1619, %v1982
  %v1985 = vunpack.c.l.s4 1966171168
  %v1986 = vunpack.c.0.s8 %v1985
  %v1987 = vlaneseq
  %v1988 = vshrl.u32 %v1987, 7
  %v1989 = vsub.s32 %v1986, %v1988
  %v1990 = vrot.slane %v1620, %v1989
  %v1992 = vunpack.c.l.s4 1966171168
  %v1993 = vunpack.c.0.s8 %v1992
  %v1994 = vlaneseq
  %v1995 = vshrl.u32 %v1994, 7
  %v1996 = vsub.s32 %v1993, %v1995
  %v1997 = vrot.slane %v1621, %v1996
  %v1999 = vunpack.c.l.s4 1966171168
  %v2000 = vunpack.c.0.s8 %v1999
  %v2001 = vlaneseq
  %v2002 = vshrl.u32 %v2001, 7
  %v2003 = vsub.s32 %v2000, %v2002
  %v2004 = vrot.slane %v1622, %v2003
  %v2006 = vunpack.c.l.s4 1966171168
  %v2007 = vunpack.c.0.s8 %v2006
  %v2008 = vlaneseq
  %v2009 = vshrl.u32 %v2008, 7
  %v2010 = vsub.s32 %v2007, %v2009
  %v2011 = vrot.slane %v1623, %v2010
  %v2013 = vunpack.c.l.s4 1966171168
  %v2014 = vunpack.c.0.s8 %v2013
  %v2015 = vlaneseq
  %v2016 = vshrl.u32 %v2015, 7
  %v2017 = vsub.s32 %v2014, %v2016
  %v2018 = vrot.slane %v1624, %v2017
  %v2020 = vunpack.c.l.s4 1966171168
  %v2021 = vunpack.c.0.s8 %v2020
  %v2022 = vlaneseq
  %v2023 = vshrl.u32 %v2022, 7
  %v2024 = vsub.s32 %v2021, %v2023
  %v2025 = vrot.slane %v1625, %v2024
  %v2027 = vunpack.c.l.s4 1966171168
  %v2028 = vunpack.c.0.s8 %v2027
  %v2029 = vlaneseq
  %v2030 = vshrl.u32 %v2029, 7
  %v2031 = vsub.s32 %v2028, %v2030
  %v2032 = vrot.slane %v1626, %v2031
  %v2034 = vunpack.c.l.s4 1966171168
  %v2035 = vunpack.c.0.s8 %v2034
  %v2036 = vlaneseq
  %v2037 = vshrl.u32 %v2036, 7
  %v2038 = vsub.s32 %v2035, %v2037
  %v2039 = vrot.slane %v1627, %v2038
  %v2041 = vunpack.c.l.s4 1966171168
  %v2042 = vunpack.c.0.s8 %v2041
  %v2043 = vlaneseq
  %v2044 = vshrl.u32 %v2043, 7
  %v2045 = vsub.s32 %v2042, %v2044
  %v2046 = vrot.slane %v1628, %v2045
  %v2048 = vunpack.c.l.s4 1966171168
  %v2049 = vunpack.c.0.s8 %v2048
  %v2050 = vlaneseq
  %v2051 = vshrl.u32 %v2050, 7
  %v2052 = vsub.s32 %v2049, %v2051
  %v2053 = vrot.slane %v1629, %v2052
  %v2055 = vunpack.c.l.s4 1966171168
  %v2056 = vunpack.c.0.s8 %v2055
  %v2057 = vlaneseq
  %v2058 = vshrl.u32 %v2057, 7
  %v2059 = vsub.s32 %v2056, %v2058
  %v2060 = vrot.slane %v1630, %v2059
  %v2062 = vunpack.c.l.s4 1966171168
  %v2063 = vunpack.c.0.s8 %v2062
  %v2064 = vlaneseq
  %v2065 = vshrl.u32 %v2064, 7
  %v2066 = vsub.s32 %v2063, %v2065
  %v2067 = vrot.slane %v1631, %v2066
  %v2069 = vunpack.c.l.s4 1966171168
  %v2070 = vunpack.c.0.s8 %v2069
  %v2071 = vlaneseq
  %v2072 = vshrl.u32 %v2071, 7
  %v2073 = vsub.s32 %v2070, %v2072
  %v2074 = vrot.slane %v1632, %v2073
  %v2076 = vunpack.c.l.s4 1966171168
  %v2077 = vunpack.c.0.s8 %v2076
  %v2078 = vlaneseq
  %v2079 = vshrl.u32 %v2078, 7
  %v2080 = vsub.s32 %v2077, %v2079
  %v2081 = vrot.slane %v1633, %v2080
  %v2138 = vrot.slane %v1696, 4
  %v2139 = vrot.slane %v1703, 4
  %v2140 = vrot.slane %v1710, 4
  %v2141 = vrot.slane %v1717, 4
  %v2142 = vrot.slane %v1724, 4
  %v2143 = vrot.slane %v1731, 4
  %v2144 = vrot.slane %v1738, 4
  %v2145 = vrot.slane %v1745, 4
  %v2146 = vrot.slane %v1752, 4
  %v2147 = vrot.slane %v1759, 4
  %v2148 = vrot.slane %v1766, 4
  %v2149 = vrot.slane %v1773, 4
  %v2150 = vrot.slane %v1780, 4
  %v2151 = vrot.slane %v1787, 4
  %v2152 = vrot.slane %v1794, 4
  %v2153 = vrot.slane %v1801, 4
  %v2154 = vrot.slane %v1808, 4
  %v2155 = vrot.slane %v1815, 4
  %v2156 = vrot.slane %v1822, 4
  %v2157 = vrot.slane %v1829, 4
  %v2158 = vrot.slane %v1836, 4
  %v2159 = vrot.slane %v1843, 4
  %v2160 = vrot.slane %v1850, 4
  %v2161 = vrot.slane %v1857, 4
  %v2162 = vrot.slane %v1864, 4
  %v2163 = vrot.slane %v1871, 4
  %v2164 = vrot.slane %v1878, 4
  %v2165 = vrot.slane %v1885, 4
  %v2166 = vrot.slane %v1892, 4
  %v2167 = vrot.slane %v1899, 4
  %v2168 = vrot.slane %v1906, 4
  %v2169 = vrot.slane %v1913, 4
  %v2170 = vrot.slane %v1920, 4
  %v2171 = vrot.slane %v1927, 4
  %v2172 = vrot.slane %v1934, 4
  %v2173 = vrot.slane %v1941, 4
  %v2174 = vrot.slane %v1948, 4
  %v2175 = vrot.slane %v1955, 4
  %v2176 = vrot.slane %v1962, 4
  %v2177 = vrot.slane %v1969, 4
  %v2178 = vrot.slane %v1976, 4
  %v2179 = vrot.slane %v1983, 4
  %v2180 = vrot.slane %v1990, 4
  %v2181 = vrot.slane %v1997, 4
  %v2182 = vrot.slane %v2004, 4
  %v2183 = vrot.slane %v2011, 4
  %v2184 = vrot.slane %v2018, 4
  %v2185 = vrot.slane %v2025, 4
  %v2186 = vrot.slane %v2032, 4
  %v2187 = vrot.slane %v2039, 4
  %v2188 = vrot.slane %v2046, 4
  %v2189 = vrot.slane %v2053, 4
  %v2190 = vrot.slane %v2060, 4
  %v2191 = vrot.slane %v2067, 4
  %v2192 = vrot.slane %v2074, 4
  %v2193 = vrot.slane %v2081, 4
  %v2250 = vmax.f32 %v1696, %v2138
  %v2251 = vmax.f32 %v1703, %v2139
  %v2252 = vmax.f32 %v1710, %v2140
  %v2253 = vmax.f32 %v1717, %v2141
  %v2254 = vmax.f32 %v1724, %v2142
  %v2255 = vmax.f32 %v1731, %v2143
  %v2256 = vmax.f32 %v1738, %v2144
  %v2257 = vmax.f32 %v1745, %v2145
  %v2258 = vmax.f32 %v1752, %v2146
  %v2259 = vmax.f32 %v1759, %v2147
  %v2260 = vmax.f32 %v1766, %v2148
  %v2261 = vmax.f32 %v1773, %v2149
  %v2262 = vmax.f32 %v1780, %v2150
  %v2263 = vmax.f32 %v1787, %v2151
  %v2264 = vmax.f32 %v1794, %v2152
  %v2265 = vmax.f32 %v1801, %v2153
  %v2266 = vmax.f32 %v1808, %v2154
  %v2267 = vmax.f32 %v1815, %v2155
  %v2268 = vmax.f32 %v1822, %v2156
  %v2269 = vmax.f32 %v1829, %v2157
  %v2270 = vmax.f32 %v1836, %v2158
  %v2271 = vmax.f32 %v1843, %v2159
  %v2272 = vmax.f32 %v1850, %v2160
  %v2273 = vmax.f32 %v1857, %v2161
  %v2274 = vmax.f32 %v1864, %v2162
  %v2275 = vmax.f32 %v1871, %v2163
  %v2276 = vmax.f32 %v1878, %v2164
  %v2277 = vmax.f32 %v1885, %v2165
  %v2278 = vmax.f32 %v1892, %v2166
  %v2279 = vmax.f32 %v1899, %v2167
  %v2280 = vmax.f32 %v1906, %v2168
  %v2281 = vmax.f32 %v1913, %v2169
  %v2282 = vmax.f32 %v1920, %v2170
  %v2283 = vmax.f32 %v1927, %v2171
  %v2284 = vmax.f32 %v1934, %v2172
  %v2285 = vmax.f32 %v1941, %v2173
  %v2286 = vmax.f32 %v1948, %v2174
  %v2287 = vmax.f32 %v1955, %v2175
  %v2288 = vmax.f32 %v1962, %v2176
  %v2289 = vmax.f32 %v1969, %v2177
  %v2290 = vmax.f32 %v1976, %v2178
  %v2291 = vmax.f32 %v1983, %v2179
  %v2292 = vmax.f32 %v1990, %v2180
  %v2293 = vmax.f32 %v1997, %v2181
  %v2294 = vmax.f32 %v2004, %v2182
  %v2295 = vmax.f32 %v2011, %v2183
  %v2296 = vmax.f32 %v2018, %v2184
  %v2297 = vmax.f32 %v2025, %v2185
  %v2298 = vmax.f32 %v2032, %v2186
  %v2299 = vmax.f32 %v2039, %v2187
  %v2300 = vmax.f32 %v2046, %v2188
  %v2301 = vmax.f32 %v2053, %v2189
  %v2302 = vmax.f32 %v2060, %v2190
  %v2303 = vmax.f32 %v2067, %v2191
  %v2304 = vmax.f32 %v2074, %v2192
  %v2305 = vmax.f32 %v2081, %v2193
  %v2362 = vrot.slane %v2250, 2
  %v2363 = vrot.slane %v2251, 2
  %v2364 = vrot.slane %v2252, 2
  %v2365 = vrot.slane %v2253, 2
  %v2366 = vrot.slane %v2254, 2
  %v2367 = vrot.slane %v2255, 2
  %v2368 = vrot.slane %v2256, 2
  %v2369 = vrot.slane %v2257, 2
  %v2370 = vrot.slane %v2258, 2
  %v2371 = vrot.slane %v2259, 2
  %v2372 = vrot.slane %v2260, 2
  %v2373 = vrot.slane %v2261, 2
  %v2374 = vrot.slane %v2262, 2
  %v2375 = vrot.slane %v2263, 2
  %v2376 = vrot.slane %v2264, 2
  %v2377 = vrot.slane %v2265, 2
  %v2378 = vrot.slane %v2266, 2
  %v2379 = vrot.slane %v2267, 2
  %v2380 = vrot.slane %v2268, 2
  %v2381 = vrot.slane %v2269, 2
  %v2382 = vrot.slane %v2270, 2
  %v2383 = vrot.slane %v2271, 2
  %v2384 = vrot.slane %v2272, 2
  %v2385 = vrot.slane %v2273, 2
  %v2386 = vrot.slane %v2274, 2
  %v2387 = vrot.slane %v2275, 2
  %v2388 = vrot.slane %v2276, 2
  %v2389 = vrot.slane %v2277, 2
  %v2390 = vrot.slane %v2278, 2
  %v2391 = vrot.slane %v2279, 2
  %v2392 = vrot.slane %v2280, 2
  %v2393 = vrot.slane %v2281, 2
  %v2394 = vrot.slane %v2282, 2
  %v2395 = vrot.slane %v2283, 2
  %v2396 = vrot.slane %v2284, 2
  %v2397 = vrot.slane %v2285, 2
  %v2398 = vrot.slane %v2286, 2
  %v2399 = vrot.slane %v2287, 2
  %v2400 = vrot.slane %v2288, 2
  %v2401 = vrot.slane %v2289, 2
  %v2402 = vrot.slane %v2290, 2
  %v2403 = vrot.slane %v2291, 2
  %v2404 = vrot.slane %v2292, 2
  %v2405 = vrot.slane %v2293, 2
  %v2406 = vrot.slane %v2294, 2
  %v2407 = vrot.slane %v2295, 2
  %v2408 = vrot.slane %v2296, 2
  %v2409 = vrot.slane %v2297, 2
  %v2410 = vrot.slane %v2298, 2
  %v2411 = vrot.slane %v2299, 2
  %v2412 = vrot.slane %v2300, 2
  %v2413 = vrot.slane %v2301, 2
  %v2414 = vrot.slane %v2302, 2
  %v2415 = vrot.slane %v2303, 2
  %v2416 = vrot.slane %v2304, 2
  %v2417 = vrot.slane %v2305, 2
  %v2474 = vmax.f32 %v2250, %v2362
  %v2475 = vmax.f32 %v2251, %v2363
  %v2476 = vmax.f32 %v2252, %v2364
  %v2477 = vmax.f32 %v2253, %v2365
  %v2478 = vmax.f32 %v2254, %v2366
  %v2479 = vmax.f32 %v2255, %v2367
  %v2480 = vmax.f32 %v2256, %v2368
  %v2481 = vmax.f32 %v2257, %v2369
  %v2482 = vmax.f32 %v2258, %v2370
  %v2483 = vmax.f32 %v2259, %v2371
  %v2484 = vmax.f32 %v2260, %v2372
  %v2485 = vmax.f32 %v2261, %v2373
  %v2486 = vmax.f32 %v2262, %v2374
  %v2487 = vmax.f32 %v2263, %v2375
  %v2488 = vmax.f32 %v2264, %v2376
  %v2489 = vmax.f32 %v2265, %v2377
  %v2490 = vmax.f32 %v2266, %v2378
  %v2491 = vmax.f32 %v2267, %v2379
  %v2492 = vmax.f32 %v2268, %v2380
  %v2493 = vmax.f32 %v2269, %v2381
  %v2494 = vmax.f32 %v2270, %v2382
  %v2495 = vmax.f32 %v2271, %v2383
  %v2496 = vmax.f32 %v2272, %v2384
  %v2497 = vmax.f32 %v2273, %v2385
  %v2498 = vmax.f32 %v2274, %v2386
  %v2499 = vmax.f32 %v2275, %v2387
  %v2500 = vmax.f32 %v2276, %v2388
  %v2501 = vmax.f32 %v2277, %v2389
  %v2502 = vmax.f32 %v2278, %v2390
  %v2503 = vmax.f32 %v2279, %v2391
  %v2504 = vmax.f32 %v2280, %v2392
  %v2505 = vmax.f32 %v2281, %v2393
  %v2506 = vmax.f32 %v2282, %v2394
  %v2507 = vmax.f32 %v2283, %v2395
  %v2508 = vmax.f32 %v2284, %v2396
  %v2509 = vmax.f32 %v2285, %v2397
  %v2510 = vmax.f32 %v2286, %v2398
  %v2511 = vmax.f32 %v2287, %v2399
  %v2512 = vmax.f32 %v2288, %v2400
  %v2513 = vmax.f32 %v2289, %v2401
  %v2514 = vmax.f32 %v2290, %v2402
  %v2515 = vmax.f32 %v2291, %v2403
  %v2516 = vmax.f32 %v2292, %v2404
  %v2517 = vmax.f32 %v2293, %v2405
  %v2518 = vmax.f32 %v2294, %v2406
  %v2519 = vmax.f32 %v2295, %v2407
  %v2520 = vmax.f32 %v2296, %v2408
  %v2521 = vmax.f32 %v2297, %v2409
  %v2522 = vmax.f32 %v2298, %v2410
  %v2523 = vmax.f32 %v2299, %v2411
  %v2524 = vmax.f32 %v2300, %v2412
  %v2525 = vmax.f32 %v2301, %v2413
  %v2526 = vmax.f32 %v2302, %v2414
  %v2527 = vmax.f32 %v2303, %v2415
  %v2528 = vmax.f32 %v2304, %v2416
  %v2529 = vmax.f32 %v2305, %v2417
  %2530 = vst [vmem:[#allocation3] sm:$0x1] 0.0
  %2531 = vst [vmem:[#allocation3 + $0x18] sm:$0x1] 0.0
  %2532 = vst [vmem:[#allocation3 + $0x30] sm:$0x1] 0.0
  %2533 = vst [vmem:[#allocation3 + $0x48] sm:$0x1] 0.0
  %2534 = vst [vmem:[#allocation3 + $0x60] sm:$0x1] 0.0
  %2535 = vst [vmem:[#allocation3 + $0x78] sm:$0x1] 0.0
  %2536 = vst [vmem:[#allocation3 + $0x90] sm:$0x1] 0.0
  %2537 = vst [vmem:[#allocation3 + $0xa8] sm:$0x1] 0.0
  %2538 = vst [vmem:[#allocation3 + $0xf] sm:$0x7] 0.0
  %2539 = vst [vmem:[#allocation3 + $0x27] sm:$0x7] 0.0
  %2540 = vst [vmem:[#allocation3 + $0x3f] sm:$0x7] 0.0
  %2541 = vst [vmem:[#allocation3 + $0x57] sm:$0x7] 0.0
  %2542 = vst [vmem:[#allocation3 + $0x6f] sm:$0x7] 0.0
  %2543 = vst [vmem:[#allocation3 + $0x87] sm:$0x7] 0.0
  %2544 = vst [vmem:[#allocation3 + $0x9f] sm:$0x7] 0.0
  %2545 = vst [vmem:[#allocation3 + $0xb7] sm:$0x7] 0.0
  %v2602 = vcombine.low %v2474, %v2475
  %v2603 = vcombine.low %v2476, %v2477
  %v2605 = vunpack.c.l.s4 1983009808
  %v2606 = vunpack.c.0.s8 %v2605
  %v2607 = vlaneseq
  %v2608 = vshrl.u32 %v2607, 7
  %v2609 = vsub.s32 %v2606, %v2608
  %v2610 = vrot.slane %v2602, %v2609
  %v2612 = vunpack.c.l.s4 1983009808
  %v2613 = vunpack.c.0.s8 %v2612
  %v2614 = vlaneseq
  %v2615 = vshrl.u32 %v2614, 7
  %v2616 = vsub.s32 %v2613, %v2615
  %v2617 = vrot.slane %v2603, %v2616
  %v2618 = vcombine.low %v2610, %v2617
  %v2619 = vcombine.low %v2478, %v2479
  %v2621 = vunpack.c.l.s4 1983009808
  %v2622 = vunpack.c.0.s8 %v2621
  %v2623 = vlaneseq
  %v2624 = vshrl.u32 %v2623, 7
  %v2625 = vsub.s32 %v2622, %v2624
  %v2626 = vrot.slane %v2619, %v2625
  %v2628 = vunpack.c.l.s4 1983009808
  %v2629 = vunpack.c.0.s8 %v2628
  %v2630 = vlaneseq
  %v2631 = vshrl.u32 %v2630, 7
  %v2632 = vsub.s32 %v2629, %v2631
  %v2633 = vrot.slane %v2480, %v2632
  %v2634 = vcombine.low %v2626, %v2633
  %v2635 = vcombine.low %v2481, %v2482
  %v2636 = vcombine.low %v2483, %v2484
  %v2638 = vunpack.c.l.s4 1983009808
  %v2639 = vunpack.c.0.s8 %v2638
  %v2640 = vlaneseq
  %v2641 = vshrl.u32 %v2640, 7
  %v2642 = vsub.s32 %v2639, %v2641
  %v2643 = vrot.slane %v2635, %v2642
  %v2645 = vunpack.c.l.s4 1983009808
  %v2646 = vunpack.c.0.s8 %v2645
  %v2647 = vlaneseq
  %v2648 = vshrl.u32 %v2647, 7
  %v2649 = vsub.s32 %v2646, %v2648
  %v2650 = vrot.slane %v2636, %v2649
  %v2651 = vcombine.low %v2643, %v2650
  %v2652 = vcombine.low %v2485, %v2486
  %v2654 = vunpack.c.l.s4 1983009808
  %v2655 = vunpack.c.0.s8 %v2654
  %v2656 = vlaneseq
  %v2657 = vshrl.u32 %v2656, 7
  %v2658 = vsub.s32 %v2655, %v2657
  %v2659 = vrot.slane %v2652, %v2658
  %v2661 = vunpack.c.l.s4 1983009808
  %v2662 = vunpack.c.0.s8 %v2661
  %v2663 = vlaneseq
  %v2664 = vshrl.u32 %v2663, 7
  %v2665 = vsub.s32 %v2662, %v2664
  %v2666 = vrot.slane %v2487, %v2665
  %v2667 = vcombine.low %v2659, %v2666
  %v2668 = vcombine.low %v2488, %v2489
  %v2669 = vcombine.low %v2490, %v2491
  %v2671 = vunpack.c.l.s4 1983009808
  %v2672 = vunpack.c.0.s8 %v2671
  %v2673 = vlaneseq
  %v2674 = vshrl.u32 %v2673, 7
  %v2675 = vsub.s32 %v2672, %v2674
  %v2676 = vrot.slane %v2668, %v2675
  %v2678 = vunpack.c.l.s4 1983009808
  %v2679 = vunpack.c.0.s8 %v2678
  %v2680 = vlaneseq
  %v2681 = vshrl.u32 %v2680, 7
  %v2682 = vsub.s32 %v2679, %v2681
  %v2683 = vrot.slane %v2669, %v2682
  %v2684 = vcombine.low %v2676, %v2683
  %v2685 = vcombine.low %v2492, %v2493
  %v2687 = vunpack.c.l.s4 1983009808
  %v2688 = vunpack.c.0.s8 %v2687
  %v2689 = vlaneseq
  %v2690 = vshrl.u32 %v2689, 7
  %v2691 = vsub.s32 %v2688, %v2690
  %v2692 = vrot.slane %v2685, %v2691
  %v2694 = vunpack.c.l.s4 1983009808
  %v2695 = vunpack.c.0.s8 %v2694
  %v2696 = vlaneseq
  %v2697 = vshrl.u32 %v2696, 7
  %v2698 = vsub.s32 %v2695, %v2697
  %v2699 = vrot.slane %v2494, %v2698
  %v2700 = vcombine.low %v2692, %v2699
  %v2701 = vcombine.low %v2495, %v2496
  %v2702 = vcombine.low %v2497, %v2498
  %v2704 = vunpack.c.l.s4 1983009808
  %v2705 = vunpack.c.0.s8 %v2704
  %v2706 = vlaneseq
  %v2707 = vshrl.u32 %v2706, 7
  %v2708 = vsub.s32 %v2705, %v2707
  %v2709 = vrot.slane %v2701, %v2708
  %v2711 = vunpack.c.l.s4 1983009808
  %v2712 = vunpack.c.0.s8 %v2711
  %v2713 = vlaneseq
  %v2714 = vshrl.u32 %v2713, 7
  %v2715 = vsub.s32 %v2712, %v2714
  %v2716 = vrot.slane %v2702, %v2715
  %v2717 = vcombine.low %v2709, %v2716
  %v2718 = vcombine.low %v2499, %v2500
  %v2720 = vunpack.c.l.s4 1983009808
  %v2721 = vunpack.c.0.s8 %v2720
  %v2722 = vlaneseq
  %v2723 = vshrl.u32 %v2722, 7
  %v2724 = vsub.s32 %v2721, %v2723
  %v2725 = vrot.slane %v2718, %v2724
  %v2727 = vunpack.c.l.s4 1983009808
  %v2728 = vunpack.c.0.s8 %v2727
  %v2729 = vlaneseq
  %v2730 = vshrl.u32 %v2729, 7
  %v2731 = vsub.s32 %v2728, %v2730
  %v2732 = vrot.slane %v2501, %v2731
  %v2733 = vcombine.low %v2725, %v2732
  %v2734 = vcombine.low %v2502, %v2503
  %v2735 = vcombine.low %v2504, %v2505
  %v2737 = vunpack.c.l.s4 1983009808
  %v2738 = vunpack.c.0.s8 %v2737
  %v2739 = vlaneseq
  %v2740 = vshrl.u32 %v2739, 7
  %v2741 = vsub.s32 %v2738, %v2740
  %v2742 = vrot.slane %v2734, %v2741
  %v2744 = vunpack.c.l.s4 1983009808
  %v2745 = vunpack.c.0.s8 %v2744
  %v2746 = vlaneseq
  %v2747 = vshrl.u32 %v2746, 7
  %v2748 = vsub.s32 %v2745, %v2747
  %v2749 = vrot.slane %v2735, %v2748
  %v2750 = vcombine.low %v2742, %v2749
  %v2751 = vcombine.low %v2506, %v2507
  %v2753 = vunpack.c.l.s4 1983009808
  %v2754 = vunpack.c.0.s8 %v2753
  %v2755 = vlaneseq
  %v2756 = vshrl.u32 %v2755, 7
  %v2757 = vsub.s32 %v2754, %v2756
  %v2758 = vrot.slane %v2751, %v2757
  %v2760 = vunpack.c.l.s4 1983009808
  %v2761 = vunpack.c.0.s8 %v2760
  %v2762 = vlaneseq
  %v2763 = vshrl.u32 %v2762, 7
  %v2764 = vsub.s32 %v2761, %v2763
  %v2765 = vrot.slane %v2508, %v2764
  %v2766 = vcombine.low %v2758, %v2765
  %v2767 = vcombine.low %v2509, %v2510
  %v2768 = vcombine.low %v2511, %v2512
  %v2770 = vunpack.c.l.s4 1983009808
  %v2771 = vunpack.c.0.s8 %v2770
  %v2772 = vlaneseq
  %v2773 = vshrl.u32 %v2772, 7
  %v2774 = vsub.s32 %v2771, %v2773
  %v2775 = vrot.slane %v2767, %v2774
  %v2777 = vunpack.c.l.s4 1983009808
  %v2778 = vunpack.c.0.s8 %v2777
  %v2779 = vlaneseq
  %v2780 = vshrl.u32 %v2779, 7
  %v2781 = vsub.s32 %v2778, %v2780
  %v2782 = vrot.slane %v2768, %v2781
  %v2783 = vcombine.low %v2775, %v2782
  %v2784 = vcombine.low %v2513, %v2514
  %v2786 = vunpack.c.l.s4 1983009808
  %v2787 = vunpack.c.0.s8 %v2786
  %v2788 = vlaneseq
  %v2789 = vshrl.u32 %v2788, 7
  %v2790 = vsub.s32 %v2787, %v2789
  %v2791 = vrot.slane %v2784, %v2790
  %v2793 = vunpack.c.l.s4 1983009808
  %v2794 = vunpack.c.0.s8 %v2793
  %v2795 = vlaneseq
  %v2796 = vshrl.u32 %v2795, 7
  %v2797 = vsub.s32 %v2794, %v2796
  %v2798 = vrot.slane %v2515, %v2797
  %v2799 = vcombine.low %v2791, %v2798
  %v2800 = vcombine.low %v2516, %v2517
  %v2801 = vcombine.low %v2518, %v2519
  %v2803 = vunpack.c.l.s4 1983009808
  %v2804 = vunpack.c.0.s8 %v2803
  %v2805 = vlaneseq
  %v2806 = vshrl.u32 %v2805, 7
  %v2807 = vsub.s32 %v2804, %v2806
  %v2808 = vrot.slane %v2800, %v2807
  %v2810 = vunpack.c.l.s4 1983009808
  %v2811 = vunpack.c.0.s8 %v2810
  %v2812 = vlaneseq
  %v2813 = vshrl.u32 %v2812, 7
  %v2814 = vsub.s32 %v2811, %v2813
  %v2815 = vrot.slane %v2801, %v2814
  %v2816 = vcombine.low %v2808, %v2815
  %v2817 = vcombine.low %v2520, %v2521
  %v2819 = vunpack.c.l.s4 1983009808
  %v2820 = vunpack.c.0.s8 %v2819
  %v2821 = vlaneseq
  %v2822 = vshrl.u32 %v2821, 7
  %v2823 = vsub.s32 %v2820, %v2822
  %v2824 = vrot.slane %v2817, %v2823
  %v2826 = vunpack.c.l.s4 1983009808
  %v2827 = vunpack.c.0.s8 %v2826
  %v2828 = vlaneseq
  %v2829 = vshrl.u32 %v2828, 7
  %v2830 = vsub.s32 %v2827, %v2829
  %v2831 = vrot.slane %v2522, %v2830
  %v2832 = vcombine.low %v2824, %v2831
  %v2833 = vcombine.low %v2523, %v2524
  %v2834 = vcombine.low %v2525, %v2526
  %v2836 = vunpack.c.l.s4 1983009808
  %v2837 = vunpack.c.0.s8 %v2836
  %v2838 = vlaneseq
  %v2839 = vshrl.u32 %v2838, 7
  %v2840 = vsub.s32 %v2837, %v2839
  %v2841 = vrot.slane %v2833, %v2840
  %v2843 = vunpack.c.l.s4 1983009808
  %v2844 = vunpack.c.0.s8 %v2843
  %v2845 = vlaneseq
  %v2846 = vshrl.u32 %v2845, 7
  %v2847 = vsub.s32 %v2844, %v2846
  %v2848 = vrot.slane %v2834, %v2847
  %v2849 = vcombine.low %v2841, %v2848
  %v2850 = vcombine.low %v2527, %v2528
  %v2852 = vunpack.c.l.s4 1983009808
  %v2853 = vunpack.c.0.s8 %v2852
  %v2854 = vlaneseq
  %v2855 = vshrl.u32 %v2854, 7
  %v2856 = vsub.s32 %v2853, %v2855
  %v2857 = vrot.slane %v2850, %v2856
  %v2859 = vunpack.c.l.s4 1983009808
  %v2860 = vunpack.c.0.s8 %v2859
  %v2861 = vlaneseq
  %v2862 = vshrl.u32 %v2861, 7
  %v2863 = vsub.s32 %v2860, %v2862
  %v2864 = vrot.slane %v2529, %v2863
  %v2865 = vcombine.low %v2857, %v2864
  %2882 = vst [vmem:[#allocation3 + $0x1] sm:$0xff] %v2618
  %2883 = vst [vmem:[#allocation3 + $0x9] sm:$0x3f] %v2634
  %2884 = vst [vmem:[#allocation3 + $0x19] sm:$0xff] %v2651
  %2885 = vst [vmem:[#allocation3 + $0x21] sm:$0x3f] %v2667
  %2886 = vst [vmem:[#allocation3 + $0x31] sm:$0xff] %v2684
  %2887 = vst [vmem:[#allocation3 + $0x39] sm:$0x3f] %v2700
  %2888 = vst [vmem:[#allocation3 + $0x49] sm:$0xff] %v2717
  %2889 = vst [vmem:[#allocation3 + $0x51] sm:$0x3f] %v2733
  %2890 = vst [vmem:[#allocation3 + $0x61] sm:$0xff] %v2750
  %2891 = vst [vmem:[#allocation3 + $0x69] sm:$0x3f] %v2766
  %2892 = vst [vmem:[#allocation3 + $0x79] sm:$0xff] %v2783
  %2893 = vst [vmem:[#allocation3 + $0x81] sm:$0x3f] %v2799
  %2894 = vst [vmem:[#allocation3 + $0x91] sm:$0xff] %v2816
  %2895 = vst [vmem:[#allocation3 + $0x99] sm:$0x3f] %v2832
  %2896 = vst [vmem:[#allocation3 + $0xa9] sm:$0xff] %v2849
  %2897 = vst [vmem:[#allocation3 + $0xb1] sm:$0x3f] %v2865
  %v2898 = vld [vmem:[#allocation3] sm:$0xff]
  %v2899 = vld [vmem:[#allocation3 + $0x8] sm:$0xff]
  %v2900 = vld [vmem:[#allocation3 + $0x18] sm:$0xff]
  %v2901 = vld [vmem:[#allocation3 + $0x20] sm:$0xff]
  %v2902 = vld [vmem:[#allocation3 + $0x30] sm:$0xff]
  %v2903 = vld [vmem:[#allocation3 + $0x38] sm:$0xff]
  %v2904 = vld [vmem:[#allocation3 + $0x48] sm:$0xff]
  %v2905 = vld [vmem:[#allocation3 + $0x50] sm:$0xff]
  %v2906 = vld [vmem:[#allocation3 + $0x60] sm:$0xff]
  %v2907 = vld [vmem:[#allocation3 + $0x68] sm:$0xff]
  %v2908 = vld [vmem:[#allocation3 + $0x78] sm:$0xff]
  %v2909 = vld [vmem:[#allocation3 + $0x80] sm:$0xff]
  %v2910 = vld [vmem:[#allocation3 + $0x90] sm:$0xff]
  %v2911 = vld [vmem:[#allocation3 + $0x98] sm:$0xff]
  %v2912 = vld [vmem:[#allocation3 + $0xa8] sm:$0xff]
  %v2913 = vld [vmem:[#allocation3 + $0xb0] sm:$0xff]
  %v2914 = vld [vmem:[%s3] sm:$0xff]
  %v2915 = vld [vmem:[%s3 + $0x8] sm:$0xff]
  %v2916 = vld [vmem:[%s3 + $0x10] sm:$0xff]
  %v2917 = vld [vmem:[%s3 + $0x18] sm:$0xff]
  %v2918 = vld [vmem:[%s3 + $0x20] sm:$0xff]
  %v2919 = vld [vmem:[%s3 + $0x28] sm:$0xff]
  %v2920 = vld [vmem:[%s3 + $0x30] sm:$0xff]
  %v2921 = vld [vmem:[%s3 + $0x38] sm:$0xff]
  %v2922 = vld [vmem:[%s3 + $0x40] sm:$0xff]
  %v2923 = vld [vmem:[%s3 + $0x48] sm:$0xff]
  %v2924 = vld [vmem:[%s3 + $0x50] sm:$0xff]
  %v2925 = vld [vmem:[%s3 + $0x58] sm:$0xff]
  %v2926 = vld [vmem:[%s3 + $0x60] sm:$0xff]
  %v2927 = vld [vmem:[%s3 + $0x68] sm:$0xff]
  %v2928 = vld [vmem:[%s3 + $0x70] sm:$0xff]
  %v2929 = vld [vmem:[%s3 + $0x78] sm:$0xff]
  %v2930 = vld [vmem:[%s3 + $0x80] sm:$0xff]
  %v2931 = vld [vmem:[%s3 + $0x88] sm:$0xff]
  %v2932 = vld [vmem:[%s3 + $0x90] sm:$0xff]
  %v2933 = vld [vmem:[%s3 + $0x98] sm:$0xff]
  %v2934 = vld [vmem:[%s3 + $0xa0] sm:$0xff]
  %v2935 = vld [vmem:[%s3 + $0xa8] sm:$0xff]
  %v2936 = vld [vmem:[%s3 + $0xb0] sm:$0xff]
  %v2937 = vld [vmem:[%s3 + $0xb8] sm:$0xff]
  %v2938 = vld [vmem:[%s3 + $0xc0] sm:$0xff]
  %v2939 = vld [vmem:[%s3 + $0xc8] sm:$0xff]
  %v2940 = vld [vmem:[%s3 + $0xd0] sm:$0xff]
  %v2941 = vld [vmem:[%s3 + $0xd8] sm:$0xff]
  %v2942 = vld [vmem:[%s3 + $0xe0] sm:$0xff]
  %v2943 = vld [vmem:[%s3 + $0xe8] sm:$0xff]
  %v2944 = vld [vmem:[%s3 + $0xf0] sm:$0xff]
  %v2945 = vld [vmem:[%s3 + $0xf8] sm:$0xff]
  %v2946 = vld [vmem:[#allocation3 + $0x1] sm:$0xff]
  %v2947 = vld [vmem:[#allocation3 + $0x9] sm:$0xff]
  %v2948 = vld [vmem:[#allocation3 + $0x19] sm:$0xff]
  %v2949 = vld [vmem:[#allocation3 + $0x21] sm:$0xff]
  %v2950 = vld [vmem:[#allocation3 + $0x31] sm:$0xff]
  %v2951 = vld [vmem:[#allocation3 + $0x39] sm:$0xff]
  %v2952 = vld [vmem:[#allocation3 + $0x49] sm:$0xff]
  %v2953 = vld [vmem:[#allocation3 + $0x51] sm:$0xff]
  %v2954 = vld [vmem:[#allocation3 + $0x61] sm:$0xff]
  %v2955 = vld [vmem:[#allocation3 + $0x69] sm:$0xff]
  %v2956 = vld [vmem:[#allocation3 + $0x79] sm:$0xff]
  %v2957 = vld [vmem:[#allocation3 + $0x81] sm:$0xff]
  %v2958 = vld [vmem:[#allocation3 + $0x91] sm:$0xff]
  %v2959 = vld [vmem:[#allocation3 + $0x99] sm:$0xff]
  %v2960 = vld [vmem:[#allocation3 + $0xa9] sm:$0xff]
  %v2961 = vld [vmem:[#allocation3 + $0xb1] sm:$0xff]
  %s2962 = scalar_lea.vmem %s3, 256
  %v2963 = vld [vmem:[%s2962] sm:$0xff]
  %v2964 = vld [vmem:[%s2962 + $0x8] sm:$0xff]
  %v2965 = vld [vmem:[%s2962 + $0x10] sm:$0xff]
  %v2966 = vld [vmem:[%s2962 + $0x18] sm:$0xff]
  %v2967 = vld [vmem:[%s2962 + $0x20] sm:$0xff]
  %v2968 = vld [vmem:[%s2962 + $0x28] sm:$0xff]
  %v2969 = vld [vmem:[%s2962 + $0x30] sm:$0xff]
  %v2970 = vld [vmem:[%s2962 + $0x38] sm:$0xff]
  %v2971 = vld [vmem:[%s2962 + $0x40] sm:$0xff]
  %v2972 = vld [vmem:[%s2962 + $0x48] sm:$0xff]
  %v2973 = vld [vmem:[%s2962 + $0x50] sm:$0xff]
  %v2974 = vld [vmem:[%s2962 + $0x58] sm:$0xff]
  %v2975 = vld [vmem:[%s2962 + $0x60] sm:$0xff]
  %v2976 = vld [vmem:[%s2962 + $0x68] sm:$0xff]
  %v2977 = vld [vmem:[%s2962 + $0x70] sm:$0xff]
  %v2978 = vld [vmem:[%s2962 + $0x78] sm:$0xff]
  %v2979 = vld [vmem:[%s2962 + $0x80] sm:$0xff]
  %v2980 = vld [vmem:[%s2962 + $0x88] sm:$0xff]
  %v2981 = vld [vmem:[%s2962 + $0x90] sm:$0xff]
  %v2982 = vld [vmem:[%s2962 + $0x98] sm:$0xff]
  %v2983 = vld [vmem:[%s2962 + $0xa0] sm:$0xff]
  %v2984 = vld [vmem:[%s2962 + $0xa8] sm:$0xff]
  %v2985 = vld [vmem:[%s2962 + $0xb0] sm:$0xff]
  %v2986 = vld [vmem:[%s2962 + $0xb8] sm:$0xff]
  %v2987 = vld [vmem:[%s2962 + $0xc0] sm:$0xff]
  %v2988 = vld [vmem:[%s2962 + $0xc8] sm:$0xff]
  %v2989 = vld [vmem:[%s2962 + $0xd0] sm:$0xff]
  %v2990 = vld [vmem:[%s2962 + $0xd8] sm:$0xff]
  %v2991 = vld [vmem:[%s2962 + $0xe0] sm:$0xff]
  %v2992 = vld [vmem:[%s2962 + $0xe8] sm:$0xff]
  %v2993 = vld [vmem:[%s2962 + $0xf0] sm:$0xff]
  %v2994 = vld [vmem:[%s2962 + $0xf8] sm:$0xff]
  %2995 = vmatprep.subr.mxu0 %v2994
  %2996 = vmatpush1.msra.mxu0 %v2993
  %2997 = vmatprep.subr.mxu0 %v2992
  %2998 = vmatpush1.msra.mxu0 %v2991
  %2999 = vmatprep.subr.mxu0 %v2990
  %3000 = vmatpush1.msra.mxu0 %v2989
  %3001 = vmatprep.subr.mxu0 %v2988
  %3002 = vmatpush1.msra.mxu0 %v2987
  %3003 = vmatprep.subr.mxu0 %v2986
  %3004 = vmatpush1.msra.mxu0 %v2985
  %3005 = vmatprep.subr.mxu0 %v2984
  %3006 = vmatpush1.msra.mxu0 %v2983
  %3007 = vmatprep.subr.mxu0 %v2982
  %3008 = vmatpush1.msra.mxu0 %v2981
  %3009 = vmatprep.subr.mxu0 %v2980
  %3010 = vmatpush1.msra.mxu0 %v2979
  %3011 = vmatprep.subr.mxu0 %v2978
  %3012 = vmatpush1.msra.mxu0 %v2977
  %3013 = vmatprep.subr.mxu0 %v2976
  %3014 = vmatpush1.msra.mxu0 %v2975
  %3015 = vmatprep.subr.mxu0 %v2974
  %3016 = vmatpush1.msra.mxu0 %v2973
  %3017 = vmatprep.subr.mxu0 %v2972
  %3018 = vmatpush1.msra.mxu0 %v2971
  %3019 = vmatprep.subr.mxu0 %v2970
  %3020 = vmatpush1.msra.mxu0 %v2969
  %3021 = vmatprep.subr.mxu0 %v2968
  %3022 = vmatpush1.msra.mxu0 %v2967
  %3023 = vmatprep.subr.mxu0 %v2966
  %3024 = vmatpush1.msra.mxu0 %v2965
  %3025 = vmatprep.subr.mxu0 %v2964
  %3026 = vmatpush1.msra.mxu0 %v2963
  %3027 = vmatprep.subr.mxu0 0.0
  %3028 = vmatpush2.msra.mxu0 0.0
  %3029 = vmatprep.subr.mxu0 0.0
  %3030 = vmatpush2.msra.mxu0 0.0
  %3031 = vmatprep.subr.mxu0 0.0
  %3032 = vmatpush2.msra.mxu0 0.0
  %3033 = vmatprep.subr.mxu0 0.0
  %3034 = vmatpush2.msra.mxu0 0.0
  %3035 = vmatprep.subr.mxu0 0.0
  %3036 = vmatpush2.msra.mxu0 0.0
  %3037 = vmatprep.subr.mxu0 0.0
  %3038 = vmatpush2.msra.mxu0 0.0
  %3039 = vmatprep.subr.mxu0 0.0
  %3040 = vmatpush2.msra.mxu0 0.0
  %3041 = vmatprep.subr.mxu0 0.0
  %3042 = vmatpush2.msra.mxu0 0.0
  %3043 = vmatprep.subr.mxu0 0.0
  %3044 = vmatpush2.msra.mxu0 0.0
  %3045 = vmatprep.subr.mxu0 0.0
  %3046 = vmatpush2.msra.mxu0 0.0
  %3047 = vmatprep.subr.mxu0 0.0
  %3048 = vmatpush2.msra.mxu0 0.0
  %3049 = vmatprep.subr.mxu0 0.0
  %3050 = vmatpush2.msra.mxu0 0.0
  %3051 = vmatprep.subr.mxu0 0.0
  %3052 = vmatpush2.msra.mxu0 0.0
  %3053 = vmatprep.subr.mxu0 0.0
  %3054 = vmatpush2.msra.mxu0 0.0
  %3055 = vmatprep.subr.mxu0 0.0
  %3056 = vmatpush2.msra.mxu0 0.0
  %3057 = vmatprep.subr.mxu0 0.0
  %3058 = vmatpush2.msra.mxu0 0.0
  %3059 = vmatprep.mubr.f32.mxu0 0.0
  %3060 = vmatmul.mubr.f32.gmra.mxu0 %v2946
  %v3061 = vpop.f32.mrf.mxu0
  %v3062 = vadd.f32 0.0, %v3061
  %v3063 = vpop.f32.mrf.mxu0
  %v3064 = vadd.f32 0.0, %v3063
  %3065 = vmatprep.mubr.f32.mxu0 0.0
  %3066 = vmatmul.mubr.f32.gmra.mxu0 %v2947
  %v3067 = vpop.f32.mrf.mxu0
  %v3068 = vadd.f32 0.0, %v3067
  %v3069 = vpop.f32.mrf.mxu0
  %v3070 = vadd.f32 0.0, %v3069
  %3071 = vmatprep.mubr.f32.mxu0 0.0
  %3072 = vmatmul.mubr.f32.gmra.mxu0 %v2948
  %v3073 = vpop.f32.mrf.mxu0
  %v3074 = vadd.f32 0.0, %v3073
  %v3075 = vpop.f32.mrf.mxu0
  %v3076 = vadd.f32 0.0, %v3075
  %3077 = vmatprep.mubr.f32.mxu0 0.0
  %3078 = vmatmul.mubr.f32.gmra.mxu0 %v2949
  %v3079 = vpop.f32.mrf.mxu0
  %v3080 = vadd.f32 0.0, %v3079
  %v3081 = vpop.f32.mrf.mxu0
  %v3082 = vadd.f32 0.0, %v3081
  %3083 = vmatprep.mubr.f32.mxu0 0.0
  %3084 = vmatmul.mubr.f32.gmra.mxu0 %v2950
  %v3085 = vpop.f32.mrf.mxu0
  %v3086 = vadd.f32 0.0, %v3085
  %v3087 = vpop.f32.mrf.mxu0
  %v3088 = vadd.f32 0.0, %v3087
  %3089 = vmatprep.mubr.f32.mxu0 0.0
  %3090 = vmatmul.mubr.f32.gmra.mxu0 %v2951
  %v3091 = vpop.f32.mrf.mxu0
  %v3092 = vadd.f32 0.0, %v3091
  %v3093 = vpop.f32.mrf.mxu0
  %v3094 = vadd.f32 0.0, %v3093
  %3095 = vmatprep.mubr.f32.mxu0 0.0
  %3096 = vmatmul.mubr.f32.gmra.mxu0 %v2952
  %v3097 = vpop.f32.mrf.mxu0
  %v3098 = vadd.f32 0.0, %v3097
  %v3099 = vpop.f32.mrf.mxu0
  %v3100 = vadd.f32 0.0, %v3099
  %3101 = vmatprep.mubr.f32.mxu0 0.0
  %3102 = vmatmul.mubr.f32.gmra.mxu0 %v2953
  %v3103 = vpop.f32.mrf.mxu0
  %v3104 = vadd.f32 0.0, %v3103
  %v3105 = vpop.f32.mrf.mxu0
  %v3106 = vadd.f32 0.0, %v3105
  %3107 = vmatprep.mubr.f32.mxu0 0.0
  %3108 = vmatmul.mubr.f32.gmra.mxu0 %v2954
  %v3109 = vpop.f32.mrf.mxu0
  %v3110 = vadd.f32 0.0, %v3109
  %v3111 = vpop.f32.mrf.mxu0
  %v3112 = vadd.f32 0.0, %v3111
  %3113 = vmatprep.mubr.f32.mxu0 0.0
  %3114 = vmatmul.mubr.f32.gmra.mxu0 %v2955
  %v3115 = vpop.f32.mrf.mxu0
  %v3116 = vadd.f32 0.0, %v3115
  %v3117 = vpop.f32.mrf.mxu0
  %v3118 = vadd.f32 0.0, %v3117
  %3119 = vmatprep.mubr.f32.mxu0 0.0
  %3120 = vmatmul.mubr.f32.gmra.mxu0 %v2956
  %v3121 = vpop.f32.mrf.mxu0
  %v3122 = vadd.f32 0.0, %v3121
  %v3123 = vpop.f32.mrf.mxu0
  %v3124 = vadd.f32 0.0, %v3123
  %3125 = vmatprep.mubr.f32.mxu0 0.0
  %3126 = vmatmul.mubr.f32.gmra.mxu0 %v2957
  %v3127 = vpop.f32.mrf.mxu0
  %v3128 = vadd.f32 0.0, %v3127
  %v3129 = vpop.f32.mrf.mxu0
  %v3130 = vadd.f32 0.0, %v3129
  %3131 = vmatprep.mubr.f32.mxu0 0.0
  %3132 = vmatmul.mubr.f32.gmra.mxu0 %v2958
  %v3133 = vpop.f32.mrf.mxu0
  %v3134 = vadd.f32 0.0, %v3133
  %v3135 = vpop.f32.mrf.mxu0
  %v3136 = vadd.f32 0.0, %v3135
  %3137 = vmatprep.mubr.f32.mxu0 0.0
  %3138 = vmatmul.mubr.f32.gmra.mxu0 %v2959
  %v3139 = vpop.f32.mrf.mxu0
  %v3140 = vadd.f32 0.0, %v3139
  %v3141 = vpop.f32.mrf.mxu0
  %v3142 = vadd.f32 0.0, %v3141
  %3143 = vmatprep.mubr.f32.mxu0 0.0
  %3144 = vmatmul.mubr.f32.gmra.mxu0 %v2960
  %v3145 = vpop.f32.mrf.mxu0
  %v3146 = vadd.f32 0.0, %v3145
  %v3147 = vpop.f32.mrf.mxu0
  %v3148 = vadd.f32 0.0, %v3147
  %3149 = vmatprep.mubr.f32.mxu0 0.0
  %3150 = vmatmul.mubr.f32.gmra.mxu0 %v2961
  %v3151 = vpop.f32.mrf.mxu0
  %v3152 = vadd.f32 0.0, %v3151
  %v3153 = vpop.f32.mrf.mxu0
  %v3154 = vadd.f32 0.0, %v3153
  %3155 = vdwg.mxu0
  %3156 = vmatprep.subr.mxu0 %v2945
  %3157 = vmatpush1.msra.mxu0 %v2944
  %3158 = vmatprep.subr.mxu0 %v2943
  %3159 = vmatpush1.msra.mxu0 %v2942
  %3160 = vmatprep.subr.mxu0 %v2941
  %3161 = vmatpush1.msra.mxu0 %v2940
  %3162 = vmatprep.subr.mxu0 %v2939
  %3163 = vmatpush1.msra.mxu0 %v2938
  %3164 = vmatprep.subr.mxu0 %v2937
  %3165 = vmatpush1.msra.mxu0 %v2936
  %3166 = vmatprep.subr.mxu0 %v2935
  %3167 = vmatpush1.msra.mxu0 %v2934
  %3168 = vmatprep.subr.mxu0 %v2933
  %3169 = vmatpush1.msra.mxu0 %v2932
  %3170 = vmatprep.subr.mxu0 %v2931
  %3171 = vmatpush1.msra.mxu0 %v2930
  %3172 = vmatprep.subr.mxu0 %v2929
  %3173 = vmatpush1.msra.mxu0 %v2928
  %3174 = vmatprep.subr.mxu0 %v2927
  %3175 = vmatpush1.msra.mxu0 %v2926
  %3176 = vmatprep.subr.mxu0 %v2925
  %3177 = vmatpush1.msra.mxu0 %v2924
  %3178 = vmatprep.subr.mxu0 %v2923
  %3179 = vmatpush1.msra.mxu0 %v2922
  %3180 = vmatprep.subr.mxu0 %v2921
  %3181 = vmatpush1.msra.mxu0 %v2920
  %3182 = vmatprep.subr.mxu0 %v2919
  %3183 = vmatpush1.msra.mxu0 %v2918
  %3184 = vmatprep.subr.mxu0 %v2917
  %3185 = vmatpush1.msra.mxu0 %v2916
  %3186 = vmatprep.subr.mxu0 %v2915
  %3187 = vmatpush1.msra.mxu0 %v2914
  %3188 = vmatprep.subr.mxu0 0.0
  %3189 = vmatpush2.msra.mxu0 0.0
  %3190 = vmatprep.subr.mxu0 0.0
  %3191 = vmatpush2.msra.mxu0 0.0
  %3192 = vmatprep.subr.mxu0 0.0
  %3193 = vmatpush2.msra.mxu0 0.0
  %3194 = vmatprep.subr.mxu0 0.0
  %3195 = vmatpush2.msra.mxu0 0.0
  %3196 = vmatprep.subr.mxu0 0.0
  %3197 = vmatpush2.msra.mxu0 0.0
  %3198 = vmatprep.subr.mxu0 0.0
  %3199 = vmatpush2.msra.mxu0 0.0
  %3200 = vmatprep.subr.mxu0 0.0
  %3201 = vmatpush2.msra.mxu0 0.0
  %3202 = vmatprep.subr.mxu0 0.0
  %3203 = vmatpush2.msra.mxu0 0.0
  %3204 = vmatprep.subr.mxu0 0.0
  %3205 = vmatpush2.msra.mxu0 0.0
  %3206 = vmatprep.subr.mxu0 0.0
  %3207 = vmatpush2.msra.mxu0 0.0
  %3208 = vmatprep.subr.mxu0 0.0
  %3209 = vmatpush2.msra.mxu0 0.0
  %3210 = vmatprep.subr.mxu0 0.0
  %3211 = vmatpush2.msra.mxu0 0.0
  %3212 = vmatprep.subr.mxu0 0.0
  %3213 = vmatpush2.msra.mxu0 0.0
  %3214 = vmatprep.subr.mxu0 0.0
  %3215 = vmatpush2.msra.mxu0 0.0
  %3216 = vmatprep.subr.mxu0 0.0
  %3217 = vmatpush2.msra.mxu0 0.0
  %3218 = vmatprep.subr.mxu0 0.0
  %3219 = vmatpush2.msra.mxu0 0.0
  %3220 = vmatprep.mubr.f32.mxu0 0.0
  %3221 = vmatmul.mubr.f32.gmra.mxu0 %v2898
  %v3222 = vpop.f32.mrf.mxu0
  %v3223 = vadd.f32 %v3062, %v3222
  %v3224 = vpop.f32.mrf.mxu0
  %v3225 = vadd.f32 %v3064, %v3224
  %3226 = vmatprep.mubr.f32.mxu0 0.0
  %3227 = vmatmul.mubr.f32.gmra.mxu0 %v2899
  %v3228 = vpop.f32.mrf.mxu0
  %v3229 = vadd.f32 %v3068, %v3228
  %v3230 = vpop.f32.mrf.mxu0
  %v3231 = vadd.f32 %v3070, %v3230
  %3232 = vmatprep.mubr.f32.mxu0 0.0
  %3233 = vmatmul.mubr.f32.gmra.mxu0 %v2900
  %v3234 = vpop.f32.mrf.mxu0
  %v3235 = vadd.f32 %v3074, %v3234
  %v3236 = vpop.f32.mrf.mxu0
  %v3237 = vadd.f32 %v3076, %v3236
  %3238 = vmatprep.mubr.f32.mxu0 0.0
  %3239 = vmatmul.mubr.f32.gmra.mxu0 %v2901
  %v3240 = vpop.f32.mrf.mxu0
  %v3241 = vadd.f32 %v3080, %v3240
  %v3242 = vpop.f32.mrf.mxu0
  %v3243 = vadd.f32 %v3082, %v3242
  %3244 = vmatprep.mubr.f32.mxu0 0.0
  %3245 = vmatmul.mubr.f32.gmra.mxu0 %v2902
  %v3246 = vpop.f32.mrf.mxu0
  %v3247 = vadd.f32 %v3086, %v3246
  %v3248 = vpop.f32.mrf.mxu0
  %v3249 = vadd.f32 %v3088, %v3248
  %3250 = vmatprep.mubr.f32.mxu0 0.0
  %3251 = vmatmul.mubr.f32.gmra.mxu0 %v2903
  %v3252 = vpop.f32.mrf.mxu0
  %v3253 = vadd.f32 %v3092, %v3252
  %v3254 = vpop.f32.mrf.mxu0
  %v3255 = vadd.f32 %v3094, %v3254
  %3256 = vmatprep.mubr.f32.mxu0 0.0
  %3257 = vmatmul.mubr.f32.gmra.mxu0 %v2904
  %v3258 = vpop.f32.mrf.mxu0
  %v3259 = vadd.f32 %v3098, %v3258
  %v3260 = vpop.f32.mrf.mxu0
  %v3261 = vadd.f32 %v3100, %v3260
  %3262 = vmatprep.mubr.f32.mxu0 0.0
  %3263 = vmatmul.mubr.f32.gmra.mxu0 %v2905
  %v3264 = vpop.f32.mrf.mxu0
  %v3265 = vadd.f32 %v3104, %v3264
  %v3266 = vpop.f32.mrf.mxu0
  %v3267 = vadd.f32 %v3106, %v3266
  %3268 = vmatprep.mubr.f32.mxu0 0.0
  %3269 = vmatmul.mubr.f32.gmra.mxu0 %v2906
  %v3270 = vpop.f32.mrf.mxu0
  %v3271 = vadd.f32 %v3110, %v3270
  %v3272 = vpop.f32.mrf.mxu0
  %v3273 = vadd.f32 %v3112, %v3272
  %3274 = vmatprep.mubr.f32.mxu0 0.0
  %3275 = vmatmul.mubr.f32.gmra.mxu0 %v2907
  %v3276 = vpop.f32.mrf.mxu0
  %v3277 = vadd.f32 %v3116, %v3276
  %v3278 = vpop.f32.mrf.mxu0
  %v3279 = vadd.f32 %v3118, %v3278
  %3280 = vmatprep.mubr.f32.mxu0 0.0
  %3281 = vmatmul.mubr.f32.gmra.mxu0 %v2908
  %v3282 = vpop.f32.mrf.mxu0
  %v3283 = vadd.f32 %v3122, %v3282
  %v3284 = vpop.f32.mrf.mxu0
  %v3285 = vadd.f32 %v3124, %v3284
  %3286 = vmatprep.mubr.f32.mxu0 0.0
  %3287 = vmatmul.mubr.f32.gmra.mxu0 %v2909
  %v3288 = vpop.f32.mrf.mxu0
  %v3289 = vadd.f32 %v3128, %v3288
  %v3290 = vpop.f32.mrf.mxu0
  %v3291 = vadd.f32 %v3130, %v3290
  %3292 = vmatprep.mubr.f32.mxu0 0.0
  %3293 = vmatmul.mubr.f32.gmra.mxu0 %v2910
  %v3294 = vpop.f32.mrf.mxu0
  %v3295 = vadd.f32 %v3134, %v3294
  %v3296 = vpop.f32.mrf.mxu0
  %v3297 = vadd.f32 %v3136, %v3296
  %3298 = vmatprep.mubr.f32.mxu0 0.0
  %3299 = vmatmul.mubr.f32.gmra.mxu0 %v2911
  %v3300 = vpop.f32.mrf.mxu0
  %v3301 = vadd.f32 %v3140, %v3300
  %v3302 = vpop.f32.mrf.mxu0
  %v3303 = vadd.f32 %v3142, %v3302
  %3304 = vmatprep.mubr.f32.mxu0 0.0
  %3305 = vmatmul.mubr.f32.gmra.mxu0 %v2912
  %v3306 = vpop.f32.mrf.mxu0
  %v3307 = vadd.f32 %v3146, %v3306
  %v3308 = vpop.f32.mrf.mxu0
  %v3309 = vadd.f32 %v3148, %v3308
  %3310 = vmatprep.mubr.f32.mxu0 0.0
  %3311 = vmatmul.mubr.f32.gmra.mxu0 %v2913
  %v3312 = vpop.f32.mrf.mxu0
  %v3313 = vadd.f32 %v3152, %v3312
  %v3314 = vpop.f32.mrf.mxu0
  %v3315 = vadd.f32 %v3154, %v3314
  %3316 = vdwg.mxu0
  %v3317 = vld [vmem:[#allocation3 + $0x2] sm:$0xff]
  %v3318 = vld [vmem:[#allocation3 + $0xa] sm:$0xff]
  %v3319 = vld [vmem:[#allocation3 + $0x1a] sm:$0xff]
  %v3320 = vld [vmem:[#allocation3 + $0x22] sm:$0xff]
  %v3321 = vld [vmem:[#allocation3 + $0x32] sm:$0xff]
  %v3322 = vld [vmem:[#allocation3 + $0x3a] sm:$0xff]
  %v3323 = vld [vmem:[#allocation3 + $0x4a] sm:$0xff]
  %v3324 = vld [vmem:[#allocation3 + $0x52] sm:$0xff]
  %v3325 = vld [vmem:[#allocation3 + $0x62] sm:$0xff]
  %v3326 = vld [vmem:[#allocation3 + $0x6a] sm:$0xff]
  %v3327 = vld [vmem:[#allocation3 + $0x7a] sm:$0xff]
  %v3328 = vld [vmem:[#allocation3 + $0x82] sm:$0xff]
  %v3329 = vld [vmem:[#allocation3 + $0x92] sm:$0xff]
  %v3330 = vld [vmem:[#allocation3 + $0x9a] sm:$0xff]
  %v3331 = vld [vmem:[#allocation3 + $0xaa] sm:$0xff]
  %v3332 = vld [vmem:[#allocation3 + $0xb2] sm:$0xff]
  %s3333 = scalar_lea.vmem %s3, 512
  %v3334 = vld [vmem:[%s3333] sm:$0xff]
  %v3335 = vld [vmem:[%s3333 + $0x8] sm:$0xff]
  %v3336 = vld [vmem:[%s3333 + $0x10] sm:$0xff]
  %v3337 = vld [vmem:[%s3333 + $0x18] sm:$0xff]
  %v3338 = vld [vmem:[%s3333 + $0x20] sm:$0xff]
  %v3339 = vld [vmem:[%s3333 + $0x28] sm:$0xff]
  %v3340 = vld [vmem:[%s3333 + $0x30] sm:$0xff]
  %v3341 = vld [vmem:[%s3333 + $0x38] sm:$0xff]
  %v3342 = vld [vmem:[%s3333 + $0x40] sm:$0xff]
  %v3343 = vld [vmem:[%s3333 + $0x48] sm:$0xff]
  %v3344 = vld [vmem:[%s3333 + $0x50] sm:$0xff]
  %v3345 = vld [vmem:[%s3333 + $0x58] sm:$0xff]
  %v3346 = vld [vmem:[%s3333 + $0x60] sm:$0xff]
  %v3347 = vld [vmem:[%s3333 + $0x68] sm:$0xff]
  %v3348 = vld [vmem:[%s3333 + $0x70] sm:$0xff]
  %v3349 = vld [vmem:[%s3333 + $0x78] sm:$0xff]
  %v3350 = vld [vmem:[%s3333 + $0x80] sm:$0xff]
  %v3351 = vld [vmem:[%s3333 + $0x88] sm:$0xff]
  %v3352 = vld [vmem:[%s3333 + $0x90] sm:$0xff]
  %v3353 = vld [vmem:[%s3333 + $0x98] sm:$0xff]
  %v3354 = vld [vmem:[%s3333 + $0xa0] sm:$0xff]
  %v3355 = vld [vmem:[%s3333 + $0xa8] sm:$0xff]
  %v3356 = vld [vmem:[%s3333 + $0xb0] sm:$0xff]
  %v3357 = vld [vmem:[%s3333 + $0xb8] sm:$0xff]
  %v3358 = vld [vmem:[%s3333 + $0xc0] sm:$0xff]
  %v3359 = vld [vmem:[%s3333 + $0xc8] sm:$0xff]
  %v3360 = vld [vmem:[%s3333 + $0xd0] sm:$0xff]
  %v3361 = vld [vmem:[%s3333 + $0xd8] sm:$0xff]
  %v3362 = vld [vmem:[%s3333 + $0xe0] sm:$0xff]
  %v3363 = vld [vmem:[%s3333 + $0xe8] sm:$0xff]
  %v3364 = vld [vmem:[%s3333 + $0xf0] sm:$0xff]
  %v3365 = vld [vmem:[%s3333 + $0xf8] sm:$0xff]
  %3366 = vmatprep.subr.mxu0 %v3365
  %3367 = vmatpush1.msra.mxu0 %v3364
  %3368 = vmatprep.subr.mxu0 %v3363
  %3369 = vmatpush1.msra.mxu0 %v3362
  %3370 = vmatprep.subr.mxu0 %v3361
  %3371 = vmatpush1.msra.mxu0 %v3360
  %3372 = vmatprep.subr.mxu0 %v3359
  %3373 = vmatpush1.msra.mxu0 %v3358
  %3374 = vmatprep.subr.mxu0 %v3357
  %3375 = vmatpush1.msra.mxu0 %v3356
  %3376 = vmatprep.subr.mxu0 %v3355
  %3377 = vmatpush1.msra.mxu0 %v3354
  %3378 = vmatprep.subr.mxu0 %v3353
  %3379 = vmatpush1.msra.mxu0 %v3352
  %3380 = vmatprep.subr.mxu0 %v3351
  %3381 = vmatpush1.msra.mxu0 %v3350
  %3382 = vmatprep.subr.mxu0 %v3349
  %3383 = vmatpush1.msra.mxu0 %v3348
  %3384 = vmatprep.subr.mxu0 %v3347
  %3385 = vmatpush1.msra.mxu0 %v3346
  %3386 = vmatprep.subr.mxu0 %v3345
  %3387 = vmatpush1.msra.mxu0 %v3344
  %3388 = vmatprep.subr.mxu0 %v3343
  %3389 = vmatpush1.msra.mxu0 %v3342
  %3390 = vmatprep.subr.mxu0 %v3341
  %3391 = vmatpush1.msra.mxu0 %v3340
  %3392 = vmatprep.subr.mxu0 %v3339
  %3393 = vmatpush1.msra.mxu0 %v3338
  %3394 = vmatprep.subr.mxu0 %v3337
  %3395 = vmatpush1.msra.mxu0 %v3336
  %3396 = vmatprep.subr.mxu0 %v3335
  %3397 = vmatpush1.msra.mxu0 %v3334
  %3398 = vmatprep.subr.mxu0 0.0
  %3399 = vmatpush2.msra.mxu0 0.0
  %3400 = vmatprep.subr.mxu0 0.0
  %3401 = vmatpush2.msra.mxu0 0.0
  %3402 = vmatprep.subr.mxu0 0.0
  %3403 = vmatpush2.msra.mxu0 0.0
  %3404 = vmatprep.subr.mxu0 0.0
  %3405 = vmatpush2.msra.mxu0 0.0
  %3406 = vmatprep.subr.mxu0 0.0
  %3407 = vmatpush2.msra.mxu0 0.0
  %3408 = vmatprep.subr.mxu0 0.0
  %3409 = vmatpush2.msra.mxu0 0.0
  %3410 = vmatprep.subr.mxu0 0.0
  %3411 = vmatpush2.msra.mxu0 0.0
  %3412 = vmatprep.subr.mxu0 0.0
  %3413 = vmatpush2.msra.mxu0 0.0
  %3414 = vmatprep.subr.mxu0 0.0
  %3415 = vmatpush2.msra.mxu0 0.0
  %3416 = vmatprep.subr.mxu0 0.0
  %3417 = vmatpush2.msra.mxu0 0.0
  %3418 = vmatprep.subr.mxu0 0.0
  %3419 = vmatpush2.msra.mxu0 0.0
  %3420 = vmatprep.subr.mxu0 0.0
  %3421 = vmatpush2.msra.mxu0 0.0
  %3422 = vmatprep.subr.mxu0 0.0
  %3423 = vmatpush2.msra.mxu0 0.0
  %3424 = vmatprep.subr.mxu0 0.0
  %3425 = vmatpush2.msra.mxu0 0.0
  %3426 = vmatprep.subr.mxu0 0.0
  %3427 = vmatpush2.msra.mxu0 0.0
  %3428 = vmatprep.subr.mxu0 0.0
  %3429 = vmatpush2.msra.mxu0 0.0
  %3430 = vmatprep.mubr.f32.mxu0 0.0
  %3431 = vmatmul.mubr.f32.gmra.mxu0 %v3317
  %v3432 = vpop.f32.mrf.mxu0
  %v3433 = vadd.f32 0.0, %v3432
  %v3434 = vpop.f32.mrf.mxu0
  %v3435 = vadd.f32 0.0, %v3434
  %3436 = vmatprep.mubr.f32.mxu0 0.0
  %3437 = vmatmul.mubr.f32.gmra.mxu0 %v3318
  %v3438 = vpop.f32.mrf.mxu0
  %v3439 = vadd.f32 0.0, %v3438
  %v3440 = vpop.f32.mrf.mxu0
  %v3441 = vadd.f32 0.0, %v3440
  %3442 = vmatprep.mubr.f32.mxu0 0.0
  %3443 = vmatmul.mubr.f32.gmra.mxu0 %v3319
  %v3444 = vpop.f32.mrf.mxu0
  %v3445 = vadd.f32 0.0, %v3444
  %v3446 = vpop.f32.mrf.mxu0
  %v3447 = vadd.f32 0.0, %v3446
  %3448 = vmatprep.mubr.f32.mxu0 0.0
  %3449 = vmatmul.mubr.f32.gmra.mxu0 %v3320
  %v3450 = vpop.f32.mrf.mxu0
  %v3451 = vadd.f32 0.0, %v3450
  %v3452 = vpop.f32.mrf.mxu0
  %v3453 = vadd.f32 0.0, %v3452
  %3454 = vmatprep.mubr.f32.mxu0 0.0
  %3455 = vmatmul.mubr.f32.gmra.mxu0 %v3321
  %v3456 = vpop.f32.mrf.mxu0
  %v3457 = vadd.f32 0.0, %v3456
  %v3458 = vpop.f32.mrf.mxu0
  %v3459 = vadd.f32 0.0, %v3458
  %3460 = vmatprep.mubr.f32.mxu0 0.0
  %3461 = vmatmul.mubr.f32.gmra.mxu0 %v3322
  %v3462 = vpop.f32.mrf.mxu0
  %v3463 = vadd.f32 0.0, %v3462
  %v3464 = vpop.f32.mrf.mxu0
  %v3465 = vadd.f32 0.0, %v3464
  %3466 = vmatprep.mubr.f32.mxu0 0.0
  %3467 = vmatmul.mubr.f32.gmra.mxu0 %v3323
  %v3468 = vpop.f32.mrf.mxu0
  %v3469 = vadd.f32 0.0, %v3468
  %v3470 = vpop.f32.mrf.mxu0
  %v3471 = vadd.f32 0.0, %v3470
  %3472 = vmatprep.mubr.f32.mxu0 0.0
  %3473 = vmatmul.mubr.f32.gmra.mxu0 %v3324
  %v3474 = vpop.f32.mrf.mxu0
  %v3475 = vadd.f32 0.0, %v3474
  %v3476 = vpop.f32.mrf.mxu0
  %v3477 = vadd.f32 0.0, %v3476
  %3478 = vmatprep.mubr.f32.mxu0 0.0
  %3479 = vmatmul.mubr.f32.gmra.mxu0 %v3325
  %v3480 = vpop.f32.mrf.mxu0
  %v3481 = vadd.f32 0.0, %v3480
  %v3482 = vpop.f32.mrf.mxu0
  %v3483 = vadd.f32 0.0, %v3482
  %3484 = vmatprep.mubr.f32.mxu0 0.0
  %3485 = vmatmul.mubr.f32.gmra.mxu0 %v3326
  %v3486 = vpop.f32.mrf.mxu0
  %v3487 = vadd.f32 0.0, %v3486
  %v3488 = vpop.f32.mrf.mxu0
  %v3489 = vadd.f32 0.0, %v3488
  %3490 = vmatprep.mubr.f32.mxu0 0.0
  %3491 = vmatmul.mubr.f32.gmra.mxu0 %v3327
  %v3492 = vpop.f32.mrf.mxu0
  %v3493 = vadd.f32 0.0, %v3492
  %v3494 = vpop.f32.mrf.mxu0
  %v3495 = vadd.f32 0.0, %v3494
  %3496 = vmatprep.mubr.f32.mxu0 0.0
  %3497 = vmatmul.mubr.f32.gmra.mxu0 %v3328
  %v3498 = vpop.f32.mrf.mxu0
  %v3499 = vadd.f32 0.0, %v3498
  %v3500 = vpop.f32.mrf.mxu0
  %v3501 = vadd.f32 0.0, %v3500
  %3502 = vmatprep.mubr.f32.mxu0 0.0
  %3503 = vmatmul.mubr.f32.gmra.mxu0 %v3329
  %v3504 = vpop.f32.mrf.mxu0
  %v3505 = vadd.f32 0.0, %v3504
  %v3506 = vpop.f32.mrf.mxu0
  %v3507 = vadd.f32 0.0, %v3506
  %3508 = vmatprep.mubr.f32.mxu0 0.0
  %3509 = vmatmul.mubr.f32.gmra.mxu0 %v3330
  %v3510 = vpop.f32.mrf.mxu0
  %v3511 = vadd.f32 0.0, %v3510
  %v3512 = vpop.f32.mrf.mxu0
  %v3513 = vadd.f32 0.0, %v3512
  %3514 = vmatprep.mubr.f32.mxu0 0.0
  %3515 = vmatmul.mubr.f32.gmra.mxu0 %v3331
  %v3516 = vpop.f32.mrf.mxu0
  %v3517 = vadd.f32 0.0, %v3516
  %v3518 = vpop.f32.mrf.mxu0
  %v3519 = vadd.f32 0.0, %v3518
  %3520 = vmatprep.mubr.f32.mxu0 0.0
  %3521 = vmatmul.mubr.f32.gmra.mxu0 %v3332
  %v3522 = vpop.f32.mrf.mxu0
  %v3523 = vadd.f32 0.0, %v3522
  %v3524 = vpop.f32.mrf.mxu0
  %v3525 = vadd.f32 0.0, %v3524
  %3526 = vdwg.mxu0
  %v3527 = vadd.f32 %v3223, %v3433
  %v3528 = vadd.f32 %v3225, %v3435
  %v3529 = vadd.f32 %v3229, %v3439
  %v3530 = vadd.f32 %v3231, %v3441
  %v3531 = vadd.f32 %v3235, %v3445
  %v3532 = vadd.f32 %v3237, %v3447
  %v3533 = vadd.f32 %v3241, %v3451
  %v3534 = vadd.f32 %v3243, %v3453
  %v3535 = vadd.f32 %v3247, %v3457
  %v3536 = vadd.f32 %v3249, %v3459
  %v3537 = vadd.f32 %v3253, %v3463
  %v3538 = vadd.f32 %v3255, %v3465
  %v3539 = vadd.f32 %v3259, %v3469
  %v3540 = vadd.f32 %v3261, %v3471
  %v3541 = vadd.f32 %v3265, %v3475
  %v3542 = vadd.f32 %v3267, %v3477
  %v3543 = vadd.f32 %v3271, %v3481
  %v3544 = vadd.f32 %v3273, %v3483
  %v3545 = vadd.f32 %v3277, %v3487
  %v3546 = vadd.f32 %v3279, %v3489
  %v3547 = vadd.f32 %v3283, %v3493
  %v3548 = vadd.f32 %v3285, %v3495
  %v3549 = vadd.f32 %v3289, %v3499
  %v3550 = vadd.f32 %v3291, %v3501
  %v3551 = vadd.f32 %v3295, %v3505
  %v3552 = vadd.f32 %v3297, %v3507
  %v3553 = vadd.f32 %v3301, %v3511
  %v3554 = vadd.f32 %v3303, %v3513
  %v3555 = vadd.f32 %v3307, %v3517
  %v3556 = vadd.f32 %v3309, %v3519
  %v3557 = vadd.f32 %v3313, %v3523
  %v3558 = vadd.f32 %v3315, %v3525
  %v3559 = vld [vmem:[%s4] sm:$0x3]
  %v3561 = vlaneseq
  %v3562 = vshrl.u32 %v3561, 7
  %v3563 = vsub.s32 0, %v3562
  %v3564 = vrot.slane %v3559, %v3563
  %v3565 = vlaneseq
  %v3566 = vshrl.u32 %v3565, 7
  %v3567 = vsub.s32 1, %v3566
  %v3568 = vrot.slane %v3559, %v3567
  %v3571 = vadd.f32 %v3527, %v3564
  %v3572 = vadd.f32 %v3528, %v3568
  %v3573 = vadd.f32 %v3529, %v3564
  %v3574 = vadd.f32 %v3530, %v3568
  %v3575 = vadd.f32 %v3531, %v3564
  %v3576 = vadd.f32 %v3532, %v3568
  %v3577 = vadd.f32 %v3533, %v3564
  %v3578 = vadd.f32 %v3534, %v3568
  %v3579 = vadd.f32 %v3535, %v3564
  %v3580 = vadd.f32 %v3536, %v3568
  %v3581 = vadd.f32 %v3537, %v3564
  %v3582 = vadd.f32 %v3538, %v3568
  %v3583 = vadd.f32 %v3539, %v3564
  %v3584 = vadd.f32 %v3540, %v3568
  %v3585 = vadd.f32 %v3541, %v3564
  %v3586 = vadd.f32 %v3542, %v3568
  %v3587 = vadd.f32 %v3543, %v3564
  %v3588 = vadd.f32 %v3544, %v3568
  %v3589 = vadd.f32 %v3545, %v3564
  %v3590 = vadd.f32 %v3546, %v3568
  %v3591 = vadd.f32 %v3547, %v3564
  %v3592 = vadd.f32 %v3548, %v3568
  %v3593 = vadd.f32 %v3549, %v3564
  %v3594 = vadd.f32 %v3550, %v3568
  %v3595 = vadd.f32 %v3551, %v3564
  %v3596 = vadd.f32 %v3552, %v3568
  %v3597 = vadd.f32 %v3553, %v3564
  %v3598 = vadd.f32 %v3554, %v3568
  %v3599 = vadd.f32 %v3555, %v3564
  %v3600 = vadd.f32 %v3556, %v3568
  %v3601 = vadd.f32 %v3557, %v3564
  %v3602 = vadd.f32 %v3558, %v3568
  %v3603 = vmax.f32 %v3571, 0.0
  %v3604 = vmax.f32 %v3572, 0.0
  %v3605 = vmax.f32 %v3573, 0.0
  %v3606 = vmax.f32 %v3574, 0.0
  %v3607 = vmax.f32 %v3575, 0.0
  %v3608 = vmax.f32 %v3576, 0.0
  %v3609 = vmax.f32 %v3577, 0.0
  %v3610 = vmax.f32 %v3578, 0.0
  %v3611 = vmax.f32 %v3579, 0.0
  %v3612 = vmax.f32 %v3580, 0.0
  %v3613 = vmax.f32 %v3581, 0.0
  %v3614 = vmax.f32 %v3582, 0.0
  %v3615 = vmax.f32 %v3583, 0.0
  %v3616 = vmax.f32 %v3584, 0.0
  %v3617 = vmax.f32 %v3585, 0.0
  %v3618 = vmax.f32 %v3586, 0.0
  %v3619 = vmax.f32 %v3587, 0.0
  %v3620 = vmax.f32 %v3588, 0.0
  %v3621 = vmax.f32 %v3589, 0.0
  %v3622 = vmax.f32 %v3590, 0.0
  %v3623 = vmax.f32 %v3591, 0.0
  %v3624 = vmax.f32 %v3592, 0.0
  %v3625 = vmax.f32 %v3593, 0.0
  %v3626 = vmax.f32 %v3594, 0.0
  %v3627 = vmax.f32 %v3595, 0.0
  %v3628 = vmax.f32 %v3596, 0.0
  %v3629 = vmax.f32 %v3597, 0.0
  %v3630 = vmax.f32 %v3598, 0.0
  %v3631 = vmax.f32 %v3599, 0.0
  %v3632 = vmax.f32 %v3600, 0.0
  %v3633 = vmax.f32 %v3601, 0.0
  %v3634 = vmax.f32 %v3602, 0.0
  %v3667 = vcombine.low %v3603, %v3604
  %v3668 = vcombine.high %v3603, %v3604
  %v3669 = vcombine.low %v3605, %v3606
  %v3670 = vcombine.high %v3605, %v3606
  %v3671 = vcombine.low %v3607, %v3608
  %v3672 = vcombine.high %v3607, %v3608
  %v3673 = vcombine.low %v3609, %v3610
  %v3674 = vcombine.high %v3609, %v3610
  %v3675 = vcombine.low %v3611, %v3612
  %v3676 = vcombine.high %v3611, %v3612
  %v3677 = vcombine.low %v3613, %v3614
  %v3678 = vcombine.high %v3613, %v3614
  %v3679 = vcombine.low %v3615, %v3616
  %v3680 = vcombine.high %v3615, %v3616
  %v3681 = vcombine.low %v3617, %v3618
  %v3682 = vcombine.high %v3617, %v3618
  %v3683 = vcombine.low %v3619, %v3620
  %v3684 = vcombine.high %v3619, %v3620
  %v3685 = vcombine.low %v3621, %v3622
  %v3686 = vcombine.high %v3621, %v3622
  %v3687 = vcombine.low %v3623, %v3624
  %v3688 = vcombine.high %v3623, %v3624
  %v3689 = vcombine.low %v3625, %v3626
  %v3690 = vcombine.high %v3625, %v3626
  %v3691 = vcombine.low %v3627, %v3628
  %v3692 = vcombine.high %v3627, %v3628
  %v3693 = vcombine.low %v3629, %v3630
  %v3694 = vcombine.high %v3629, %v3630
  %v3695 = vcombine.low %v3631, %v3632
  %v3696 = vcombine.high %v3631, %v3632
  %v3697 = vcombine.low %v3633, %v3634
  %v3698 = vcombine.high %v3633, %v3634
  %v3732 = vunpack.c.l.s4 1966171168
  %v3733 = vunpack.c.0.s8 %v3732
  %v3734 = vlaneseq
  %v3735 = vshrl.u32 %v3734, 7
  %v3736 = vsub.s32 %v3733, %v3735
  %v3737 = vrot.slane %v3667, %v3736
  %v3739 = vunpack.c.l.s4 1966171168
  %v3740 = vunpack.c.0.s8 %v3739
  %v3741 = vlaneseq
  %v3742 = vshrl.u32 %v3741, 7
  %v3743 = vsub.s32 %v3740, %v3742
  %v3744 = vrot.slane %v3668, %v3743
  %v3746 = vunpack.c.l.s4 1966171168
  %v3747 = vunpack.c.0.s8 %v3746
  %v3748 = vlaneseq
  %v3749 = vshrl.u32 %v3748, 7
  %v3750 = vsub.s32 %v3747, %v3749
  %v3751 = vrot.slane %v3669, %v3750
  %v3753 = vunpack.c.l.s4 1966171168
  %v3754 = vunpack.c.0.s8 %v3753
  %v3755 = vlaneseq
  %v3756 = vshrl.u32 %v3755, 7
  %v3757 = vsub.s32 %v3754, %v3756
  %v3758 = vrot.slane %v3670, %v3757
  %v3760 = vunpack.c.l.s4 1966171168
  %v3761 = vunpack.c.0.s8 %v3760
  %v3762 = vlaneseq
  %v3763 = vshrl.u32 %v3762, 7
  %v3764 = vsub.s32 %v3761, %v3763
  %v3765 = vrot.slane %v3671, %v3764
  %v3767 = vunpack.c.l.s4 1966171168
  %v3768 = vunpack.c.0.s8 %v3767
  %v3769 = vlaneseq
  %v3770 = vshrl.u32 %v3769, 7
  %v3771 = vsub.s32 %v3768, %v3770
  %v3772 = vrot.slane %v3672, %v3771
  %v3774 = vunpack.c.l.s4 1966171168
  %v3775 = vunpack.c.0.s8 %v3774
  %v3776 = vlaneseq
  %v3777 = vshrl.u32 %v3776, 7
  %v3778 = vsub.s32 %v3775, %v3777
  %v3779 = vrot.slane %v3673, %v3778
  %v3781 = vunpack.c.l.s4 1966171168
  %v3782 = vunpack.c.0.s8 %v3781
  %v3783 = vlaneseq
  %v3784 = vshrl.u32 %v3783, 7
  %v3785 = vsub.s32 %v3782, %v3784
  %v3786 = vrot.slane %v3674, %v3785
  %v3788 = vunpack.c.l.s4 1966171168
  %v3789 = vunpack.c.0.s8 %v3788
  %v3790 = vlaneseq
  %v3791 = vshrl.u32 %v3790, 7
  %v3792 = vsub.s32 %v3789, %v3791
  %v3793 = vrot.slane %v3675, %v3792
  %v3795 = vunpack.c.l.s4 1966171168
  %v3796 = vunpack.c.0.s8 %v3795
  %v3797 = vlaneseq
  %v3798 = vshrl.u32 %v3797, 7
  %v3799 = vsub.s32 %v3796, %v3798
  %v3800 = vrot.slane %v3676, %v3799
  %v3802 = vunpack.c.l.s4 1966171168
  %v3803 = vunpack.c.0.s8 %v3802
  %v3804 = vlaneseq
  %v3805 = vshrl.u32 %v3804, 7
  %v3806 = vsub.s32 %v3803, %v3805
  %v3807 = vrot.slane %v3677, %v3806
  %v3809 = vunpack.c.l.s4 1966171168
  %v3810 = vunpack.c.0.s8 %v3809
  %v3811 = vlaneseq
  %v3812 = vshrl.u32 %v3811, 7
  %v3813 = vsub.s32 %v3810, %v3812
  %v3814 = vrot.slane %v3678, %v3813
  %v3816 = vunpack.c.l.s4 1966171168
  %v3817 = vunpack.c.0.s8 %v3816
  %v3818 = vlaneseq
  %v3819 = vshrl.u32 %v3818, 7
  %v3820 = vsub.s32 %v3817, %v3819
  %v3821 = vrot.slane %v3679, %v3820
  %v3823 = vunpack.c.l.s4 1966171168
  %v3824 = vunpack.c.0.s8 %v3823
  %v3825 = vlaneseq
  %v3826 = vshrl.u32 %v3825, 7
  %v3827 = vsub.s32 %v3824, %v3826
  %v3828 = vrot.slane %v3680, %v3827
  %v3830 = vunpack.c.l.s4 1966171168
  %v3831 = vunpack.c.0.s8 %v3830
  %v3832 = vlaneseq
  %v3833 = vshrl.u32 %v3832, 7
  %v3834 = vsub.s32 %v3831, %v3833
  %v3835 = vrot.slane %v3681, %v3834
  %v3837 = vunpack.c.l.s4 1966171168
  %v3838 = vunpack.c.0.s8 %v3837
  %v3839 = vlaneseq
  %v3840 = vshrl.u32 %v3839, 7
  %v3841 = vsub.s32 %v3838, %v3840
  %v3842 = vrot.slane %v3682, %v3841
  %v3844 = vunpack.c.l.s4 1966171168
  %v3845 = vunpack.c.0.s8 %v3844
  %v3846 = vlaneseq
  %v3847 = vshrl.u32 %v3846, 7
  %v3848 = vsub.s32 %v3845, %v3847
  %v3849 = vrot.slane %v3683, %v3848
  %v3851 = vunpack.c.l.s4 1966171168
  %v3852 = vunpack.c.0.s8 %v3851
  %v3853 = vlaneseq
  %v3854 = vshrl.u32 %v3853, 7
  %v3855 = vsub.s32 %v3852, %v3854
  %v3856 = vrot.slane %v3684, %v3855
  %v3858 = vunpack.c.l.s4 1966171168
  %v3859 = vunpack.c.0.s8 %v3858
  %v3860 = vlaneseq
  %v3861 = vshrl.u32 %v3860, 7
  %v3862 = vsub.s32 %v3859, %v3861
  %v3863 = vrot.slane %v3685, %v3862
  %v3865 = vunpack.c.l.s4 1966171168
  %v3866 = vunpack.c.0.s8 %v3865
  %v3867 = vlaneseq
  %v3868 = vshrl.u32 %v3867, 7
  %v3869 = vsub.s32 %v3866, %v3868
  %v3870 = vrot.slane %v3686, %v3869
  %v3872 = vunpack.c.l.s4 1966171168
  %v3873 = vunpack.c.0.s8 %v3872
  %v3874 = vlaneseq
  %v3875 = vshrl.u32 %v3874, 7
  %v3876 = vsub.s32 %v3873, %v3875
  %v3877 = vrot.slane %v3687, %v3876
  %v3879 = vunpack.c.l.s4 1966171168
  %v3880 = vunpack.c.0.s8 %v3879
  %v3881 = vlaneseq
  %v3882 = vshrl.u32 %v3881, 7
  %v3883 = vsub.s32 %v3880, %v3882
  %v3884 = vrot.slane %v3688, %v3883
  %v3886 = vunpack.c.l.s4 1966171168
  %v3887 = vunpack.c.0.s8 %v3886
  %v3888 = vlaneseq
  %v3889 = vshrl.u32 %v3888, 7
  %v3890 = vsub.s32 %v3887, %v3889
  %v3891 = vrot.slane %v3689, %v3890
  %v3893 = vunpack.c.l.s4 1966171168
  %v3894 = vunpack.c.0.s8 %v3893
  %v3895 = vlaneseq
  %v3896 = vshrl.u32 %v3895, 7
  %v3897 = vsub.s32 %v3894, %v3896
  %v3898 = vrot.slane %v3690, %v3897
  %v3900 = vunpack.c.l.s4 1966171168
  %v3901 = vunpack.c.0.s8 %v3900
  %v3902 = vlaneseq
  %v3903 = vshrl.u32 %v3902, 7
  %v3904 = vsub.s32 %v3901, %v3903
  %v3905 = vrot.slane %v3691, %v3904
  %v3907 = vunpack.c.l.s4 1966171168
  %v3908 = vunpack.c.0.s8 %v3907
  %v3909 = vlaneseq
  %v3910 = vshrl.u32 %v3909, 7
  %v3911 = vsub.s32 %v3908, %v3910
  %v3912 = vrot.slane %v3692, %v3911
  %v3914 = vunpack.c.l.s4 1966171168
  %v3915 = vunpack.c.0.s8 %v3914
  %v3916 = vlaneseq
  %v3917 = vshrl.u32 %v3916, 7
  %v3918 = vsub.s32 %v3915, %v3917
  %v3919 = vrot.slane %v3693, %v3918
  %v3921 = vunpack.c.l.s4 1966171168
  %v3922 = vunpack.c.0.s8 %v3921
  %v3923 = vlaneseq
  %v3924 = vshrl.u32 %v3923, 7
  %v3925 = vsub.s32 %v3922, %v3924
  %v3926 = vrot.slane %v3694, %v3925
  %v3928 = vunpack.c.l.s4 1966171168
  %v3929 = vunpack.c.0.s8 %v3928
  %v3930 = vlaneseq
  %v3931 = vshrl.u32 %v3930, 7
  %v3932 = vsub.s32 %v3929, %v3931
  %v3933 = vrot.slane %v3695, %v3932
  %v3935 = vunpack.c.l.s4 1966171168
  %v3936 = vunpack.c.0.s8 %v3935
  %v3937 = vlaneseq
  %v3938 = vshrl.u32 %v3937, 7
  %v3939 = vsub.s32 %v3936, %v3938
  %v3940 = vrot.slane %v3696, %v3939
  %v3942 = vunpack.c.l.s4 1966171168
  %v3943 = vunpack.c.0.s8 %v3942
  %v3944 = vlaneseq
  %v3945 = vshrl.u32 %v3944, 7
  %v3946 = vsub.s32 %v3943, %v3945
  %v3947 = vrot.slane %v3697, %v3946
  %v3949 = vunpack.c.l.s4 1966171168
  %v3950 = vunpack.c.0.s8 %v3949
  %v3951 = vlaneseq
  %v3952 = vshrl.u32 %v3951, 7
  %v3953 = vsub.s32 %v3950, %v3952
  %v3954 = vrot.slane %v3698, %v3953
  %v3987 = vrot.slane %v3737, 4
  %v3988 = vrot.slane %v3744, 4
  %v3989 = vrot.slane %v3751, 4
  %v3990 = vrot.slane %v3758, 4
  %v3991 = vrot.slane %v3765, 4
  %v3992 = vrot.slane %v3772, 4
  %v3993 = vrot.slane %v3779, 4
  %v3994 = vrot.slane %v3786, 4
  %v3995 = vrot.slane %v3793, 4
  %v3996 = vrot.slane %v3800, 4
  %v3997 = vrot.slane %v3807, 4
  %v3998 = vrot.slane %v3814, 4
  %v3999 = vrot.slane %v3821, 4
  %v4000 = vrot.slane %v3828, 4
  %v4001 = vrot.slane %v3835, 4
  %v4002 = vrot.slane %v3842, 4
  %v4003 = vrot.slane %v3849, 4
  %v4004 = vrot.slane %v3856, 4
  %v4005 = vrot.slane %v3863, 4
  %v4006 = vrot.slane %v3870, 4
  %v4007 = vrot.slane %v3877, 4
  %v4008 = vrot.slane %v3884, 4
  %v4009 = vrot.slane %v3891, 4
  %v4010 = vrot.slane %v3898, 4
  %v4011 = vrot.slane %v3905, 4
  %v4012 = vrot.slane %v3912, 4
  %v4013 = vrot.slane %v3919, 4
  %v4014 = vrot.slane %v3926, 4
  %v4015 = vrot.slane %v3933, 4
  %v4016 = vrot.slane %v3940, 4
  %v4017 = vrot.slane %v3947, 4
  %v4018 = vrot.slane %v3954, 4
  %v4051 = vmax.f32 %v3737, %v3987
  %v4052 = vmax.f32 %v3744, %v3988
  %v4053 = vmax.f32 %v3751, %v3989
  %v4054 = vmax.f32 %v3758, %v3990
  %v4055 = vmax.f32 %v3765, %v3991
  %v4056 = vmax.f32 %v3772, %v3992
  %v4057 = vmax.f32 %v3779, %v3993
  %v4058 = vmax.f32 %v3786, %v3994
  %v4059 = vmax.f32 %v3793, %v3995
  %v4060 = vmax.f32 %v3800, %v3996
  %v4061 = vmax.f32 %v3807, %v3997
  %v4062 = vmax.f32 %v3814, %v3998
  %v4063 = vmax.f32 %v3821, %v3999
  %v4064 = vmax.f32 %v3828, %v4000
  %v4065 = vmax.f32 %v3835, %v4001
  %v4066 = vmax.f32 %v3842, %v4002
  %v4067 = vmax.f32 %v3849, %v4003
  %v4068 = vmax.f32 %v3856, %v4004
  %v4069 = vmax.f32 %v3863, %v4005
  %v4070 = vmax.f32 %v3870, %v4006
  %v4071 = vmax.f32 %v3877, %v4007
  %v4072 = vmax.f32 %v3884, %v4008
  %v4073 = vmax.f32 %v3891, %v4009
  %v4074 = vmax.f32 %v3898, %v4010
  %v4075 = vmax.f32 %v3905, %v4011
  %v4076 = vmax.f32 %v3912, %v4012
  %v4077 = vmax.f32 %v3919, %v4013
  %v4078 = vmax.f32 %v3926, %v4014
  %v4079 = vmax.f32 %v3933, %v4015
  %v4080 = vmax.f32 %v3940, %v4016
  %v4081 = vmax.f32 %v3947, %v4017
  %v4082 = vmax.f32 %v3954, %v4018
  %v4115 = vrot.slane %v4051, 2
  %v4116 = vrot.slane %v4052, 2
  %v4117 = vrot.slane %v4053, 2
  %v4118 = vrot.slane %v4054, 2
  %v4119 = vrot.slane %v4055, 2
  %v4120 = vrot.slane %v4056, 2
  %v4121 = vrot.slane %v4057, 2
  %v4122 = vrot.slane %v4058, 2
  %v4123 = vrot.slane %v4059, 2
  %v4124 = vrot.slane %v4060, 2
  %v4125 = vrot.slane %v4061, 2
  %v4126 = vrot.slane %v4062, 2
  %v4127 = vrot.slane %v4063, 2
  %v4128 = vrot.slane %v4064, 2
  %v4129 = vrot.slane %v4065, 2
  %v4130 = vrot.slane %v4066, 2
  %v4131 = vrot.slane %v4067, 2
  %v4132 = vrot.slane %v4068, 2
  %v4133 = vrot.slane %v4069, 2
  %v4134 = vrot.slane %v4070, 2
  %v4135 = vrot.slane %v4071, 2
  %v4136 = vrot.slane %v4072, 2
  %v4137 = vrot.slane %v4073, 2
  %v4138 = vrot.slane %v4074, 2
  %v4139 = vrot.slane %v4075, 2
  %v4140 = vrot.slane %v4076, 2
  %v4141 = vrot.slane %v4077, 2
  %v4142 = vrot.slane %v4078, 2
  %v4143 = vrot.slane %v4079, 2
  %v4144 = vrot.slane %v4080, 2
  %v4145 = vrot.slane %v4081, 2
  %v4146 = vrot.slane %v4082, 2
  %v4179 = vmax.f32 %v4051, %v4115
  %v4180 = vmax.f32 %v4052, %v4116
  %v4181 = vmax.f32 %v4053, %v4117
  %v4182 = vmax.f32 %v4054, %v4118
  %v4183 = vmax.f32 %v4055, %v4119
  %v4184 = vmax.f32 %v4056, %v4120
  %v4185 = vmax.f32 %v4057, %v4121
  %v4186 = vmax.f32 %v4058, %v4122
  %v4187 = vmax.f32 %v4059, %v4123
  %v4188 = vmax.f32 %v4060, %v4124
  %v4189 = vmax.f32 %v4061, %v4125
  %v4190 = vmax.f32 %v4062, %v4126
  %v4191 = vmax.f32 %v4063, %v4127
  %v4192 = vmax.f32 %v4064, %v4128
  %v4193 = vmax.f32 %v4065, %v4129
  %v4194 = vmax.f32 %v4066, %v4130
  %v4195 = vmax.f32 %v4067, %v4131
  %v4196 = vmax.f32 %v4068, %v4132
  %v4197 = vmax.f32 %v4069, %v4133
  %v4198 = vmax.f32 %v4070, %v4134
  %v4199 = vmax.f32 %v4071, %v4135
  %v4200 = vmax.f32 %v4072, %v4136
  %v4201 = vmax.f32 %v4073, %v4137
  %v4202 = vmax.f32 %v4074, %v4138
  %v4203 = vmax.f32 %v4075, %v4139
  %v4204 = vmax.f32 %v4076, %v4140
  %v4205 = vmax.f32 %v4077, %v4141
  %v4206 = vmax.f32 %v4078, %v4142
  %v4207 = vmax.f32 %v4079, %v4143
  %v4208 = vmax.f32 %v4080, %v4144
  %v4209 = vmax.f32 %v4081, %v4145
  %v4210 = vmax.f32 %v4082, %v4146
  %v4243 = vcombine.low %v4179, %v4180
  %v4244 = vcombine.low %v4181, %v4182
  %v4246 = vunpack.c.l.s4 1983009808
  %v4247 = vunpack.c.0.s8 %v4246
  %v4248 = vlaneseq
  %v4249 = vshrl.u32 %v4248, 7
  %v4250 = vsub.s32 %v4247, %v4249
  %v4251 = vrot.slane %v4243, %v4250
  %v4253 = vunpack.c.l.s4 1983009808
  %v4254 = vunpack.c.0.s8 %v4253
  %v4255 = vlaneseq
  %v4256 = vshrl.u32 %v4255, 7
  %v4257 = vsub.s32 %v4254, %v4256
  %v4258 = vrot.slane %v4244, %v4257
  %v4259 = vcombine.low %v4251, %v4258
  %v4260 = vcombine.low %v4183, %v4184
  %v4261 = vcombine.low %v4185, %v4186
  %v4263 = vunpack.c.l.s4 1983009808
  %v4264 = vunpack.c.0.s8 %v4263
  %v4265 = vlaneseq
  %v4266 = vshrl.u32 %v4265, 7
  %v4267 = vsub.s32 %v4264, %v4266
  %v4268 = vrot.slane %v4260, %v4267
  %v4270 = vunpack.c.l.s4 1983009808
  %v4271 = vunpack.c.0.s8 %v4270
  %v4272 = vlaneseq
  %v4273 = vshrl.u32 %v4272, 7
  %v4274 = vsub.s32 %v4271, %v4273
  %v4275 = vrot.slane %v4261, %v4274
  %v4276 = vcombine.low %v4268, %v4275
  %v4277 = vcombine.low %v4187, %v4188
  %v4278 = vcombine.low %v4189, %v4190
  %v4280 = vunpack.c.l.s4 1983009808
  %v4281 = vunpack.c.0.s8 %v4280
  %v4282 = vlaneseq
  %v4283 = vshrl.u32 %v4282, 7
  %v4284 = vsub.s32 %v4281, %v4283
  %v4285 = vrot.slane %v4277, %v4284
  %v4287 = vunpack.c.l.s4 1983009808
  %v4288 = vunpack.c.0.s8 %v4287
  %v4289 = vlaneseq
  %v4290 = vshrl.u32 %v4289, 7
  %v4291 = vsub.s32 %v4288, %v4290
  %v4292 = vrot.slane %v4278, %v4291
  %v4293 = vcombine.low %v4285, %v4292
  %v4294 = vcombine.low %v4191, %v4192
  %v4295 = vcombine.low %v4193, %v4194
  %v4297 = vunpack.c.l.s4 1983009808
  %v4298 = vunpack.c.0.s8 %v4297
  %v4299 = vlaneseq
  %v4300 = vshrl.u32 %v4299, 7
  %v4301 = vsub.s32 %v4298, %v4300
  %v4302 = vrot.slane %v4294, %v4301
  %v4304 = vunpack.c.l.s4 1983009808
  %v4305 = vunpack.c.0.s8 %v4304
  %v4306 = vlaneseq
  %v4307 = vshrl.u32 %v4306, 7
  %v4308 = vsub.s32 %v4305, %v4307
  %v4309 = vrot.slane %v4295, %v4308
  %v4310 = vcombine.low %v4302, %v4309
  %v4311 = vcombine.low %v4195, %v4196
  %v4312 = vcombine.low %v4197, %v4198
  %v4314 = vunpack.c.l.s4 1983009808
  %v4315 = vunpack.c.0.s8 %v4314
  %v4316 = vlaneseq
  %v4317 = vshrl.u32 %v4316, 7
  %v4318 = vsub.s32 %v4315, %v4317
  %v4319 = vrot.slane %v4311, %v4318
  %v4321 = vunpack.c.l.s4 1983009808
  %v4322 = vunpack.c.0.s8 %v4321
  %v4323 = vlaneseq
  %v4324 = vshrl.u32 %v4323, 7
  %v4325 = vsub.s32 %v4322, %v4324
  %v4326 = vrot.slane %v4312, %v4325
  %v4327 = vcombine.low %v4319, %v4326
  %v4328 = vcombine.low %v4199, %v4200
  %v4329 = vcombine.low %v4201, %v4202
  %v4331 = vunpack.c.l.s4 1983009808
  %v4332 = vunpack.c.0.s8 %v4331
  %v4333 = vlaneseq
  %v4334 = vshrl.u32 %v4333, 7
  %v4335 = vsub.s32 %v4332, %v4334
  %v4336 = vrot.slane %v4328, %v4335
  %v4338 = vunpack.c.l.s4 1983009808
  %v4339 = vunpack.c.0.s8 %v4338
  %v4340 = vlaneseq
  %v4341 = vshrl.u32 %v4340, 7
  %v4342 = vsub.s32 %v4339, %v4341
  %v4343 = vrot.slane %v4329, %v4342
  %v4344 = vcombine.low %v4336, %v4343
  %v4345 = vcombine.low %v4203, %v4204
  %v4346 = vcombine.low %v4205, %v4206
  %v4348 = vunpack.c.l.s4 1983009808
  %v4349 = vunpack.c.0.s8 %v4348
  %v4350 = vlaneseq
  %v4351 = vshrl.u32 %v4350, 7
  %v4352 = vsub.s32 %v4349, %v4351
  %v4353 = vrot.slane %v4345, %v4352
  %v4355 = vunpack.c.l.s4 1983009808
  %v4356 = vunpack.c.0.s8 %v4355
  %v4357 = vlaneseq
  %v4358 = vshrl.u32 %v4357, 7
  %v4359 = vsub.s32 %v4356, %v4358
  %v4360 = vrot.slane %v4346, %v4359
  %v4361 = vcombine.low %v4353, %v4360
  %v4362 = vcombine.low %v4207, %v4208
  %v4363 = vcombine.low %v4209, %v4210
  %v4365 = vunpack.c.l.s4 1983009808
  %v4366 = vunpack.c.0.s8 %v4365
  %v4367 = vlaneseq
  %v4368 = vshrl.u32 %v4367, 7
  %v4369 = vsub.s32 %v4366, %v4368
  %v4370 = vrot.slane %v4362, %v4369
  %v4372 = vunpack.c.l.s4 1983009808
  %v4373 = vunpack.c.0.s8 %v4372
  %v4374 = vlaneseq
  %v4375 = vshrl.u32 %v4374, 7
  %v4376 = vsub.s32 %v4373, %v4375
  %v4377 = vrot.slane %v4363, %v4376
  %v4378 = vcombine.low %v4370, %v4377
  %v4379 = vld [vmem:[%s5] sm:$0xff]
  %v4380 = vld [vmem:[%s5 + $0x8] sm:$0xff]
  %v4381 = vld [vmem:[%s5 + $0x10] sm:$0xff]
  %v4382 = vld [vmem:[%s5 + $0x18] sm:$0xff]
  %v4383 = vld [vmem:[%s5 + $0x20] sm:$0xff]
  %v4384 = vld [vmem:[%s5 + $0x28] sm:$0xff]
  %v4385 = vld [vmem:[%s5 + $0x30] sm:$0xff]
  %v4386 = vld [vmem:[%s5 + $0x38] sm:$0xff]
  %v4387 = vld [vmem:[%s5 + $0x40] sm:$0xff]
  %v4388 = vld [vmem:[%s5 + $0x48] sm:$0xff]
  %v4389 = vld [vmem:[%s5 + $0x50] sm:$0xff]
  %v4390 = vld [vmem:[%s5 + $0x58] sm:$0xff]
  %v4391 = vld [vmem:[%s5 + $0x60] sm:$0xff]
  %v4392 = vld [vmem:[%s5 + $0x68] sm:$0xff]
  %v4393 = vld [vmem:[%s5 + $0x70] sm:$0xff]
  %v4394 = vld [vmem:[%s5 + $0x78] sm:$0xff]
  %v4395 = vld [vmem:[%s5 + $0x80] sm:$0xff]
  %v4396 = vld [vmem:[%s5 + $0x88] sm:$0xff]
  %v4397 = vld [vmem:[%s5 + $0x90] sm:$0xff]
  %v4398 = vld [vmem:[%s5 + $0x98] sm:$0xff]
  %v4399 = vld [vmem:[%s5 + $0xa0] sm:$0xff]
  %v4400 = vld [vmem:[%s5 + $0xa8] sm:$0xff]
  %v4401 = vld [vmem:[%s5 + $0xb0] sm:$0xff]
  %v4402 = vld [vmem:[%s5 + $0xb8] sm:$0xff]
  %v4403 = vld [vmem:[%s5 + $0xc0] sm:$0xff]
  %v4404 = vld [vmem:[%s5 + $0xc8] sm:$0xff]
  %v4405 = vld [vmem:[%s5 + $0xd0] sm:$0xff]
  %v4406 = vld [vmem:[%s5 + $0xd8] sm:$0xff]
  %v4407 = vld [vmem:[%s5 + $0xe0] sm:$0xff]
  %v4408 = vld [vmem:[%s5 + $0xe8] sm:$0xff]
  %v4409 = vld [vmem:[%s5 + $0xf0] sm:$0xff]
  %v4410 = vld [vmem:[%s5 + $0xf8] sm:$0xff]
  %v4411 = vld [vmem:[%s5 + $0x100] sm:$0xff]
  %v4412 = vld [vmem:[%s5 + $0x108] sm:$0xff]
  %v4413 = vld [vmem:[%s5 + $0x110] sm:$0xff]
  %v4414 = vld [vmem:[%s5 + $0x118] sm:$0xff]
  %v4415 = vld [vmem:[%s5 + $0x120] sm:$0xff]
  %v4416 = vld [vmem:[%s5 + $0x128] sm:$0xff]
  %v4417 = vld [vmem:[%s5 + $0x130] sm:$0xff]
  %v4418 = vld [vmem:[%s5 + $0x138] sm:$0xff]
  %v4419 = vld [vmem:[%s5 + $0x140] sm:$0xff]
  %v4420 = vld [vmem:[%s5 + $0x148] sm:$0xff]
  %v4421 = vld [vmem:[%s5 + $0x150] sm:$0xff]
  %v4422 = vld [vmem:[%s5 + $0x158] sm:$0xff]
  %v4423 = vld [vmem:[%s5 + $0x160] sm:$0xff]
  %v4424 = vld [vmem:[%s5 + $0x168] sm:$0xff]
  %v4425 = vld [vmem:[%s5 + $0x170] sm:$0xff]
  %v4426 = vld [vmem:[%s5 + $0x178] sm:$0xff]
  %v4427 = vld [vmem:[%s5 + $0x180] sm:$0xff]
  %v4428 = vld [vmem:[%s5 + $0x188] sm:$0xff]
  %v4429 = vld [vmem:[%s5 + $0x190] sm:$0xff]
  %v4430 = vld [vmem:[%s5 + $0x198] sm:$0xff]
  %v4431 = vld [vmem:[%s5 + $0x1a0] sm:$0xff]
  %v4432 = vld [vmem:[%s5 + $0x1a8] sm:$0xff]
  %v4433 = vld [vmem:[%s5 + $0x1b0] sm:$0xff]
  %v4434 = vld [vmem:[%s5 + $0x1b8] sm:$0xff]
  %v4435 = vld [vmem:[%s5 + $0x1c0] sm:$0xff]
  %v4436 = vld [vmem:[%s5 + $0x1c8] sm:$0xff]
  %v4437 = vld [vmem:[%s5 + $0x1d0] sm:$0xff]
  %v4438 = vld [vmem:[%s5 + $0x1d8] sm:$0xff]
  %v4439 = vld [vmem:[%s5 + $0x1e0] sm:$0xff]
  %v4440 = vld [vmem:[%s5 + $0x1e8] sm:$0xff]
  %v4441 = vld [vmem:[%s5 + $0x1f0] sm:$0xff]
  %v4442 = vld [vmem:[%s5 + $0x1f8] sm:$0xff]
  %v4443 = vld [vmem:[%s5 + $0x200] sm:$0xff]
  %v4444 = vld [vmem:[%s5 + $0x208] sm:$0xff]
  %v4445 = vld [vmem:[%s5 + $0x210] sm:$0xff]
  %v4446 = vld [vmem:[%s5 + $0x218] sm:$0xff]
  %v4447 = vld [vmem:[%s5 + $0x220] sm:$0xff]
  %v4448 = vld [vmem:[%s5 + $0x228] sm:$0xff]
  %v4449 = vld [vmem:[%s5 + $0x230] sm:$0xff]
  %v4450 = vld [vmem:[%s5 + $0x238] sm:$0xff]
  %v4451 = vld [vmem:[%s5 + $0x240] sm:$0xff]
  %v4452 = vld [vmem:[%s5 + $0x248] sm:$0xff]
  %v4453 = vld [vmem:[%s5 + $0x250] sm:$0xff]
  %v4454 = vld [vmem:[%s5 + $0x258] sm:$0xff]
  %v4455 = vld [vmem:[%s5 + $0x260] sm:$0xff]
  %v4456 = vld [vmem:[%s5 + $0x268] sm:$0xff]
  %v4457 = vld [vmem:[%s5 + $0x270] sm:$0xff]
  %v4458 = vld [vmem:[%s5 + $0x278] sm:$0xff]
  %v4459 = vld [vmem:[%s5 + $0x280] sm:$0xff]
  %v4460 = vld [vmem:[%s5 + $0x288] sm:$0xff]
  %v4461 = vld [vmem:[%s5 + $0x290] sm:$0xff]
  %v4462 = vld [vmem:[%s5 + $0x298] sm:$0xff]
  %v4463 = vld [vmem:[%s5 + $0x2a0] sm:$0xff]
  %v4464 = vld [vmem:[%s5 + $0x2a8] sm:$0xff]
  %v4465 = vld [vmem:[%s5 + $0x2b0] sm:$0xff]
  %v4466 = vld [vmem:[%s5 + $0x2b8] sm:$0xff]
  %v4467 = vld [vmem:[%s5 + $0x2c0] sm:$0xff]
  %v4468 = vld [vmem:[%s5 + $0x2c8] sm:$0xff]
  %v4469 = vld [vmem:[%s5 + $0x2d0] sm:$0xff]
  %v4470 = vld [vmem:[%s5 + $0x2d8] sm:$0xff]
  %v4471 = vld [vmem:[%s5 + $0x2e0] sm:$0xff]
  %v4472 = vld [vmem:[%s5 + $0x2e8] sm:$0xff]
  %v4473 = vld [vmem:[%s5 + $0x2f0] sm:$0xff]
  %v4474 = vld [vmem:[%s5 + $0x2f8] sm:$0xff]
  %v4475 = vld [vmem:[%s5 + $0x300] sm:$0xff]
  %v4476 = vld [vmem:[%s5 + $0x308] sm:$0xff]
  %v4477 = vld [vmem:[%s5 + $0x310] sm:$0xff]
  %v4478 = vld [vmem:[%s5 + $0x318] sm:$0xff]
  %v4479 = vld [vmem:[%s5 + $0x320] sm:$0xff]
  %v4480 = vld [vmem:[%s5 + $0x328] sm:$0xff]
  %v4481 = vld [vmem:[%s5 + $0x330] sm:$0xff]
  %v4482 = vld [vmem:[%s5 + $0x338] sm:$0xff]
  %v4483 = vld [vmem:[%s5 + $0x340] sm:$0xff]
  %v4484 = vld [vmem:[%s5 + $0x348] sm:$0xff]
  %v4485 = vld [vmem:[%s5 + $0x350] sm:$0xff]
  %v4486 = vld [vmem:[%s5 + $0x358] sm:$0xff]
  %v4487 = vld [vmem:[%s5 + $0x360] sm:$0xff]
  %v4488 = vld [vmem:[%s5 + $0x368] sm:$0xff]
  %v4489 = vld [vmem:[%s5 + $0x370] sm:$0xff]
  %v4490 = vld [vmem:[%s5 + $0x378] sm:$0xff]
  %v4491 = vld [vmem:[%s5 + $0x380] sm:$0xff]
  %v4492 = vld [vmem:[%s5 + $0x388] sm:$0xff]
  %v4493 = vld [vmem:[%s5 + $0x390] sm:$0xff]
  %v4494 = vld [vmem:[%s5 + $0x398] sm:$0xff]
  %v4495 = vld [vmem:[%s5 + $0x3a0] sm:$0xff]
  %v4496 = vld [vmem:[%s5 + $0x3a8] sm:$0xff]
  %v4497 = vld [vmem:[%s5 + $0x3b0] sm:$0xff]
  %v4498 = vld [vmem:[%s5 + $0x3b8] sm:$0xff]
  %v4499 = vld [vmem:[%s5 + $0x3c0] sm:$0xff]
  %v4500 = vld [vmem:[%s5 + $0x3c8] sm:$0xff]
  %v4501 = vld [vmem:[%s5 + $0x3d0] sm:$0xff]
  %v4502 = vld [vmem:[%s5 + $0x3d8] sm:$0xff]
  %v4503 = vld [vmem:[%s5 + $0x3e0] sm:$0xff]
  %v4504 = vld [vmem:[%s5 + $0x3e8] sm:$0xff]
  %v4505 = vld [vmem:[%s5 + $0x3f0] sm:$0xff]
  %v4506 = vld [vmem:[%s5 + $0x3f8] sm:$0xff]
  %v4507 = vld [vmem:[%s6] sm:$0x1]
  %v4509 = vlaneseq
  %v4510 = vshrl.u32 %v4509, 7
  %v4511 = vsub.s32 0, %v4510
  %v4512 = vrot.slane %v4507, %v4511
  %v4514 = vcombine.low %v4259, %v4276
  %v4515 = vcombine.high %v4259, %v4276
  %v4516 = vcombine.low %v4293, %v4310
  %v4517 = vcombine.high %v4293, %v4310
  %v4518 = vcombine.low %v4327, %v4344
  %v4519 = vcombine.high %v4327, %v4344
  %v4520 = vcombine.low %v4361, %v4378
  %v4521 = vcombine.high %v4361, %v4378
  %v4523 = vunpack.c.l.s4 1966171168
  %v4524 = vunpack.c.0.s8 %v4523
  %v4525 = vlaneseq
  %v4526 = vshrl.u32 %v4525, 7
  %v4527 = vsub.s32 %v4524, %v4526
  %v4528 = vrot.slane %v4514, %v4527
  %v4530 = vunpack.c.l.s4 1966171168
  %v4531 = vunpack.c.0.s8 %v4530
  %v4532 = vlaneseq
  %v4533 = vshrl.u32 %v4532, 7
  %v4534 = vsub.s32 %v4531, %v4533
  %v4535 = vrot.slane %v4515, %v4534
  %v4537 = vunpack.c.l.s4 1966171168
  %v4538 = vunpack.c.0.s8 %v4537
  %v4539 = vlaneseq
  %v4540 = vshrl.u32 %v4539, 7
  %v4541 = vsub.s32 %v4538, %v4540
  %v4542 = vrot.slane %v4516, %v4541
  %v4544 = vunpack.c.l.s4 1966171168
  %v4545 = vunpack.c.0.s8 %v4544
  %v4546 = vlaneseq
  %v4547 = vshrl.u32 %v4546, 7
  %v4548 = vsub.s32 %v4545, %v4547
  %v4549 = vrot.slane %v4517, %v4548
  %v4551 = vunpack.c.l.s4 1966171168
  %v4552 = vunpack.c.0.s8 %v4551
  %v4553 = vlaneseq
  %v4554 = vshrl.u32 %v4553, 7
  %v4555 = vsub.s32 %v4552, %v4554
  %v4556 = vrot.slane %v4518, %v4555
  %v4558 = vunpack.c.l.s4 1966171168
  %v4559 = vunpack.c.0.s8 %v4558
  %v4560 = vlaneseq
  %v4561 = vshrl.u32 %v4560, 7
  %v4562 = vsub.s32 %v4559, %v4561
  %v4563 = vrot.slane %v4519, %v4562
  %v4565 = vunpack.c.l.s4 1966171168
  %v4566 = vunpack.c.0.s8 %v4565
  %v4567 = vlaneseq
  %v4568 = vshrl.u32 %v4567, 7
  %v4569 = vsub.s32 %v4566, %v4568
  %v4570 = vrot.slane %v4520, %v4569
  %v4572 = vunpack.c.l.s4 1966171168
  %v4573 = vunpack.c.0.s8 %v4572
  %v4574 = vlaneseq
  %v4575 = vshrl.u32 %v4574, 7
  %v4576 = vsub.s32 %v4573, %v4575
  %v4577 = vrot.slane %v4521, %v4576
  %v4578 = vcombine.low %v4528, %v4542
  %v4579 = vcombine.high %v4528, %v4542
  %v4580 = vcombine.low %v4535, %v4549
  %v4581 = vcombine.high %v4535, %v4549
  %v4582 = vcombine.low %v4556, %v4570
  %v4583 = vcombine.high %v4556, %v4570
  %v4584 = vcombine.low %v4563, %v4577
  %v4585 = vcombine.high %v4563, %v4577
  %v4587 = vunpack.c.l.s4 1966171168
  %v4588 = vunpack.c.0.s8 %v4587
  %v4589 = vlaneseq
  %v4590 = vshrl.u32 %v4589, 7
  %v4591 = vsub.s32 %v4588, %v4590
  %v4592 = vrot.slane %v4578, %v4591
  %v4594 = vunpack.c.l.s4 1966171168
  %v4595 = vunpack.c.0.s8 %v4594
  %v4596 = vlaneseq
  %v4597 = vshrl.u32 %v4596, 7
  %v4598 = vsub.s32 %v4595, %v4597
  %v4599 = vrot.slane %v4580, %v4598
  %v4601 = vunpack.c.l.s4 1966171168
  %v4602 = vunpack.c.0.s8 %v4601
  %v4603 = vlaneseq
  %v4604 = vshrl.u32 %v4603, 7
  %v4605 = vsub.s32 %v4602, %v4604
  %v4606 = vrot.slane %v4579, %v4605
  %v4608 = vunpack.c.l.s4 1966171168
  %v4609 = vunpack.c.0.s8 %v4608
  %v4610 = vlaneseq
  %v4611 = vshrl.u32 %v4610, 7
  %v4612 = vsub.s32 %v4609, %v4611
  %v4613 = vrot.slane %v4581, %v4612
  %v4615 = vunpack.c.l.s4 1966171168
  %v4616 = vunpack.c.0.s8 %v4615
  %v4617 = vlaneseq
  %v4618 = vshrl.u32 %v4617, 7
  %v4619 = vsub.s32 %v4616, %v4618
  %v4620 = vrot.slane %v4582, %v4619
  %v4622 = vunpack.c.l.s4 1966171168
  %v4623 = vunpack.c.0.s8 %v4622
  %v4624 = vlaneseq
  %v4625 = vshrl.u32 %v4624, 7
  %v4626 = vsub.s32 %v4623, %v4625
  %v4627 = vrot.slane %v4584, %v4626
  %v4629 = vunpack.c.l.s4 1966171168
  %v4630 = vunpack.c.0.s8 %v4629
  %v4631 = vlaneseq
  %v4632 = vshrl.u32 %v4631, 7
  %v4633 = vsub.s32 %v4630, %v4632
  %v4634 = vrot.slane %v4583, %v4633
  %v4636 = vunpack.c.l.s4 1966171168
  %v4637 = vunpack.c.0.s8 %v4636
  %v4638 = vlaneseq
  %v4639 = vshrl.u32 %v4638, 7
  %v4640 = vsub.s32 %v4637, %v4639
  %v4641 = vrot.slane %v4585, %v4640
  %v4642 = vcombine.low %v4592, %v4620
  %v4643 = vcombine.high %v4592, %v4620
  %v4644 = vcombine.low %v4599, %v4627
  %v4645 = vcombine.high %v4599, %v4627
  %v4646 = vcombine.low %v4606, %v4634
  %v4647 = vcombine.high %v4606, %v4634
  %v4648 = vcombine.low %v4613, %v4641
  %v4649 = vcombine.high %v4613, %v4641
  %4658 = vmatprep.subr.mxu0 0.0
  %4659 = vmatpush1.msra.mxu0 %v4394
  %4660 = vmatprep.subr.mxu0 0.0
  %4661 = vmatpush1.msra.mxu0 %v4393
  %4662 = vmatprep.subr.mxu0 0.0
  %4663 = vmatpush1.msra.mxu0 %v4392
  %4664 = vmatprep.subr.mxu0 0.0
  %4665 = vmatpush1.msra.mxu0 %v4391
  %4666 = vmatprep.subr.mxu0 0.0
  %4667 = vmatpush1.msra.mxu0 %v4390
  %4668 = vmatprep.subr.mxu0 0.0
  %4669 = vmatpush1.msra.mxu0 %v4389
  %4670 = vmatprep.subr.mxu0 0.0
  %4671 = vmatpush1.msra.mxu0 %v4388
  %4672 = vmatprep.subr.mxu0 0.0
  %4673 = vmatpush1.msra.mxu0 %v4387
  %4674 = vmatprep.subr.mxu0 0.0
  %4675 = vmatpush1.msra.mxu0 %v4386
  %4676 = vmatprep.subr.mxu0 0.0
  %4677 = vmatpush1.msra.mxu0 %v4385
  %4678 = vmatprep.subr.mxu0 0.0
  %4679 = vmatpush1.msra.mxu0 %v4384
  %4680 = vmatprep.subr.mxu0 0.0
  %4681 = vmatpush1.msra.mxu0 %v4383
  %4682 = vmatprep.subr.mxu0 0.0
  %4683 = vmatpush1.msra.mxu0 %v4382
  %4684 = vmatprep.subr.mxu0 0.0
  %4685 = vmatpush1.msra.mxu0 %v4381
  %4686 = vmatprep.subr.mxu0 0.0
  %4687 = vmatpush1.msra.mxu0 %v4380
  %4688 = vmatprep.subr.mxu0 0.0
  %4689 = vmatpush1.msra.mxu0 %v4379
  %4690 = vmatprep.subr.mxu0 0.0
  %4691 = vmatpush2.msra.mxu0 %v4410
  %4692 = vmatprep.subr.mxu0 0.0
  %4693 = vmatpush2.msra.mxu0 %v4409
  %4694 = vmatprep.subr.mxu0 0.0
  %4695 = vmatpush2.msra.mxu0 %v4408
  %4696 = vmatprep.subr.mxu0 0.0
  %4697 = vmatpush2.msra.mxu0 %v4407
  %4698 = vmatprep.subr.mxu0 0.0
  %4699 = vmatpush2.msra.mxu0 %v4406
  %4700 = vmatprep.subr.mxu0 0.0
  %4701 = vmatpush2.msra.mxu0 %v4405
  %4702 = vmatprep.subr.mxu0 0.0
  %4703 = vmatpush2.msra.mxu0 %v4404
  %4704 = vmatprep.subr.mxu0 0.0
  %4705 = vmatpush2.msra.mxu0 %v4403
  %4706 = vmatprep.subr.mxu0 0.0
  %4707 = vmatpush2.msra.mxu0 %v4402
  %4708 = vmatprep.subr.mxu0 0.0
  %4709 = vmatpush2.msra.mxu0 %v4401
  %4710 = vmatprep.subr.mxu0 0.0
  %4711 = vmatpush2.msra.mxu0 %v4400
  %4712 = vmatprep.subr.mxu0 0.0
  %4713 = vmatpush2.msra.mxu0 %v4399
  %4714 = vmatprep.subr.mxu0 0.0
  %4715 = vmatpush2.msra.mxu0 %v4398
  %4716 = vmatprep.subr.mxu0 0.0
  %4717 = vmatpush2.msra.mxu0 %v4397
  %4718 = vmatprep.subr.mxu0 0.0
  %4719 = vmatpush2.msra.mxu0 %v4396
  %4720 = vmatprep.subr.mxu0 0.0
  %4721 = vmatpush2.msra.mxu0 %v4395
  %4722 = vmatprep.mubr.f32.mxu0 %v4646
  %4723 = vmatmul.mubr.f32.gmra.mxu0 %v4642
  %v4724 = vpop.f32.mrf.mxu0
  %v4725 = vadd.f32 %v4512, %v4724
  %v4726 = vpop.f32.mrf.mxu0
  %4727 = vdwg.mxu0
  %4728 = vmatprep.subr.mxu0 0.0
  %4729 = vmatpush1.msra.mxu0 %v4426
  %4730 = vmatprep.subr.mxu0 0.0
  %4731 = vmatpush1.msra.mxu0 %v4425
  %4732 = vmatprep.subr.mxu0 0.0
  %4733 = vmatpush1.msra.mxu0 %v4424
  %4734 = vmatprep.subr.mxu0 0.0
  %4735 = vmatpush1.msra.mxu0 %v4423
  %4736 = vmatprep.subr.mxu0 0.0
  %4737 = vmatpush1.msra.mxu0 %v4422
  %4738 = vmatprep.subr.mxu0 0.0
  %4739 = vmatpush1.msra.mxu0 %v4421
  %4740 = vmatprep.subr.mxu0 0.0
  %4741 = vmatpush1.msra.mxu0 %v4420
  %4742 = vmatprep.subr.mxu0 0.0
  %4743 = vmatpush1.msra.mxu0 %v4419
  %4744 = vmatprep.subr.mxu0 0.0
  %4745 = vmatpush1.msra.mxu0 %v4418
  %4746 = vmatprep.subr.mxu0 0.0
  %4747 = vmatpush1.msra.mxu0 %v4417
  %4748 = vmatprep.subr.mxu0 0.0
  %4749 = vmatpush1.msra.mxu0 %v4416
  %4750 = vmatprep.subr.mxu0 0.0
  %4751 = vmatpush1.msra.mxu0 %v4415
  %4752 = vmatprep.subr.mxu0 0.0
  %4753 = vmatpush1.msra.mxu0 %v4414
  %4754 = vmatprep.subr.mxu0 0.0
  %4755 = vmatpush1.msra.mxu0 %v4413
  %4756 = vmatprep.subr.mxu0 0.0
  %4757 = vmatpush1.msra.mxu0 %v4412
  %4758 = vmatprep.subr.mxu0 0.0
  %4759 = vmatpush1.msra.mxu0 %v4411
  %4760 = vmatprep.subr.mxu0 0.0
  %4761 = vmatpush2.msra.mxu0 %v4442
  %4762 = vmatprep.subr.mxu0 0.0
  %4763 = vmatpush2.msra.mxu0 %v4441
  %4764 = vmatprep.subr.mxu0 0.0
  %4765 = vmatpush2.msra.mxu0 %v4440
  %4766 = vmatprep.subr.mxu0 0.0
  %4767 = vmatpush2.msra.mxu0 %v4439
  %4768 = vmatprep.subr.mxu0 0.0
  %4769 = vmatpush2.msra.mxu0 %v4438
  %4770 = vmatprep.subr.mxu0 0.0
  %4771 = vmatpush2.msra.mxu0 %v4437
  %4772 = vmatprep.subr.mxu0 0.0
  %4773 = vmatpush2.msra.mxu0 %v4436
  %4774 = vmatprep.subr.mxu0 0.0
  %4775 = vmatpush2.msra.mxu0 %v4435
  %4776 = vmatprep.subr.mxu0 0.0
  %4777 = vmatpush2.msra.mxu0 %v4434
  %4778 = vmatprep.subr.mxu0 0.0
  %4779 = vmatpush2.msra.mxu0 %v4433
  %4780 = vmatprep.subr.mxu0 0.0
  %4781 = vmatpush2.msra.mxu0 %v4432
  %4782 = vmatprep.subr.mxu0 0.0
  %4783 = vmatpush2.msra.mxu0 %v4431
  %4784 = vmatprep.subr.mxu0 0.0
  %4785 = vmatpush2.msra.mxu0 %v4430
  %4786 = vmatprep.subr.mxu0 0.0
  %4787 = vmatpush2.msra.mxu0 %v4429
  %4788 = vmatprep.subr.mxu0 0.0
  %4789 = vmatpush2.msra.mxu0 %v4428
  %4790 = vmatprep.subr.mxu0 0.0
  %4791 = vmatpush2.msra.mxu0 %v4427
  %4792 = vmatprep.mubr.f32.mxu0 %v4647
  %4793 = vmatmul.mubr.f32.gmra.mxu0 %v4643
  %v4794 = vpop.f32.mrf.mxu0
  %v4795 = vadd.f32 %v4725, %v4794
  %v4796 = vpop.f32.mrf.mxu0
  %4797 = vdwg.mxu0
  %4798 = vmatprep.subr.mxu0 0.0
  %4799 = vmatpush1.msra.mxu0 %v4458
  %4800 = vmatprep.subr.mxu0 0.0
  %4801 = vmatpush1.msra.mxu0 %v4457
  %4802 = vmatprep.subr.mxu0 0.0
  %4803 = vmatpush1.msra.mxu0 %v4456
  %4804 = vmatprep.subr.mxu0 0.0
  %4805 = vmatpush1.msra.mxu0 %v4455
  %4806 = vmatprep.subr.mxu0 0.0
  %4807 = vmatpush1.msra.mxu0 %v4454
  %4808 = vmatprep.subr.mxu0 0.0
  %4809 = vmatpush1.msra.mxu0 %v4453
  %4810 = vmatprep.subr.mxu0 0.0
  %4811 = vmatpush1.msra.mxu0 %v4452
  %4812 = vmatprep.subr.mxu0 0.0
  %4813 = vmatpush1.msra.mxu0 %v4451
  %4814 = vmatprep.subr.mxu0 0.0
  %4815 = vmatpush1.msra.mxu0 %v4450
  %4816 = vmatprep.subr.mxu0 0.0
  %4817 = vmatpush1.msra.mxu0 %v4449
  %4818 = vmatprep.subr.mxu0 0.0
  %4819 = vmatpush1.msra.mxu0 %v4448
  %4820 = vmatprep.subr.mxu0 0.0
  %4821 = vmatpush1.msra.mxu0 %v4447
  %4822 = vmatprep.subr.mxu0 0.0
  %4823 = vmatpush1.msra.mxu0 %v4446
  %4824 = vmatprep.subr.mxu0 0.0
  %4825 = vmatpush1.msra.mxu0 %v4445
  %4826 = vmatprep.subr.mxu0 0.0
  %4827 = vmatpush1.msra.mxu0 %v4444
  %4828 = vmatprep.subr.mxu0 0.0
  %4829 = vmatpush1.msra.mxu0 %v4443
  %4830 = vmatprep.subr.mxu0 0.0
  %4831 = vmatpush2.msra.mxu0 %v4474
  %4832 = vmatprep.subr.mxu0 0.0
  %4833 = vmatpush2.msra.mxu0 %v4473
  %4834 = vmatprep.subr.mxu0 0.0
  %4835 = vmatpush2.msra.mxu0 %v4472
  %4836 = vmatprep.subr.mxu0 0.0
  %4837 = vmatpush2.msra.mxu0 %v4471
  %4838 = vmatprep.subr.mxu0 0.0
  %4839 = vmatpush2.msra.mxu0 %v4470
  %4840 = vmatprep.subr.mxu0 0.0
  %4841 = vmatpush2.msra.mxu0 %v4469
  %4842 = vmatprep.subr.mxu0 0.0
  %4843 = vmatpush2.msra.mxu0 %v4468
  %4844 = vmatprep.subr.mxu0 0.0
  %4845 = vmatpush2.msra.mxu0 %v4467
  %4846 = vmatprep.subr.mxu0 0.0
  %4847 = vmatpush2.msra.mxu0 %v4466
  %4848 = vmatprep.subr.mxu0 0.0
  %4849 = vmatpush2.msra.mxu0 %v4465
  %4850 = vmatprep.subr.mxu0 0.0
  %4851 = vmatpush2.msra.mxu0 %v4464
  %4852 = vmatprep.subr.mxu0 0.0
  %4853 = vmatpush2.msra.mxu0 %v4463
  %4854 = vmatprep.subr.mxu0 0.0
  %4855 = vmatpush2.msra.mxu0 %v4462
  %4856 = vmatprep.subr.mxu0 0.0
  %4857 = vmatpush2.msra.mxu0 %v4461
  %4858 = vmatprep.subr.mxu0 0.0
  %4859 = vmatpush2.msra.mxu0 %v4460
  %4860 = vmatprep.subr.mxu0 0.0
  %4861 = vmatpush2.msra.mxu0 %v4459
  %4862 = vmatprep.mubr.f32.mxu0 %v4648
  %4863 = vmatmul.mubr.f32.gmra.mxu0 %v4644
  %v4864 = vpop.f32.mrf.mxu0
  %v4865 = vadd.f32 %v4795, %v4864
  %v4866 = vpop.f32.mrf.mxu0
  %4867 = vdwg.mxu0
  %4868 = vmatprep.subr.mxu0 0.0
  %4869 = vmatpush1.msra.mxu0 %v4490
  %4870 = vmatprep.subr.mxu0 0.0
  %4871 = vmatpush1.msra.mxu0 %v4489
  %4872 = vmatprep.subr.mxu0 0.0
  %4873 = vmatpush1.msra.mxu0 %v4488
  %4874 = vmatprep.subr.mxu0 0.0
  %4875 = vmatpush1.msra.mxu0 %v4487
  %4876 = vmatprep.subr.mxu0 0.0
  %4877 = vmatpush1.msra.mxu0 %v4486
  %4878 = vmatprep.subr.mxu0 0.0
  %4879 = vmatpush1.msra.mxu0 %v4485
  %4880 = vmatprep.subr.mxu0 0.0
  %4881 = vmatpush1.msra.mxu0 %v4484
  %4882 = vmatprep.subr.mxu0 0.0
  %4883 = vmatpush1.msra.mxu0 %v4483
  %4884 = vmatprep.subr.mxu0 0.0
  %4885 = vmatpush1.msra.mxu0 %v4482
  %4886 = vmatprep.subr.mxu0 0.0
  %4887 = vmatpush1.msra.mxu0 %v4481
  %4888 = vmatprep.subr.mxu0 0.0
  %4889 = vmatpush1.msra.mxu0 %v4480
  %4890 = vmatprep.subr.mxu0 0.0
  %4891 = vmatpush1.msra.mxu0 %v4479
  %4892 = vmatprep.subr.mxu0 0.0
  %4893 = vmatpush1.msra.mxu0 %v4478
  %4894 = vmatprep.subr.mxu0 0.0
  %4895 = vmatpush1.msra.mxu0 %v4477
  %4896 = vmatprep.subr.mxu0 0.0
  %4897 = vmatpush1.msra.mxu0 %v4476
  %4898 = vmatprep.subr.mxu0 0.0
  %4899 = vmatpush1.msra.mxu0 %v4475
  %4900 = vmatprep.subr.mxu0 0.0
  %4901 = vmatpush2.msra.mxu0 %v4506
  %4902 = vmatprep.subr.mxu0 0.0
  %4903 = vmatpush2.msra.mxu0 %v4505
  %4904 = vmatprep.subr.mxu0 0.0
  %4905 = vmatpush2.msra.mxu0 %v4504
  %4906 = vmatprep.subr.mxu0 0.0
  %4907 = vmatpush2.msra.mxu0 %v4503
  %4908 = vmatprep.subr.mxu0 0.0
  %4909 = vmatpush2.msra.mxu0 %v4502
  %4910 = vmatprep.subr.mxu0 0.0
  %4911 = vmatpush2.msra.mxu0 %v4501
  %4912 = vmatprep.subr.mxu0 0.0
  %4913 = vmatpush2.msra.mxu0 %v4500
  %4914 = vmatprep.subr.mxu0 0.0
  %4915 = vmatpush2.msra.mxu0 %v4499
  %4916 = vmatprep.subr.mxu0 0.0
  %4917 = vmatpush2.msra.mxu0 %v4498
  %4918 = vmatprep.subr.mxu0 0.0
  %4919 = vmatpush2.msra.mxu0 %v4497
  %4920 = vmatprep.subr.mxu0 0.0
  %4921 = vmatpush2.msra.mxu0 %v4496
  %4922 = vmatprep.subr.mxu0 0.0
  %4923 = vmatpush2.msra.mxu0 %v4495
  %4924 = vmatprep.subr.mxu0 0.0
  %4925 = vmatpush2.msra.mxu0 %v4494
  %4926 = vmatprep.subr.mxu0 0.0
  %4927 = vmatpush2.msra.mxu0 %v4493
  %4928 = vmatprep.subr.mxu0 0.0
  %4929 = vmatpush2.msra.mxu0 %v4492
  %4930 = vmatprep.subr.mxu0 0.0
  %4931 = vmatpush2.msra.mxu0 %v4491
  %4932 = vmatprep.mubr.f32.mxu0 %v4649
  %4933 = vmatmul.mubr.f32.gmra.mxu0 %v4645
  %v4934 = vpop.f32.mrf.mxu0
  %v4935 = vadd.f32 %v4865, %v4934
  %v4936 = vpop.f32.mrf.mxu0
  %4937 = vdwg.mxu0
  %vm4938 = vcmask 80896
  %4939 = vst.msk [vmem:[%s7] sm:$0xff] %vm4938, %v4935
  // Predicated region
  $region30: #{cnn_forward.1} parent=0 // pred_check
    _
  $region31: #{cnn_forward.1} parent=0 // pred_check_branch
    %4941 = sbr.rel (0) target = $region33
  $region32: #{cnn_forward.1} parent=0 // pred_region
    _
  $region33: #{cnn_forward.1} parent=0 // pred_fallthru
    _
  // Predicated region
  $region34: #{cnn_forward.1} parent=0 // pred_check
    _
  $region35: #{cnn_forward.1} parent=0 // pred_check_branch
    %4943 = sbr.rel (0) target = $region37
  $region36: #{cnn_forward.1} parent=0 // pred_region
    _
  $region37: #{cnn_forward.1} parent=0 // pred_fallthru
    _

</llo_original>
